<compile_context>
chip_gen: v7x
topology: tpu7x:2x2x1
jax: 0.10.0
libtpu: 0.0.40
codegen_flags: <defaults>
</compile_context>

<pallas_src>
import functools

import jax
import jax.numpy as jnp
from jax import lax
from jax.experimental import pallas as pl
from jax.experimental.pallas import tpu as pltpu


def _round_up(x, m):
    return ((x + m - 1) // m) * m


# ----------------------------------------------------------------------------
# Fused Pallas kernel: the whole propagation in one call; h carried as a value
# through an unrolled in-kernel loop; all operands loaded once (loop-invariant).
# ----------------------------------------------------------------------------
def ggnn_fused_kernel(h0_ref, adj_ref, w_edge_ref, bias_in_ref, bias_out_ref,
                      w_rz_ref, b_rz_ref, w_t_ref, b_t_ref, out_ref,
                      *, n_steps, n_edge_types, n_pad, d_pad):
    E, N, D = n_edge_types, n_pad, d_pad

    # Loop-invariant operands: loaded once, resident for all steps.
    adj = adj_ref[...]            # (2E*N, N) row-stacked adjacency blocks
    w_edge = w_edge_ref[...]      # (2E*D, D) row-stacked edge-type weights
    bias_in = bias_in_ref[...]    # (N, D)  hoisted  sum_e rowsum(A_e) b_e
    bias_out = bias_out_ref[...]  # (N, D)
    w_rz = w_rz_ref[...]          # (3D, 2D) rows=[a_in|a_out|h], cols=[r|z]
    b_rz = b_rz_ref[...]          # (1, 2D)
    w_t = w_t_ref[...]            # (3D, D)
    b_t = b_t_ref[...]            # (1, D)
    agg_dtype = adj.dtype         # bf16 (fast) or f32 (bit-parity) aggregation

    def step(_, h):
        # --- message aggregation via associativity:  sum_e A_e (h W_e) ------
        # One big MXU matmul (f32 accumulation), then 2E small matmuls on
        # sublane-aligned row slices of Q.  No concats, no per-step casts of A.
        q = jnp.dot(adj, h.astype(agg_dtype),
                    preferred_element_type=jnp.float32)            # (2E*N, D)
        a_in, a_out = bias_in, bias_out
        for e in range(E):
            a_in = a_in + jnp.dot(q[e * N:(e + 1) * N, :],
                                  w_edge[e * D:(e + 1) * D, :],
                                  preferred_element_type=jnp.float32)
            a_out = a_out + jnp.dot(q[(E + e) * N:(E + e + 1) * N, :],
                                    w_edge[(E + e) * D:(E + e + 1) * D, :],
                                    preferred_element_type=jnp.float32)

        # --- GRU-style node update (UpdateNet), fully split -> no concats ---
        rz = jax.nn.sigmoid(
            jnp.dot(a_in, w_rz[:D, :], preferred_element_type=jnp.float32)
            + jnp.dot(a_out, w_rz[D:2 * D, :], preferred_element_type=jnp.float32)
            + jnp.dot(h, w_rz[2 * D:, :], preferred_element_type=jnp.float32)
            + b_rz)                                                 # (N, 2D)
        r, z = rz[:, :D], rz[:, D:]                                 # lane-aligned
        h_hat = jnp.tanh(
            jnp.dot(a_in, w_t[:D, :], preferred_element_type=jnp.float32)
            + jnp.dot(a_out, w_t[D:2 * D, :], preferred_element_type=jnp.float32)
            + jnp.dot(r * h, w_t[2 * D:, :], preferred_element_type=jnp.float32)
            + b_t)
        return (1.0 - z) * h + z * h_hat

    out_ref[...] = lax.fori_loop(0, n_steps, step, h0_ref[...], unroll=True)


def _vmem_limit_bytes(resident_bytes):
    """Generation-aware scoped-VMEM limit derived from actual resident bytes."""
    try:
        cap = pltpu.get_tpu_info().vmem_capacity_bytes
    except Exception:  # pragma: no cover - conservative fallback (v7x = 64 MiB)
        cap = 64 * 1024 * 1024
    want = 4 * resident_bytes + (4 << 20)          # operands + temporaries
    return int(min(max(want, 16 << 20), int(0.75 * cap)))


def base_ggnn_forward(adjacency, annotations, params, *, n_steps, n_edge_types,
                      state_dim, aggregate_in_bf16=True):
    """BaseGGNN.forwardWithAdjacencyMatricesAndConcatenatedAnnotationMatrix."""
    N, ann_dim = annotations.shape
    E, D = n_edge_types, state_dim

    # input1 = zeros(N, state_dim); input1[:, :ann_dim] = annotations
    h0 = jnp.zeros((N, D), jnp.float32).at[:, :ann_dim].set(
        annotations.astype(jnp.float32))
    if n_steps == 0:
        return h0

    # ---- host-side padding / packing (done once, outside the kernel) -------
    D_pad = _round_up(D, 128)          # lane-dense state dim
    N_pad = _round_up(N, 16)           # sublane multiple for f32 & bf16

    h0_pad = jnp.zeros((N_pad, D_pad), jnp.float32).at[:N, :D].set(h0)

    # Row-stack the 2E adjacency blocks: block t occupies rows [t*N_pad, (t+1)*N_pad)
    adj_blocks = adjacency.astype(jnp.float32).reshape(N, 2 * E, N).transpose(1, 0, 2)
    adj_dtype = jnp.bfloat16 if aggregate_in_bf16 else jnp.float32
    adj_rows = (jnp.zeros((2 * E, N_pad, N_pad), jnp.float32)
                .at[:, :N, :N].set(adj_blocks)
                .reshape(2 * E * N_pad, N_pad).astype(adj_dtype))

    # Row-stacked, zero-padded edge-type weights (pre-transposed: x @ W).
    w_edge_all = (jnp.zeros((2 * E, D_pad, D_pad), jnp.float32)
                  .at[:, :D, :D].set(params["w_edge"])
                  .reshape(2 * E * D_pad, D_pad))

    # Hoisted step-invariant edge-bias contribution: sum_e rowsum(A_e) outer b_e.
    rowsums = adj_blocks.sum(axis=2)                                   # (2E, N)
    bias_all = jnp.einsum("tn,td->tnd", rowsums, params["b_edge"])     # (2E, N, D)
    bias_in = jnp.zeros((N_pad, D_pad), jnp.float32).at[:N, :D].set(
        bias_all[:E].sum(axis=0))
    bias_out = jnp.zeros((N_pad, D_pad), jnp.float32).at[:N, :D].set(
        bias_all[E:].sum(axis=0))

    # Fused r|z gate weights, split by input segment (rows) -> no in-kernel concat.
    w_rz = jnp.zeros((3 * D_pad, 2 * D_pad), jnp.float32)
    w_t_pad = jnp.zeros((3 * D_pad, D_pad), jnp.float32)
    for s in range(3):
        w_rz = w_rz.at[s * D_pad:s * D_pad + D, :D].set(
            params["w_r"][s * D:(s + 1) * D, :])
        w_rz = w_rz.at[s * D_pad:s * D_pad + D, D_pad:D_pad + D].set(
            params["w_z"][s * D:(s + 1) * D, :])
        w_t_pad = w_t_pad.at[s * D_pad:s * D_pad + D, :D].set(
            params["w_t"][s * D:(s + 1) * D, :])
    b_rz = (jnp.zeros((1, 2 * D_pad), jnp.float32)
            .at[0, :D].set(params["b_gate"][0])
            .at[0, D_pad:D_pad + D].set(params["b_gate"][1]))
    b_t = jnp.zeros((1, D_pad), jnp.float32).at[0, :D].set(params["b_gate"][2])

    operands = (h0_pad, adj_rows, w_edge_all, bias_in, bias_out,
                w_rz, b_rz, w_t_pad, b_t)

    kernel = functools.partial(ggnn_fused_kernel, n_steps=n_steps,
                               n_edge_types=E, n_pad=N_pad, d_pad=D_pad)

    resident_bytes = (sum(int(x.size) * x.dtype.itemsize for x in operands)
                      + N_pad * D_pad * 4)
    flops_per_step = (2 * (2 * E * N_pad) * N_pad * D_pad        # Q = A_rows @ h
                      + 2 * E * 2 * N_pad * D_pad * D_pad        # projections
                      + 3 * 2 * N_pad * D_pad * (2 * D_pad)      # r,z gates
                      + 3 * 2 * N_pad * D_pad * D_pad)           # transform gate

    vmem_spec = pl.BlockSpec(memory_space=pltpu.MemorySpace.VMEM)
    out_pad = pl.pallas_call(
        kernel,
        out_shape=jax.ShapeDtypeStruct((N_pad, D_pad), jnp.float32),
        in_specs=[vmem_spec] * len(operands),
        out_specs=vmem_spec,
        compiler_params=pltpu.CompilerParams(
            vmem_limit_bytes=_vmem_limit_bytes(resident_bytes)),
        cost_estimate=pl.CostEstimate(
            flops=n_steps * flops_per_step,
            transcendentals=n_steps * N_pad * 3 * D_pad,
            bytes_accessed=int(resident_bytes)),
    )(*operands)

    return out_pad[:N, :D]


# ----------------------------------------------------------------------------
# Parameter init + pure-jnp reference (for verification).
# ----------------------------------------------------------------------------
def init_params(key, state_dim, n_edge_types):
    E2 = 2 * n_edge_types
    k = jax.random.split(key, 8)
    lin_bound = 1.0 / jnp.sqrt(state_dim)
    gate_bound = 1.0 / jnp.sqrt(3.0 * state_dim)
    u = jax.random.uniform
    return {
        # 2E propagation Linear layers (state_dim -> state_dim), pre-transposed.
        "w_edge": u(k[0], (E2, state_dim, state_dim), jnp.float32,
                    -lin_bound, lin_bound),
        "b_edge": u(k[1], (E2, state_dim), jnp.float32, -lin_bound, lin_bound),
        # UpdateNet GRU gates: Linear(3*state_dim -> state_dim), pre-transposed.
        "w_r": u(k[2], (3 * state_dim, state_dim), jnp.float32, -gate_bound, gate_bound),
        "w_z": u(k[3], (3 * state_dim, state_dim), jnp.float32, -gate_bound, gate_bound),
        "w_t": u(k[4], (3 * state_dim, state_dim), jnp.float32, -gate_bound, gate_bound),
        "b_gate": u(k[5], (3, state_dim), jnp.float32, -gate_bound, gate_bound),
    }


def reference_forward(adjacency, annotations, params, *, n_steps, n_edge_types,
                      state_dim):
    """Pure-jnp reference implementing the same math as the PyTorch module."""
    N, ann_dim = annotations.shape
    E = n_edge_types
    h = jnp.zeros((N, state_dim), jnp.float32).at[:, :ann_dim].set(annotations)
    for _ in range(n_steps):
        a_in = jnp.zeros((N, state_dim), jnp.float32)
        a_out = jnp.zeros((N, state_dim), jnp.float32)
        for e in range(E):
            st_in = h @ params["w_edge"][e] + params["b_edge"][e]
            st_out = h @ params["w_edge"][e + E] + params["b_edge"][e + E]
            a_in = a_in + adjacency[:, e * N:(e + 1) * N] @ st_in
            a_out = a_out + adjacency[:, (E + e) * N:(E + e + 1) * N] @ st_out
        joined = jnp.concatenate([a_in, a_out, h], axis=1)
        r = jax.nn.sigmoid(joined @ params["w_r"] + params["b_gate"][0])
        z = jax.nn.sigmoid(joined @ params["w_z"] + params["b_gate"][1])
        joined_r = jnp.concatenate([a_in, a_out, r * h], axis=1)
        h_hat = jnp.tanh(joined_r @ params["w_t"] + params["b_gate"][2])
        h = (1.0 - z) * h + z * h_hat
    return h


if __name__ == "__main__":
    # Small problem consistent with the module: one graph, 8 nodes,
    # state_dim=32, annotation_dim=8, 2 edge types, 3 propagation steps.
    n_nodes = 8
    state_dim = 32
    annotation_dim = 8
    n_edge_types = 2
    n_steps = 3

    key = jax.random.PRNGKey(0)
    k_param, k_ann, k_adj = jax.random.split(key, 3)

    params = init_params(k_param, state_dim, n_edge_types)
    annotations = jax.random.normal(k_ann, (n_nodes, annotation_dim), jnp.float32)
    # Dense 0/1 adjacency in the concatenated GGNN layout (N, 2*E*N).
    adjacency = jax.random.bernoulli(
        k_adj, 0.3, (n_nodes, 2 * n_edge_types * n_nodes)).astype(jnp.float32)

    ref = reference_forward(adjacency, annotations, params,
                            n_steps=n_steps, n_edge_types=n_edge_types,
                            state_dim=state_dim)

    # Exact-f32 math path (adjacency stored f32) -> tight check vs reference.
    out_f32 = base_ggnn_forward(adjacency, annotations, params,
                                n_steps=n_steps, n_edge_types=n_edge_types,
                                state_dim=state_dim, aggregate_in_bf16=False)
    out_f32 = jax.block_until_ready(out_f32)
    assert out_f32.shape == (n_nodes, state_dim)
    assert jnp.allclose(out_f32, ref, atol=1e-4, rtol=1e-4), "f32 mismatch vs reference"

    # bf16-aggregation path (default for perf: half-size resident adjacency,
    # native-rate MXU aggregation).  Adjacency 0/1 is exact in bf16; the only
    # rounding is the bf16 cast of h in the aggregation matmul (~1e-3).
    out_bf16 = base_ggnn_forward(adjacency, annotations, params,
                                 n_steps=n_steps, n_edge_types=n_edge_types,
                                 state_dim=state_dim, aggregate_in_bf16=True)
    out_bf16 = jax.block_until_ready(out_bf16)
    assert jnp.allclose(out_bf16, ref, atol=3e-2, rtol=3e-2), "bf16 mismatch vs reference"

    print("KERNEL_OK")
</pallas_src>

<mosaic_0001>
module attributes {stable_mosaic.version = 11 : i64} {
  func.func @ggnn_fused_kernel(%arg0: memref<16x128xf32, #tpu.memory_space<vmem>>, %arg1: memref<64x16xf32, #tpu.memory_space<vmem>>, %arg2: memref<512x128xf32, #tpu.memory_space<vmem>>, %arg3: memref<16x128xf32, #tpu.memory_space<vmem>>, %arg4: memref<16x128xf32, #tpu.memory_space<vmem>>, %arg5: memref<384x256xf32, #tpu.memory_space<vmem>>, %arg6: memref<1x256xf32, #tpu.memory_space<vmem>>, %arg7: memref<384x128xf32, #tpu.memory_space<vmem>>, %arg8: memref<1x128xf32, #tpu.memory_space<vmem>>, %arg9: memref<16x128xf32, #tpu.memory_space<vmem>>) attributes {dimension_semantics = [], scalar_prefetch = 0 : i64, scratch_operands = 0 : i64, tpu.core_type = #tpu.core_type<tc>} {
    %c0 = arith.constant 0 : index
    %c0_0 = arith.constant 0 : index
    %0 = vector.load %arg1[%c0, %c0_0] : memref<64x16xf32, #tpu.memory_space<vmem>>, vector<64x16xf32>
    %c0_1 = arith.constant 0 : index
    %c0_2 = arith.constant 0 : index
    %1 = vector.load %arg2[%c0_1, %c0_2] : memref<512x128xf32, #tpu.memory_space<vmem>>, vector<512x128xf32>
    %c0_3 = arith.constant 0 : index
    %c0_4 = arith.constant 0 : index
    %2 = vector.load %arg3[%c0_3, %c0_4] : memref<16x128xf32, #tpu.memory_space<vmem>>, vector<16x128xf32>
    %c0_5 = arith.constant 0 : index
    %c0_6 = arith.constant 0 : index
    %3 = vector.load %arg4[%c0_5, %c0_6] : memref<16x128xf32, #tpu.memory_space<vmem>>, vector<16x128xf32>
    %c0_7 = arith.constant 0 : index
    %c0_8 = arith.constant 0 : index
    %4 = vector.load %arg5[%c0_7, %c0_8] : memref<384x256xf32, #tpu.memory_space<vmem>>, vector<384x256xf32>
    %c0_9 = arith.constant 0 : index
    %c0_10 = arith.constant 0 : index
    %5 = vector.load %arg6[%c0_9, %c0_10] : memref<1x256xf32, #tpu.memory_space<vmem>>, vector<1x256xf32>
    %c0_11 = arith.constant 0 : index
    %c0_12 = arith.constant 0 : index
    %6 = vector.load %arg7[%c0_11, %c0_12] : memref<384x128xf32, #tpu.memory_space<vmem>>, vector<384x128xf32>
    %c0_13 = arith.constant 0 : index
    %c0_14 = arith.constant 0 : index
    %7 = vector.load %arg8[%c0_13, %c0_14] : memref<1x128xf32, #tpu.memory_space<vmem>>, vector<1x128xf32>
    %c0_15 = arith.constant 0 : index
    %c0_16 = arith.constant 0 : index
    %8 = vector.load %arg0[%c0_15, %c0_16] : memref<16x128xf32, #tpu.memory_space<vmem>>, vector<16x128xf32>
    %c0_i32 = arith.constant 0 : i32
    %cst = arith.constant dense<0.000000e+00> : vector<64x128xf32>
    %9 = tpu.matmul %0, %8, %cst {dimension_numbers = #tpu.dot_dimension_numbers<[1], [0], [0], [1], [0, 0, 1, 1], [], []>} : vector<64x16xf32>, vector<16x128xf32>, vector<64x128xf32> -> vector<64x128xf32>
    %10 = vector.extract_strided_slice %9 {offsets = [0, 0], sizes = [16, 128], strides = [1, 1]} : vector<64x128xf32> to vector<16x128xf32>
    %11 = vector.extract_strided_slice %1 {offsets = [0, 0], sizes = [128, 128], strides = [1, 1]} : vector<512x128xf32> to vector<128x128xf32>
    %cst_17 = arith.constant dense<0.000000e+00> : vector<16x128xf32>
    %12 = tpu.matmul %10, %11, %cst_17 {dimension_numbers = #tpu.dot_dimension_numbers<[1], [0], [0], [1], [0, 0, 1, 1], [], []>} : vector<16x128xf32>, vector<128x128xf32>, vector<16x128xf32> -> vector<16x128xf32>
    %13 = arith.addf %2, %12 : vector<16x128xf32>
    %14 = vector.extract_strided_slice %9 {offsets = [32, 0], sizes = [16, 128], strides = [1, 1]} : vector<64x128xf32> to vector<16x128xf32>
    %15 = vector.extract_strided_slice %1 {offsets = [256, 0], sizes = [128, 128], strides = [1, 1]} : vector<512x128xf32> to vector<128x128xf32>
    %cst_18 = arith.constant dense<0.000000e+00> : vector<16x128xf32>
    %16 = tpu.matmul %14, %15, %cst_18 {dimension_numbers = #tpu.dot_dimension_numbers<[1], [0], [0], [1], [0, 0, 1, 1], [], []>} : vector<16x128xf32>, vector<128x128xf32>, vector<16x128xf32> -> vector<16x128xf32>
    %17 = arith.addf %3, %16 : vector<16x128xf32>
    %18 = vector.extract_strided_slice %9 {offsets = [16, 0], sizes = [16, 128], strides = [1, 1]} : vector<64x128xf32> to vector<16x128xf32>
    %19 = vector.extract_strided_slice %1 {offsets = [128, 0], sizes = [128, 128], strides = [1, 1]} : vector<512x128xf32> to vector<128x128xf32>
    %cst_19 = arith.constant dense<0.000000e+00> : vector<16x128xf32>
    %20 = tpu.matmul %18, %19, %cst_19 {dimension_numbers = #tpu.dot_dimension_numbers<[1], [0], [0], [1], [0, 0, 1, 1], [], []>} : vector<16x128xf32>, vector<128x128xf32>, vector<16x128xf32> -> vector<16x128xf32>
    %21 = arith.addf %13, %20 : vector<16x128xf32>
    %22 = vector.extract_strided_slice %9 {offsets = [48, 0], sizes = [16, 128], strides = [1, 1]} : vector<64x128xf32> to vector<16x128xf32>
    %23 = vector.extract_strided_slice %1 {offsets = [384, 0], sizes = [128, 128], strides = [1, 1]} : vector<512x128xf32> to vector<128x128xf32>
    %cst_20 = arith.constant dense<0.000000e+00> : vector<16x128xf32>
    %24 = tpu.matmul %22, %23, %cst_20 {dimension_numbers = #tpu.dot_dimension_numbers<[1], [0], [0], [1], [0, 0, 1, 1], [], []>} : vector<16x128xf32>, vector<128x128xf32>, vector<16x128xf32> -> vector<16x128xf32>
    %25 = arith.addf %17, %24 : vector<16x128xf32>
    %26 = vector.extract_strided_slice %4 {offsets = [0, 0], sizes = [128, 256], strides = [1, 1]} : vector<384x256xf32> to vector<128x256xf32>
    %cst_21 = arith.constant dense<0.000000e+00> : vector<16x256xf32>
    %27 = tpu.matmul %21, %26, %cst_21 {dimension_numbers = #tpu.dot_dimension_numbers<[1], [0], [0], [1], [0, 0, 1, 1], [], []>} : vector<16x128xf32>, vector<128x256xf32>, vector<16x256xf32> -> vector<16x256xf32>
    %28 = vector.extract_strided_slice %4 {offsets = [128, 0], sizes = [128, 256], strides = [1, 1]} : vector<384x256xf32> to vector<128x256xf32>
    %cst_22 = arith.constant dense<0.000000e+00> : vector<16x256xf32>
    %29 = tpu.matmul %25, %28, %cst_22 {dimension_numbers = #tpu.dot_dimension_numbers<[1], [0], [0], [1], [0, 0, 1, 1], [], []>} : vector<16x128xf32>, vector<128x256xf32>, vector<16x256xf32> -> vector<16x256xf32>
    %30 = arith.addf %27, %29 : vector<16x256xf32>
    %31 = vector.extract_strided_slice %4 {offsets = [256, 0], sizes = [128, 256], strides = [1, 1]} : vector<384x256xf32> to vector<128x256xf32>
    %cst_23 = arith.constant dense<0.000000e+00> : vector<16x256xf32>
    %32 = tpu.matmul %8, %31, %cst_23 {dimension_numbers = #tpu.dot_dimension_numbers<[1], [0], [0], [1], [0, 0, 1, 1], [], []>} : vector<16x128xf32>, vector<128x256xf32>, vector<16x256xf32> -> vector<16x256xf32>
    %33 = arith.addf %30, %32 : vector<16x256xf32>
    %34 = vector.broadcast %5 : vector<1x256xf32> to vector<16x256xf32>
    %35 = arith.addf %33, %34 : vector<16x256xf32>
    %36 = arith.negf %35 : vector<16x256xf32>
    %37 = math.exp %36 : vector<16x256xf32>
    %cst_24 = arith.constant 1.000000e+00 : f32
    %38 = vector.broadcast %cst_24 : f32 to vector<16x256xf32>
    %39 = arith.addf %38, %37 : vector<16x256xf32>
    %40 = arith.divf %38, %39 : vector<16x256xf32>
    %41 = vector.extract_strided_slice %40 {offsets = [0, 0], sizes = [16, 128], strides = [1, 1]} : vector<16x256xf32> to vector<16x128xf32>
    %42 = vector.extract_strided_slice %40 {offsets = [0, 128], sizes = [16, 128], strides = [1, 1]} : vector<16x256xf32> to vector<16x128xf32>
    %43 = vector.extract_strided_slice %6 {offsets = [0, 0], sizes = [128, 128], strides = [1, 1]} : vector<384x128xf32> to vector<128x128xf32>
    %cst_25 = arith.constant dense<0.000000e+00> : vector<16x128xf32>
    %44 = tpu.matmul %21, %43, %cst_25 {dimension_numbers = #tpu.dot_dimension_numbers<[1], [0], [0], [1], [0, 0, 1, 1], [], []>} : vector<16x128xf32>, vector<128x128xf32>, vector<16x128xf32> -> vector<16x128xf32>
    %45 = vector.extract_strided_slice %6 {offsets = [128, 0], sizes = [128, 128], strides = [1, 1]} : vector<384x128xf32> to vector<128x128xf32>
    %cst_26 = arith.constant dense<0.000000e+00> : vector<16x128xf32>
    %46 = tpu.matmul %25, %45, %cst_26 {dimension_numbers = #tpu.dot_dimension_numbers<[1], [0], [0], [1], [0, 0, 1, 1], [], []>} : vector<16x128xf32>, vector<128x128xf32>, vector<16x128xf32> -> vector<16x128xf32>
    %47 = arith.addf %44, %46 : vector<16x128xf32>
    %48 = arith.mulf %41, %8 : vector<16x128xf32>
    %49 = vector.extract_strided_slice %6 {offsets = [256, 0], sizes = [128, 128], strides = [1, 1]} : vector<384x128xf32> to vector<128x128xf32>
    %cst_27 = arith.constant dense<0.000000e+00> : vector<16x128xf32>
    %50 = tpu.matmul %48, %49, %cst_27 {dimension_numbers = #tpu.dot_dimension_numbers<[1], [0], [0], [1], [0, 0, 1, 1], [], []>} : vector<16x128xf32>, vector<128x128xf32>, vector<16x128xf32> -> vector<16x128xf32>
    %51 = arith.addf %47, %50 : vector<16x128xf32>
    %52 = vector.broadcast %7 : vector<1x128xf32> to vector<16x128xf32>
    %53 = arith.addf %51, %52 : vector<16x128xf32>
    %54 = math.tanh %53 : vector<16x128xf32>
    %cst_28 = arith.constant 1.000000e+00 : f32
    %55 = vector.broadcast %cst_28 : f32 to vector<16x128xf32>
    %56 = arith.subf %55, %42 : vector<16x128xf32>
    %57 = arith.mulf %56, %8 : vector<16x128xf32>
    %58 = arith.mulf %42, %54 : vector<16x128xf32>
    %59 = arith.addf %57, %58 : vector<16x128xf32>
    %c1_i32 = arith.constant 1 : i32
    %cst_29 = arith.constant dense<0.000000e+00> : vector<64x128xf32>
    %60 = tpu.matmul %0, %59, %cst_29 {dimension_numbers = #tpu.dot_dimension_numbers<[1], [0], [0], [1], [0, 0, 1, 1], [], []>} : vector<64x16xf32>, vector<16x128xf32>, vector<64x128xf32> -> vector<64x128xf32>
    %61 = vector.extract_strided_slice %60 {offsets = [0, 0], sizes = [16, 128], strides = [1, 1]} : vector<64x128xf32> to vector<16x128xf32>
    %62 = vector.extract_strided_slice %1 {offsets = [0, 0], sizes = [128, 128], strides = [1, 1]} : vector<512x128xf32> to vector<128x128xf32>
    %cst_30 = arith.constant dense<0.000000e+00> : vector<16x128xf32>
    %63 = tpu.matmul %61, %62, %cst_30 {dimension_numbers = #tpu.dot_dimension_numbers<[1], [0], [0], [1], [0, 0, 1, 1], [], []>} : vector<16x128xf32>, vector<128x128xf32>, vector<16x128xf32> -> vector<16x128xf32>
    %64 = arith.addf %2, %63 : vector<16x128xf32>
    %65 = vector.extract_strided_slice %60 {offsets = [32, 0], sizes = [16, 128], strides = [1, 1]} : vector<64x128xf32> to vector<16x128xf32>
    %66 = vector.extract_strided_slice %1 {offsets = [256, 0], sizes = [128, 128], strides = [1, 1]} : vector<512x128xf32> to vector<128x128xf32>
    %cst_31 = arith.constant dense<0.000000e+00> : vector<16x128xf32>
    %67 = tpu.matmul %65, %66, %cst_31 {dimension_numbers = #tpu.dot_dimension_numbers<[1], [0], [0], [1], [0, 0, 1, 1], [], []>} : vector<16x128xf32>, vector<128x128xf32>, vector<16x128xf32> -> vector<16x128xf32>
    %68 = arith.addf %3, %67 : vector<16x128xf32>
    %69 = vector.extract_strided_slice %60 {offsets = [16, 0], sizes = [16, 128], strides = [1, 1]} : vector<64x128xf32> to vector<16x128xf32>
    %70 = vector.extract_strided_slice %1 {offsets = [128, 0], sizes = [128, 128], strides = [1, 1]} : vector<512x128xf32> to vector<128x128xf32>
    %cst_32 = arith.constant dense<0.000000e+00> : vector<16x128xf32>
    %71 = tpu.matmul %69, %70, %cst_32 {dimension_numbers = #tpu.dot_dimension_numbers<[1], [0], [0], [1], [0, 0, 1, 1], [], []>} : vector<16x128xf32>, vector<128x128xf32>, vector<16x128xf32> -> vector<16x128xf32>
    %72 = arith.addf %64, %71 : vector<16x128xf32>
    %73 = vector.extract_strided_slice %60 {offsets = [48, 0], sizes = [16, 128], strides = [1, 1]} : vector<64x128xf32> to vector<16x128xf32>
    %74 = vector.extract_strided_slice %1 {offsets = [384, 0], sizes = [128, 128], strides = [1, 1]} : vector<512x128xf32> to vector<128x128xf32>
    %cst_33 = arith.constant dense<0.000000e+00> : vector<16x128xf32>
    %75 = tpu.matmul %73, %74, %cst_33 {dimension_numbers = #tpu.dot_dimension_numbers<[1], [0], [0], [1], [0, 0, 1, 1], [], []>} : vector<16x128xf32>, vector<128x128xf32>, vector<16x128xf32> -> vector<16x128xf32>
    %76 = arith.addf %68, %75 : vector<16x128xf32>
    %77 = vector.extract_strided_slice %4 {offsets = [0, 0], sizes = [128, 256], strides = [1, 1]} : vector<384x256xf32> to vector<128x256xf32>
    %cst_34 = arith.constant dense<0.000000e+00> : vector<16x256xf32>
    %78 = tpu.matmul %72, %77, %cst_34 {dimension_numbers = #tpu.dot_dimension_numbers<[1], [0], [0], [1], [0, 0, 1, 1], [], []>} : vector<16x128xf32>, vector<128x256xf32>, vector<16x256xf32> -> vector<16x256xf32>
    %79 = vector.extract_strided_slice %4 {offsets = [128, 0], sizes = [128, 256], strides = [1, 1]} : vector<384x256xf32> to vector<128x256xf32>
    %cst_35 = arith.constant dense<0.000000e+00> : vector<16x256xf32>
    %80 = tpu.matmul %76, %79, %cst_35 {dimension_numbers = #tpu.dot_dimension_numbers<[1], [0], [0], [1], [0, 0, 1, 1], [], []>} : vector<16x128xf32>, vector<128x256xf32>, vector<16x256xf32> -> vector<16x256xf32>
    %81 = arith.addf %78, %80 : vector<16x256xf32>
    %82 = vector.extract_strided_slice %4 {offsets = [256, 0], sizes = [128, 256], strides = [1, 1]} : vector<384x256xf32> to vector<128x256xf32>
    %cst_36 = arith.constant dense<0.000000e+00> : vector<16x256xf32>
    %83 = tpu.matmul %59, %82, %cst_36 {dimension_numbers = #tpu.dot_dimension_numbers<[1], [0], [0], [1], [0, 0, 1, 1], [], []>} : vector<16x128xf32>, vector<128x256xf32>, vector<16x256xf32> -> vector<16x256xf32>
    %84 = arith.addf %81, %83 : vector<16x256xf32>
    %85 = vector.broadcast %5 : vector<1x256xf32> to vector<16x256xf32>
    %86 = arith.addf %84, %85 : vector<16x256xf32>
    %87 = arith.negf %86 : vector<16x256xf32>
    %88 = math.exp %87 : vector<16x256xf32>
    %cst_37 = arith.constant 1.000000e+00 : f32
    %89 = vector.broadcast %cst_37 : f32 to vector<16x256xf32>
    %90 = arith.addf %89, %88 : vector<16x256xf32>
    %91 = arith.divf %89, %90 : vector<16x256xf32>
    %92 = vector.extract_strided_slice %91 {offsets = [0, 0], sizes = [16, 128], strides = [1, 1]} : vector<16x256xf32> to vector<16x128xf32>
    %93 = vector.extract_strided_slice %91 {offsets = [0, 128], sizes = [16, 128], strides = [1, 1]} : vector<16x256xf32> to vector<16x128xf32>
    %94 = vector.extract_strided_slice %6 {offsets = [0, 0], sizes = [128, 128], strides = [1, 1]} : vector<384x128xf32> to vector<128x128xf32>
    %cst_38 = arith.constant dense<0.000000e+00> : vector<16x128xf32>
    %95 = tpu.matmul %72, %94, %cst_38 {dimension_numbers = #tpu.dot_dimension_numbers<[1], [0], [0], [1], [0, 0, 1, 1], [], []>} : vector<16x128xf32>, vector<128x128xf32>, vector<16x128xf32> -> vector<16x128xf32>
    %96 = vector.extract_strided_slice %6 {offsets = [128, 0], sizes = [128, 128], strides = [1, 1]} : vector<384x128xf32> to vector<128x128xf32>
    %cst_39 = arith.constant dense<0.000000e+00> : vector<16x128xf32>
    %97 = tpu.matmul %76, %96, %cst_39 {dimension_numbers = #tpu.dot_dimension_numbers<[1], [0], [0], [1], [0, 0, 1, 1], [], []>} : vector<16x128xf32>, vector<128x128xf32>, vector<16x128xf32> -> vector<16x128xf32>
    %98 = arith.addf %95, %97 : vector<16x128xf32>
    %99 = arith.mulf %92, %59 : vector<16x128xf32>
    %100 = vector.extract_strided_slice %6 {offsets = [256, 0], sizes = [128, 128], strides = [1, 1]} : vector<384x128xf32> to vector<128x128xf32>
    %cst_40 = arith.constant dense<0.000000e+00> : vector<16x128xf32>
    %101 = tpu.matmul %99, %100, %cst_40 {dimension_numbers = #tpu.dot_dimension_numbers<[1], [0], [0], [1], [0, 0, 1, 1], [], []>} : vector<16x128xf32>, vector<128x128xf32>, vector<16x128xf32> -> vector<16x128xf32>
    %102 = arith.addf %98, %101 : vector<16x128xf32>
    %103 = vector.broadcast %7 : vector<1x128xf32> to vector<16x128xf32>
    %104 = arith.addf %102, %103 : vector<16x128xf32>
    %105 = math.tanh %104 : vector<16x128xf32>
    %cst_41 = arith.constant 1.000000e+00 : f32
    %106 = vector.broadcast %cst_41 : f32 to vector<16x128xf32>
    %107 = arith.subf %106, %93 : vector<16x128xf32>
    %108 = arith.mulf %107, %59 : vector<16x128xf32>
    %109 = arith.mulf %93, %105 : vector<16x128xf32>
    %110 = arith.addf %108, %109 : vector<16x128xf32>
    %c2_i32 = arith.constant 2 : i32
    %cst_42 = arith.constant dense<0.000000e+00> : vector<64x128xf32>
    %111 = tpu.matmul %0, %110, %cst_42 {dimension_numbers = #tpu.dot_dimension_numbers<[1], [0], [0], [1], [0, 0, 1, 1], [], []>} : vector<64x16xf32>, vector<16x128xf32>, vector<64x128xf32> -> vector<64x128xf32>
    %112 = vector.extract_strided_slice %111 {offsets = [0, 0], sizes = [16, 128], strides = [1, 1]} : vector<64x128xf32> to vector<16x128xf32>
    %113 = vector.extract_strided_slice %1 {offsets = [0, 0], sizes = [128, 128], strides = [1, 1]} : vector<512x128xf32> to vector<128x128xf32>
    %cst_43 = arith.constant dense<0.000000e+00> : vector<16x128xf32>
    %114 = tpu.matmul %112, %113, %cst_43 {dimension_numbers = #tpu.dot_dimension_numbers<[1], [0], [0], [1], [0, 0, 1, 1], [], []>} : vector<16x128xf32>, vector<128x128xf32>, vector<16x128xf32> -> vector<16x128xf32>
    %115 = arith.addf %2, %114 : vector<16x128xf32>
    %116 = vector.extract_strided_slice %111 {offsets = [32, 0], sizes = [16, 128], strides = [1, 1]} : vector<64x128xf32> to vector<16x128xf32>
    %117 = vector.extract_strided_slice %1 {offsets = [256, 0], sizes = [128, 128], strides = [1, 1]} : vector<512x128xf32> to vector<128x128xf32>
    %cst_44 = arith.constant dense<0.000000e+00> : vector<16x128xf32>
    %118 = tpu.matmul %116, %117, %cst_44 {dimension_numbers = #tpu.dot_dimension_numbers<[1], [0], [0], [1], [0, 0, 1, 1], [], []>} : vector<16x128xf32>, vector<128x128xf32>, vector<16x128xf32> -> vector<16x128xf32>
    %119 = arith.addf %3, %118 : vector<16x128xf32>
    %120 = vector.extract_strided_slice %111 {offsets = [16, 0], sizes = [16, 128], strides = [1, 1]} : vector<64x128xf32> to vector<16x128xf32>
    %121 = vector.extract_strided_slice %1 {offsets = [128, 0], sizes = [128, 128], strides = [1, 1]} : vector<512x128xf32> to vector<128x128xf32>
    %cst_45 = arith.constant dense<0.000000e+00> : vector<16x128xf32>
    %122 = tpu.matmul %120, %121, %cst_45 {dimension_numbers = #tpu.dot_dimension_numbers<[1], [0], [0], [1], [0, 0, 1, 1], [], []>} : vector<16x128xf32>, vector<128x128xf32>, vector<16x128xf32> -> vector<16x128xf32>
    %123 = arith.addf %115, %122 : vector<16x128xf32>
    %124 = vector.extract_strided_slice %111 {offsets = [48, 0], sizes = [16, 128], strides = [1, 1]} : vector<64x128xf32> to vector<16x128xf32>
    %125 = vector.extract_strided_slice %1 {offsets = [384, 0], sizes = [128, 128], strides = [1, 1]} : vector<512x128xf32> to vector<128x128xf32>
    %cst_46 = arith.constant dense<0.000000e+00> : vector<16x128xf32>
    %126 = tpu.matmul %124, %125, %cst_46 {dimension_numbers = #tpu.dot_dimension_numbers<[1], [0], [0], [1], [0, 0, 1, 1], [], []>} : vector<16x128xf32>, vector<128x128xf32>, vector<16x128xf32> -> vector<16x128xf32>
    %127 = arith.addf %119, %126 : vector<16x128xf32>
    %128 = vector.extract_strided_slice %4 {offsets = [0, 0], sizes = [128, 256], strides = [1, 1]} : vector<384x256xf32> to vector<128x256xf32>
    %cst_47 = arith.constant dense<0.000000e+00> : vector<16x256xf32>
    %129 = tpu.matmul %123, %128, %cst_47 {dimension_numbers = #tpu.dot_dimension_numbers<[1], [0], [0], [1], [0, 0, 1, 1], [], []>} : vector<16x128xf32>, vector<128x256xf32>, vector<16x256xf32> -> vector<16x256xf32>
    %130 = vector.extract_strided_slice %4 {offsets = [128, 0], sizes = [128, 256], strides = [1, 1]} : vector<384x256xf32> to vector<128x256xf32>
    %cst_48 = arith.constant dense<0.000000e+00> : vector<16x256xf32>
    %131 = tpu.matmul %127, %130, %cst_48 {dimension_numbers = #tpu.dot_dimension_numbers<[1], [0], [0], [1], [0, 0, 1, 1], [], []>} : vector<16x128xf32>, vector<128x256xf32>, vector<16x256xf32> -> vector<16x256xf32>
    %132 = arith.addf %129, %131 : vector<16x256xf32>
    %133 = vector.extract_strided_slice %4 {offsets = [256, 0], sizes = [128, 256], strides = [1, 1]} : vector<384x256xf32> to vector<128x256xf32>
    %cst_49 = arith.constant dense<0.000000e+00> : vector<16x256xf32>
    %134 = tpu.matmul %110, %133, %cst_49 {dimension_numbers = #tpu.dot_dimension_numbers<[1], [0], [0], [1], [0, 0, 1, 1], [], []>} : vector<16x128xf32>, vector<128x256xf32>, vector<16x256xf32> -> vector<16x256xf32>
    %135 = arith.addf %132, %134 : vector<16x256xf32>
    %136 = vector.broadcast %5 : vector<1x256xf32> to vector<16x256xf32>
    %137 = arith.addf %135, %136 : vector<16x256xf32>
    %138 = arith.negf %137 : vector<16x256xf32>
    %139 = math.exp %138 : vector<16x256xf32>
    %cst_50 = arith.constant 1.000000e+00 : f32
    %140 = vector.broadcast %cst_50 : f32 to vector<16x256xf32>
    %141 = arith.addf %140, %139 : vector<16x256xf32>
    %142 = arith.divf %140, %141 : vector<16x256xf32>
    %143 = vector.extract_strided_slice %142 {offsets = [0, 0], sizes = [16, 128], strides = [1, 1]} : vector<16x256xf32> to vector<16x128xf32>
    %144 = vector.extract_strided_slice %142 {offsets = [0, 128], sizes = [16, 128], strides = [1, 1]} : vector<16x256xf32> to vector<16x128xf32>
    %145 = vector.extract_strided_slice %6 {offsets = [0, 0], sizes = [128, 128], strides = [1, 1]} : vector<384x128xf32> to vector<128x128xf32>
    %cst_51 = arith.constant dense<0.000000e+00> : vector<16x128xf32>
    %146 = tpu.matmul %123, %145, %cst_51 {dimension_numbers = #tpu.dot_dimension_numbers<[1], [0], [0], [1], [0, 0, 1, 1], [], []>} : vector<16x128xf32>, vector<128x128xf32>, vector<16x128xf32> -> vector<16x128xf32>
    %147 = vector.extract_strided_slice %6 {offsets = [128, 0], sizes = [128, 128], strides = [1, 1]} : vector<384x128xf32> to vector<128x128xf32>
    %cst_52 = arith.constant dense<0.000000e+00> : vector<16x128xf32>
    %148 = tpu.matmul %127, %147, %cst_52 {dimension_numbers = #tpu.dot_dimension_numbers<[1], [0], [0], [1], [0, 0, 1, 1], [], []>} : vector<16x128xf32>, vector<128x128xf32>, vector<16x128xf32> -> vector<16x128xf32>
    %149 = arith.addf %146, %148 : vector<16x128xf32>
    %150 = arith.mulf %143, %110 : vector<16x128xf32>
    %151 = vector.extract_strided_slice %6 {offsets = [256, 0], sizes = [128, 128], strides = [1, 1]} : vector<384x128xf32> to vector<128x128xf32>
    %cst_53 = arith.constant dense<0.000000e+00> : vector<16x128xf32>
    %152 = tpu.matmul %150, %151, %cst_53 {dimension_numbers = #tpu.dot_dimension_numbers<[1], [0], [0], [1], [0, 0, 1, 1], [], []>} : vector<16x128xf32>, vector<128x128xf32>, vector<16x128xf32> -> vector<16x128xf32>
    %153 = arith.addf %149, %152 : vector<16x128xf32>
    %154 = vector.broadcast %7 : vector<1x128xf32> to vector<16x128xf32>
    %155 = arith.addf %153, %154 : vector<16x128xf32>
    %156 = math.tanh %155 : vector<16x128xf32>
    %cst_54 = arith.constant 1.000000e+00 : f32
    %157 = vector.broadcast %cst_54 : f32 to vector<16x128xf32>
    %158 = arith.subf %157, %144 : vector<16x128xf32>
    %159 = arith.mulf %158, %110 : vector<16x128xf32>
    %160 = arith.mulf %144, %156 : vector<16x128xf32>
    %161 = arith.addf %159, %160 : vector<16x128xf32>
    %c0_55 = arith.constant 0 : index
    %c0_56 = arith.constant 0 : index
    %162 = vector.load %arg9[%c0_55, %c0_56] : memref<16x128xf32, #tpu.memory_space<vmem>>, vector<16x128xf32>
    tpu.vector_store %arg9[%c0_55, %c0_56], %161 {strides = array<i32>} : memref<16x128xf32, #tpu.memory_space<vmem>>, vector<16x128xf32>,
    return
  }
}

</mosaic_0001>

<llo_original>
// kernel: tpu_custom_call.1
$region0: #{tpu_custom_call.1}
  #allocation0 [shape = 'u32[]', space=smem, size = 0x4, offset = 0x4, fixed_abs, tag = 'smem constant byte address 0x4 - core index']
  #allocation1 [shape = 'u32[144,128]{1,0:T(1,128)}', space=vmem, size = 0x12000, scoped, tag = 'internal scratch']
  %s0 = inlined_call_operand.vmem [shape: f32[16,128], index: 0, kind: input, shape index: {}]
  %s1 = inlined_call_operand.vmem [shape: f32[64,16], index: 1, kind: input, shape index: {}]
  %s2 = inlined_call_operand.hbm [shape: f32[512,128], index: 2, kind: input, shape index: {}]
  %s3 = inlined_call_operand.vmem [shape: f32[16,128], index: 3, kind: input, shape index: {}]
  %s4 = inlined_call_operand.vmem [shape: f32[16,128], index: 4, kind: input, shape index: {}]
  %s5 = inlined_call_operand.hbm [shape: f32[384,256], index: 5, kind: input, shape index: {}]
  %s6 = inlined_call_operand.vmem [shape: f32[1,256], index: 6, kind: input, shape index: {}]
  %s7 = inlined_call_operand.hbm [shape: f32[384,128], index: 7, kind: input, shape index: {}]
  %s8 = inlined_call_operand.vmem [shape: f32[1,128], index: 8, kind: input, shape index: {}]
  %s9 = inlined_call_operand.hbm [shape: f32[16,128], index: 9, kind: output, shape index: {}]
  %s10 = sld [smem:[#allocation0]]
  $region58: #{tpu_custom_call.1} parent=0
    _
  %s12 = ssub.s32 1, %s10
  %s13 = scalar_select 0, %s12, %s10
  $region1: #{tpu_custom_call.1} parent=0
    #allocation2 [shape = 'u8[262144]{0}', space=vmem, size = 0x40000, scoped, tag = 'input window, operand 2, single buffered']
    #allocation3 [shape = 's32[1]{0}', space=sflag, size = 0x4, scoped, tag = 'scoped memory for tpu_custom_call.1']
    #allocation4 [shape = 's32[1]{0}', space=sflag, size = 0x4, scoped, tag = 'scoped memory for tpu_custom_call.1']
    #allocation5 [shape = 'u8[393216]{0}', space=vmem, size = 0x60000, scoped, tag = 'input window, operand 5, single buffered']
    #allocation6 [shape = 's32[1]{0}', space=sflag, size = 0x4, scoped, tag = 'scoped memory for tpu_custom_call.1']
    #allocation7 [shape = 'u8[196608]{0}', space=vmem, size = 0x30000, scoped, tag = 'input window, operand 7, single buffered']
    #allocation8 [shape = 'u8[8192]{0}', space=vmem, size = 0x2000, scoped, tag = 'output window, operand 0, single buffered']
    %14 = vsyncpa [#allocation3], 0
    %15 = vsyncpa [#allocation6], 0
    %16 = vsyncpa [#allocation4], 0
    // Predicated region
    $region2: #{tpu_custom_call.1} parent=1 // pred_check
      _
    $region3: #{tpu_custom_call.1} parent=1 // pred_check_branch
      %18 = sbr.rel (0) target = $region5
    $region4: #{tpu_custom_call.1} parent=1 // pred_region
      _
    $region5: #{tpu_custom_call.1} parent=1 // pred_fallthru
      _
    // Predicated region
    $region6: #{tpu_custom_call.1} parent=1 // pred_check
      _
    $region7: #{tpu_custom_call.1} parent=1 // pred_check_branch
      %20 = sbr.rel (0) target = $region9
    $region8: #{tpu_custom_call.1} parent=1 // pred_region
      _
    $region9: #{tpu_custom_call.1} parent=1 // pred_fallthru
      _
    // Predicated region
    $region10: #{tpu_custom_call.1} parent=1 // pred_check
      _
    $region11: #{tpu_custom_call.1} parent=1 // pred_check_branch
      %22 = sbr.rel (0) target = $region13
    $region12: #{tpu_custom_call.1} parent=1 // pred_region
      %s24 = ssub.s32 8192, 8192
      %25 = vsyncadd [#allocation3], %s24
      %s26 = sshll.u32 [#allocation2], 4
      %s27 = int_to_ptr.vmem [resolvable:$true] %s26
      %32 = dma.hbm_to_vmem [thread:$0]  %s2, 8192, %s27, [#allocation3], 128, 128, 8
    $region13: #{tpu_custom_call.1} parent=1 // pred_fallthru
      _
    // Predicated region
    $region14: #{tpu_custom_call.1} parent=1 // pred_check
      _
    $region15: #{tpu_custom_call.1} parent=1 // pred_check_branch
      %34 = sbr.rel (0) target = $region17
    $region16: #{tpu_custom_call.1} parent=1 // pred_region
      _
    $region17: #{tpu_custom_call.1} parent=1 // pred_fallthru
      _
    // Predicated region
    $region18: #{tpu_custom_call.1} parent=1 // pred_check
      _
    $region19: #{tpu_custom_call.1} parent=1 // pred_check_branch
      %36 = sbr.rel (0) target = $region21
    $region20: #{tpu_custom_call.1} parent=1 // pred_region
      _
    $region21: #{tpu_custom_call.1} parent=1 // pred_fallthru
      _
    // Predicated region
    $region22: #{tpu_custom_call.1} parent=1 // pred_check
      _
    $region23: #{tpu_custom_call.1} parent=1 // pred_check_branch
      %38 = sbr.rel (0) target = $region25
    $region24: #{tpu_custom_call.1} parent=1 // pred_region
      %s40 = ssub.s32 12288, 12288
      %41 = vsyncadd [#allocation6], %s40
      %s42 = sshll.u32 [#allocation5], 4
      %s43 = int_to_ptr.vmem [resolvable:$true] %s42
      %48 = dma.hbm_to_vmem [thread:$0]  %s5, 12288, %s43, [#allocation6], 256, 256, 16
    $region25: #{tpu_custom_call.1} parent=1 // pred_fallthru
      _
    // Predicated region
    $region26: #{tpu_custom_call.1} parent=1 // pred_check
      _
    $region27: #{tpu_custom_call.1} parent=1 // pred_check_branch
      %50 = sbr.rel (0) target = $region29
    $region28: #{tpu_custom_call.1} parent=1 // pred_region
      _
    $region29: #{tpu_custom_call.1} parent=1 // pred_fallthru
      _
    // Predicated region
    $region30: #{tpu_custom_call.1} parent=1 // pred_check
      _
    $region31: #{tpu_custom_call.1} parent=1 // pred_check_branch
      %52 = sbr.rel (0) target = $region33
    $region32: #{tpu_custom_call.1} parent=1 // pred_region
      %s54 = ssub.s32 6144, 6144
      %55 = vsyncadd [#allocation6], %s54
      %s56 = sshll.u32 [#allocation7], 4
      %s57 = int_to_ptr.vmem [resolvable:$true] %s56
      %62 = dma.hbm_to_vmem [thread:$0]  %s7, 6144, %s57, [#allocation6], 128, 128, 8
    $region33: #{tpu_custom_call.1} parent=1 // pred_fallthru
      _
    // Predicated region
    $region34: #{tpu_custom_call.1} parent=1 // pred_check
      _
    $region35: #{tpu_custom_call.1} parent=1 // pred_check_branch
      %64 = sbr.rel (0) target = $region37
    $region36: #{tpu_custom_call.1} parent=1 // pred_region
      _
    $region37: #{tpu_custom_call.1} parent=1 // pred_fallthru
      _
    // Predicated region
    $region38: #{tpu_custom_call.1} parent=1 // pred_check
      _
    $region39: #{tpu_custom_call.1} parent=1 // pred_check_branch
      %66 = sbr.rel (0) target = $region41
    $region40: #{tpu_custom_call.1} parent=1 // pred_region
      %67 = dma.done [#allocation3], 8192
    $region41: #{tpu_custom_call.1} parent=1 // pred_fallthru
      _
    // Predicated region
    $region42: #{tpu_custom_call.1} parent=1 // pred_check
      _
    $region43: #{tpu_custom_call.1} parent=1 // pred_check_branch
      %69 = sbr.rel (0) target = $region45
    $region44: #{tpu_custom_call.1} parent=1 // pred_region
      %70 = dma.done [#allocation6], 12288
    $region45: #{tpu_custom_call.1} parent=1 // pred_fallthru
      _
    // Predicated region
    $region46: #{tpu_custom_call.1} parent=1 // pred_check
      _
    $region47: #{tpu_custom_call.1} parent=1 // pred_check_branch
      %72 = sbr.rel (0) target = $region49
    $region48: #{tpu_custom_call.1} parent=1 // pred_region
      %73 = dma.done [#allocation6], 6144
    $region49: #{tpu_custom_call.1} parent=1 // pred_fallthru
      _
    %v74 = vld [vmem:[%s1] sm:$0xff]
    %v75 = vld [vmem:[%s1 + $0x8] sm:$0xff]
    %v76 = vld [vmem:[%s1 + $0x10] sm:$0xff]
    %v77 = vld [vmem:[%s1 + $0x18] sm:$0xff]
    %v78 = vld [vmem:[%s1 + $0x20] sm:$0xff]
    %v79 = vld [vmem:[%s1 + $0x28] sm:$0xff]
    %v80 = vld [vmem:[%s1 + $0x30] sm:$0xff]
    %v81 = vld [vmem:[%s1 + $0x38] sm:$0xff]
    %v82 = vld [vmem:[#allocation2] sm:$0xff]
    %v83 = vld [vmem:[#allocation2 + $0x8] sm:$0xff]
    %v84 = vld [vmem:[#allocation2 + $0x10] sm:$0xff]
    %v85 = vld [vmem:[#allocation2 + $0x18] sm:$0xff]
    %v86 = vld [vmem:[#allocation2 + $0x20] sm:$0xff]
    %v87 = vld [vmem:[#allocation2 + $0x28] sm:$0xff]
    %v88 = vld [vmem:[#allocation2 + $0x30] sm:$0xff]
    %v89 = vld [vmem:[#allocation2 + $0x38] sm:$0xff]
    %v90 = vld [vmem:[#allocation2 + $0x40] sm:$0xff]
    %v91 = vld [vmem:[#allocation2 + $0x48] sm:$0xff]
    %v92 = vld [vmem:[#allocation2 + $0x50] sm:$0xff]
    %v93 = vld [vmem:[#allocation2 + $0x58] sm:$0xff]
    %v94 = vld [vmem:[#allocation2 + $0x60] sm:$0xff]
    %v95 = vld [vmem:[#allocation2 + $0x68] sm:$0xff]
    %v96 = vld [vmem:[#allocation2 + $0x70] sm:$0xff]
    %v97 = vld [vmem:[#allocation2 + $0x78] sm:$0xff]
    %v98 = vld [vmem:[#allocation2 + $0x80] sm:$0xff]
    %v99 = vld [vmem:[#allocation2 + $0x88] sm:$0xff]
    %v100 = vld [vmem:[#allocation2 + $0x90] sm:$0xff]
    %v101 = vld [vmem:[#allocation2 + $0x98] sm:$0xff]
    %v102 = vld [vmem:[#allocation2 + $0xa0] sm:$0xff]
    %v103 = vld [vmem:[#allocation2 + $0xa8] sm:$0xff]
    %v104 = vld [vmem:[#allocation2 + $0xb0] sm:$0xff]
    %v105 = vld [vmem:[#allocation2 + $0xb8] sm:$0xff]
    %v106 = vld [vmem:[#allocation2 + $0xc0] sm:$0xff]
    %v107 = vld [vmem:[#allocation2 + $0xc8] sm:$0xff]
    %v108 = vld [vmem:[#allocation2 + $0xd0] sm:$0xff]
    %v109 = vld [vmem:[#allocation2 + $0xd8] sm:$0xff]
    %v110 = vld [vmem:[#allocation2 + $0xe0] sm:$0xff]
    %v111 = vld [vmem:[#allocation2 + $0xe8] sm:$0xff]
    %v112 = vld [vmem:[#allocation2 + $0xf0] sm:$0xff]
    %v113 = vld [vmem:[#allocation2 + $0xf8] sm:$0xff]
    %v114 = vld [vmem:[#allocation2 + $0x100] sm:$0xff]
    %v115 = vld [vmem:[#allocation2 + $0x108] sm:$0xff]
    %v116 = vld [vmem:[#allocation2 + $0x110] sm:$0xff]
    %v117 = vld [vmem:[#allocation2 + $0x118] sm:$0xff]
    %v118 = vld [vmem:[#allocation2 + $0x120] sm:$0xff]
    %v119 = vld [vmem:[#allocation2 + $0x128] sm:$0xff]
    %v120 = vld [vmem:[#allocation2 + $0x130] sm:$0xff]
    %v121 = vld [vmem:[#allocation2 + $0x138] sm:$0xff]
    %v122 = vld [vmem:[#allocation2 + $0x140] sm:$0xff]
    %v123 = vld [vmem:[#allocation2 + $0x148] sm:$0xff]
    %v124 = vld [vmem:[#allocation2 + $0x150] sm:$0xff]
    %v125 = vld [vmem:[#allocation2 + $0x158] sm:$0xff]
    %v126 = vld [vmem:[#allocation2 + $0x160] sm:$0xff]
    %v127 = vld [vmem:[#allocation2 + $0x168] sm:$0xff]
    %v128 = vld [vmem:[#allocation2 + $0x170] sm:$0xff]
    %v129 = vld [vmem:[#allocation2 + $0x178] sm:$0xff]
    %v130 = vld [vmem:[#allocation2 + $0x180] sm:$0xff]
    %v131 = vld [vmem:[#allocation2 + $0x188] sm:$0xff]
    %v132 = vld [vmem:[#allocation2 + $0x190] sm:$0xff]
    %v133 = vld [vmem:[#allocation2 + $0x198] sm:$0xff]
    %v134 = vld [vmem:[#allocation2 + $0x1a0] sm:$0xff]
    %v135 = vld [vmem:[#allocation2 + $0x1a8] sm:$0xff]
    %v136 = vld [vmem:[#allocation2 + $0x1b0] sm:$0xff]
    %v137 = vld [vmem:[#allocation2 + $0x1b8] sm:$0xff]
    %v138 = vld [vmem:[#allocation2 + $0x1c0] sm:$0xff]
    %v139 = vld [vmem:[#allocation2 + $0x1c8] sm:$0xff]
    %v140 = vld [vmem:[#allocation2 + $0x1d0] sm:$0xff]
    %v141 = vld [vmem:[#allocation2 + $0x1d8] sm:$0xff]
    %v142 = vld [vmem:[#allocation2 + $0x1e0] sm:$0xff]
    %v143 = vld [vmem:[#allocation2 + $0x1e8] sm:$0xff]
    %v144 = vld [vmem:[#allocation2 + $0x1f0] sm:$0xff]
    %v145 = vld [vmem:[#allocation2 + $0x1f8] sm:$0xff]
    %v146 = vld [vmem:[%s3] sm:$0xff]
    %v147 = vld [vmem:[%s3 + $0x8] sm:$0xff]
    %v148 = vld [vmem:[%s4] sm:$0xff]
    %v149 = vld [vmem:[%s4 + $0x8] sm:$0xff]
    %v150 = vld [vmem:[#allocation5] sm:$0xff]
    %v151 = vld [vmem:[#allocation5 + $0x8] sm:$0xff]
    %v152 = vld [vmem:[#allocation5 + $0x10] sm:$0xff]
    %v153 = vld [vmem:[#allocation5 + $0x18] sm:$0xff]
    %v154 = vld [vmem:[#allocation5 + $0x20] sm:$0xff]
    %v155 = vld [vmem:[#allocation5 + $0x28] sm:$0xff]
    %v156 = vld [vmem:[#allocation5 + $0x30] sm:$0xff]
    %v157 = vld [vmem:[#allocation5 + $0x38] sm:$0xff]
    %v158 = vld [vmem:[#allocation5 + $0x40] sm:$0xff]
    %v159 = vld [vmem:[#allocation5 + $0x48] sm:$0xff]
    %v160 = vld [vmem:[#allocation5 + $0x50] sm:$0xff]
    %v161 = vld [vmem:[#allocation5 + $0x58] sm:$0xff]
    %v162 = vld [vmem:[#allocation5 + $0x60] sm:$0xff]
    %v163 = vld [vmem:[#allocation5 + $0x68] sm:$0xff]
    %v164 = vld [vmem:[#allocation5 + $0x70] sm:$0xff]
    %v165 = vld [vmem:[#allocation5 + $0x78] sm:$0xff]
    %v166 = vld [vmem:[#allocation5 + $0x80] sm:$0xff]
    %v167 = vld [vmem:[#allocation5 + $0x88] sm:$0xff]
    %v168 = vld [vmem:[#allocation5 + $0x90] sm:$0xff]
    %v169 = vld [vmem:[#allocation5 + $0x98] sm:$0xff]
    %v170 = vld [vmem:[#allocation5 + $0xa0] sm:$0xff]
    %v171 = vld [vmem:[#allocation5 + $0xa8] sm:$0xff]
    %v172 = vld [vmem:[#allocation5 + $0xb0] sm:$0xff]
    %v173 = vld [vmem:[#allocation5 + $0xb8] sm:$0xff]
    %v174 = vld [vmem:[#allocation5 + $0xc0] sm:$0xff]
    %v175 = vld [vmem:[#allocation5 + $0xc8] sm:$0xff]
    %v176 = vld [vmem:[#allocation5 + $0xd0] sm:$0xff]
    %v177 = vld [vmem:[#allocation5 + $0xd8] sm:$0xff]
    %v178 = vld [vmem:[#allocation5 + $0xe0] sm:$0xff]
    %v179 = vld [vmem:[#allocation5 + $0xe8] sm:$0xff]
    %v180 = vld [vmem:[#allocation5 + $0xf0] sm:$0xff]
    %v181 = vld [vmem:[#allocation5 + $0xf8] sm:$0xff]
    %v182 = vld [vmem:[#allocation5 + $0x100] sm:$0xff]
    %v183 = vld [vmem:[#allocation5 + $0x108] sm:$0xff]
    %v184 = vld [vmem:[#allocation5 + $0x110] sm:$0xff]
    %v185 = vld [vmem:[#allocation5 + $0x118] sm:$0xff]
    %v186 = vld [vmem:[#allocation5 + $0x120] sm:$0xff]
    %v187 = vld [vmem:[#allocation5 + $0x128] sm:$0xff]
    %v188 = vld [vmem:[#allocation5 + $0x130] sm:$0xff]
    %v189 = vld [vmem:[#allocation5 + $0x138] sm:$0xff]
    %v190 = vld [vmem:[#allocation5 + $0x140] sm:$0xff]
    %v191 = vld [vmem:[#allocation5 + $0x148] sm:$0xff]
    %v192 = vld [vmem:[#allocation5 + $0x150] sm:$0xff]
    %v193 = vld [vmem:[#allocation5 + $0x158] sm:$0xff]
    %v194 = vld [vmem:[#allocation5 + $0x160] sm:$0xff]
    %v195 = vld [vmem:[#allocation5 + $0x168] sm:$0xff]
    %v196 = vld [vmem:[#allocation5 + $0x170] sm:$0xff]
    %v197 = vld [vmem:[#allocation5 + $0x178] sm:$0xff]
    %v198 = vld [vmem:[#allocation5 + $0x180] sm:$0xff]
    %v199 = vld [vmem:[#allocation5 + $0x188] sm:$0xff]
    %v200 = vld [vmem:[#allocation5 + $0x190] sm:$0xff]
    %v201 = vld [vmem:[#allocation5 + $0x198] sm:$0xff]
    %v202 = vld [vmem:[#allocation5 + $0x1a0] sm:$0xff]
    %v203 = vld [vmem:[#allocation5 + $0x1a8] sm:$0xff]
    %v204 = vld [vmem:[#allocation5 + $0x1b0] sm:$0xff]
    %v205 = vld [vmem:[#allocation5 + $0x1b8] sm:$0xff]
    %v206 = vld [vmem:[#allocation5 + $0x1c0] sm:$0xff]
    %v207 = vld [vmem:[#allocation5 + $0x1c8] sm:$0xff]
    %v208 = vld [vmem:[#allocation5 + $0x1d0] sm:$0xff]
    %v209 = vld [vmem:[#allocation5 + $0x1d8] sm:$0xff]
    %v210 = vld [vmem:[#allocation5 + $0x1e0] sm:$0xff]
    %v211 = vld [vmem:[#allocation5 + $0x1e8] sm:$0xff]
    %v212 = vld [vmem:[#allocation5 + $0x1f0] sm:$0xff]
    %v213 = vld [vmem:[#allocation5 + $0x1f8] sm:$0xff]
    %v214 = vld [vmem:[#allocation5 + $0x200] sm:$0xff]
    %v215 = vld [vmem:[#allocation5 + $0x208] sm:$0xff]
    %v216 = vld [vmem:[#allocation5 + $0x210] sm:$0xff]
    %v217 = vld [vmem:[#allocation5 + $0x218] sm:$0xff]
    %v218 = vld [vmem:[#allocation5 + $0x220] sm:$0xff]
    %v219 = vld [vmem:[#allocation5 + $0x228] sm:$0xff]
    %v220 = vld [vmem:[#allocation5 + $0x230] sm:$0xff]
    %v221 = vld [vmem:[#allocation5 + $0x238] sm:$0xff]
    %v222 = vld [vmem:[#allocation5 + $0x240] sm:$0xff]
    %v223 = vld [vmem:[#allocation5 + $0x248] sm:$0xff]
    %v224 = vld [vmem:[#allocation5 + $0x250] sm:$0xff]
    %v225 = vld [vmem:[#allocation5 + $0x258] sm:$0xff]
    %v226 = vld [vmem:[#allocation5 + $0x260] sm:$0xff]
    %v227 = vld [vmem:[#allocation5 + $0x268] sm:$0xff]
    %v228 = vld [vmem:[#allocation5 + $0x270] sm:$0xff]
    %v229 = vld [vmem:[#allocation5 + $0x278] sm:$0xff]
    %v230 = vld [vmem:[#allocation5 + $0x280] sm:$0xff]
    %v231 = vld [vmem:[#allocation5 + $0x288] sm:$0xff]
    %v232 = vld [vmem:[#allocation5 + $0x290] sm:$0xff]
    %v233 = vld [vmem:[#allocation5 + $0x298] sm:$0xff]
    %v234 = vld [vmem:[#allocation5 + $0x2a0] sm:$0xff]
    %v235 = vld [vmem:[#allocation5 + $0x2a8] sm:$0xff]
    %v236 = vld [vmem:[#allocation5 + $0x2b0] sm:$0xff]
    %v237 = vld [vmem:[#allocation5 + $0x2b8] sm:$0xff]
    %v238 = vld [vmem:[#allocation5 + $0x2c0] sm:$0xff]
    %v239 = vld [vmem:[#allocation5 + $0x2c8] sm:$0xff]
    %v240 = vld [vmem:[#allocation5 + $0x2d0] sm:$0xff]
    %v241 = vld [vmem:[#allocation5 + $0x2d8] sm:$0xff]
    %v242 = vld [vmem:[#allocation5 + $0x2e0] sm:$0xff]
    %v243 = vld [vmem:[#allocation5 + $0x2e8] sm:$0xff]
    %v244 = vld [vmem:[#allocation5 + $0x2f0] sm:$0xff]
    %v245 = vld [vmem:[#allocation5 + $0x2f8] sm:$0xff]
    %v246 = vld [vmem:[%s6] sm:$0x3]
    %v247 = vld [vmem:[#allocation7] sm:$0xff]
    %v248 = vld [vmem:[#allocation7 + $0x8] sm:$0xff]
    %v249 = vld [vmem:[#allocation7 + $0x10] sm:$0xff]
    %v250 = vld [vmem:[#allocation7 + $0x18] sm:$0xff]
    %v251 = vld [vmem:[#allocation7 + $0x20] sm:$0xff]
    %v252 = vld [vmem:[#allocation7 + $0x28] sm:$0xff]
    %v253 = vld [vmem:[#allocation7 + $0x30] sm:$0xff]
    %v254 = vld [vmem:[#allocation7 + $0x38] sm:$0xff]
    %v255 = vld [vmem:[#allocation7 + $0x40] sm:$0xff]
    %v256 = vld [vmem:[#allocation7 + $0x48] sm:$0xff]
    %v257 = vld [vmem:[#allocation7 + $0x50] sm:$0xff]
    %v258 = vld [vmem:[#allocation7 + $0x58] sm:$0xff]
    %v259 = vld [vmem:[#allocation7 + $0x60] sm:$0xff]
    %v260 = vld [vmem:[#allocation7 + $0x68] sm:$0xff]
    %v261 = vld [vmem:[#allocation7 + $0x70] sm:$0xff]
    %v262 = vld [vmem:[#allocation7 + $0x78] sm:$0xff]
    %v263 = vld [vmem:[#allocation7 + $0x80] sm:$0xff]
    %v264 = vld [vmem:[#allocation7 + $0x88] sm:$0xff]
    %v265 = vld [vmem:[#allocation7 + $0x90] sm:$0xff]
    %v266 = vld [vmem:[#allocation7 + $0x98] sm:$0xff]
    %v267 = vld [vmem:[#allocation7 + $0xa0] sm:$0xff]
    %v268 = vld [vmem:[#allocation7 + $0xa8] sm:$0xff]
    %v269 = vld [vmem:[#allocation7 + $0xb0] sm:$0xff]
    %v270 = vld [vmem:[#allocation7 + $0xb8] sm:$0xff]
    %v271 = vld [vmem:[#allocation7 + $0xc0] sm:$0xff]
    %v272 = vld [vmem:[#allocation7 + $0xc8] sm:$0xff]
    %v273 = vld [vmem:[#allocation7 + $0xd0] sm:$0xff]
    %v274 = vld [vmem:[#allocation7 + $0xd8] sm:$0xff]
    %v275 = vld [vmem:[#allocation7 + $0xe0] sm:$0xff]
    %v276 = vld [vmem:[#allocation7 + $0xe8] sm:$0xff]
    %v277 = vld [vmem:[#allocation7 + $0xf0] sm:$0xff]
    %v278 = vld [vmem:[#allocation7 + $0xf8] sm:$0xff]
    %v279 = vld [vmem:[#allocation7 + $0x100] sm:$0xff]
    %v280 = vld [vmem:[#allocation7 + $0x108] sm:$0xff]
    %v281 = vld [vmem:[#allocation7 + $0x110] sm:$0xff]
    %v282 = vld [vmem:[#allocation7 + $0x118] sm:$0xff]
    %v283 = vld [vmem:[#allocation7 + $0x120] sm:$0xff]
    %v284 = vld [vmem:[#allocation7 + $0x128] sm:$0xff]
    %v285 = vld [vmem:[#allocation7 + $0x130] sm:$0xff]
    %v286 = vld [vmem:[#allocation7 + $0x138] sm:$0xff]
    %v287 = vld [vmem:[#allocation7 + $0x140] sm:$0xff]
    %v288 = vld [vmem:[#allocation7 + $0x148] sm:$0xff]
    %v289 = vld [vmem:[#allocation7 + $0x150] sm:$0xff]
    %v290 = vld [vmem:[#allocation7 + $0x158] sm:$0xff]
    %v291 = vld [vmem:[#allocation7 + $0x160] sm:$0xff]
    %v292 = vld [vmem:[#allocation7 + $0x168] sm:$0xff]
    %v293 = vld [vmem:[#allocation7 + $0x170] sm:$0xff]
    %v294 = vld [vmem:[#allocation7 + $0x178] sm:$0xff]
    %v295 = vld [vmem:[%s8] sm:$0x1]
    %v296 = vld [vmem:[%s0] sm:$0xff]
    %v297 = vld [vmem:[%s0 + $0x8] sm:$0xff]
    %vm298 = vcmask 130048
    %v300 = vsel %vm298, %v74, 0
    %v303 = vsel %vm298, %v75, 0
    %v306 = vsel %vm298, %v76, 0
    %v309 = vsel %vm298, %v77, 0
    %v312 = vsel %vm298, %v78, 0
    %v315 = vsel %vm298, %v79, 0
    %v318 = vsel %vm298, %v80, 0
    %v321 = vsel %vm298, %v81, 0
    %323 = vmatprep.subr.mxu0 0.0
    %324 = vmatpush1.msra.mxu0 %v296
    %325 = vmatprep.subr.mxu0 0.0
    %326 = vmatpush1.msra.mxu0 %v297
    %327 = vmatprep.subr.mxu0 0.0
    %328 = vmatpush1.msra.mxu0 0.0
    %329 = vmatprep.subr.mxu0 0.0
    %330 = vmatpush1.msra.mxu0 0.0
    %331 = vmatprep.subr.mxu0 0.0
    %332 = vmatpush1.msra.mxu0 0.0
    %333 = vmatprep.subr.mxu0 0.0
    %334 = vmatpush1.msra.mxu0 0.0
    %335 = vmatprep.subr.mxu0 0.0
    %336 = vmatpush1.msra.mxu0 0.0
    %337 = vmatprep.subr.mxu0 0.0
    %338 = vmatpush1.msra.mxu0 0.0
    %339 = vmatprep.subr.mxu0 0.0
    %340 = vmatpush1.msra.mxu0 0.0
    %341 = vmatprep.subr.mxu0 0.0
    %342 = vmatpush1.msra.mxu0 0.0
    %343 = vmatprep.subr.mxu0 0.0
    %344 = vmatpush1.msra.mxu0 0.0
    %345 = vmatprep.subr.mxu0 0.0
    %346 = vmatpush1.msra.mxu0 0.0
    %347 = vmatprep.subr.mxu0 0.0
    %348 = vmatpush1.msra.mxu0 0.0
    %349 = vmatprep.subr.mxu0 0.0
    %350 = vmatpush1.msra.mxu0 0.0
    %351 = vmatprep.subr.mxu0 0.0
    %352 = vmatpush1.msra.mxu0 0.0
    %353 = vmatprep.subr.mxu0 0.0
    %354 = vmatpush1.msra.mxu0 0.0
    %355 = vmatprep.subr.mxu0 0.0
    %356 = vmatpush1.msra.mxu0 0.0
    %357 = vmatprep.subr.mxu0 0.0
    %358 = vmatpush1.msra.mxu0 0.0
    %359 = vmatprep.subr.mxu0 0.0
    %360 = vmatpush1.msra.mxu0 0.0
    %361 = vmatprep.subr.mxu0 0.0
    %362 = vmatpush1.msra.mxu0 0.0
    %363 = vmatprep.subr.mxu0 0.0
    %364 = vmatpush1.msra.mxu0 0.0
    %365 = vmatprep.subr.mxu0 0.0
    %366 = vmatpush1.msra.mxu0 0.0
    %367 = vmatprep.subr.mxu0 0.0
    %368 = vmatpush1.msra.mxu0 0.0
    %369 = vmatprep.subr.mxu0 0.0
    %370 = vmatpush1.msra.mxu0 0.0
    %371 = vmatprep.subr.mxu0 0.0
    %372 = vmatpush1.msra.mxu0 0.0
    %373 = vmatprep.subr.mxu0 0.0
    %374 = vmatpush1.msra.mxu0 0.0
    %375 = vmatprep.subr.mxu0 0.0
    %376 = vmatpush1.msra.mxu0 0.0
    %377 = vmatprep.subr.mxu0 0.0
    %378 = vmatpush1.msra.mxu0 0.0
    %379 = vmatprep.subr.mxu0 0.0
    %380 = vmatpush1.msra.mxu0 0.0
    %381 = vmatprep.subr.mxu0 0.0
    %382 = vmatpush1.msra.mxu0 0.0
    %383 = vmatprep.subr.mxu0 0.0
    %384 = vmatpush1.msra.mxu0 0.0
    %385 = vmatprep.subr.mxu0 0.0
    %386 = vmatpush1.msra.mxu0 0.0
    %387 = vmatprep.mubr.f32.mxu0 0.0
    %388 = vmatmul.mubr.f32.gmra.mrb[0].mxu0 %v300
    %v389 = vpop.f32.mrb[0].mxu0
    %v390 = vadd.f32 0.0, %v389
    %v391 = vpop.f32.mrb[0].mxu0
    %392 = vmatprep.mubr.f32.mxu0 0.0
    %393 = vmatmul.mubr.f32.gmra.mrb[0].mxu0 %v303
    %v394 = vpop.f32.mrb[0].mxu0
    %v395 = vadd.f32 0.0, %v394
    %v396 = vpop.f32.mrb[0].mxu0
    %397 = vmatprep.mubr.f32.mxu0 0.0
    %398 = vmatmul.mubr.f32.gmra.mrb[0].mxu0 %v306
    %v399 = vpop.f32.mrb[0].mxu0
    %v400 = vadd.f32 0.0, %v399
    %v401 = vpop.f32.mrb[0].mxu0
    %402 = vmatprep.mubr.f32.mxu0 0.0
    %403 = vmatmul.mubr.f32.gmra.mrb[0].mxu0 %v309
    %v404 = vpop.f32.mrb[0].mxu0
    %v405 = vadd.f32 0.0, %v404
    %v406 = vpop.f32.mrb[0].mxu0
    %407 = vmatprep.mubr.f32.mxu0 0.0
    %408 = vmatmul.mubr.f32.gmra.mrb[0].mxu0 %v312
    %v409 = vpop.f32.mrb[0].mxu0
    %v410 = vadd.f32 0.0, %v409
    %v411 = vpop.f32.mrb[0].mxu0
    %412 = vmatprep.mubr.f32.mxu0 0.0
    %413 = vmatmul.mubr.f32.gmra.mrb[0].mxu0 %v315
    %v414 = vpop.f32.mrb[0].mxu0
    %v415 = vadd.f32 0.0, %v414
    %v416 = vpop.f32.mrb[0].mxu0
    %417 = vmatprep.mubr.f32.mxu0 0.0
    %418 = vmatmul.mubr.f32.gmra.mrb[0].mxu0 %v318
    %v419 = vpop.f32.mrb[0].mxu0
    %v420 = vadd.f32 0.0, %v419
    %v421 = vpop.f32.mrb[0].mxu0
    %422 = vmatprep.mubr.f32.mxu0 0.0
    %423 = vmatmul.mubr.f32.gmra.mrb[0].mxu0 %v321
    %v424 = vpop.f32.mrb[0].mxu0
    %v425 = vadd.f32 0.0, %v424
    %v426 = vpop.f32.mrb[0].mxu0
    %427 = vdwg.mxu0
    %428 = vmatprep.subr.mxu0 0.0
    %429 = vmatpush1.msra.mxu0 %v82
    %430 = vmatprep.subr.mxu0 0.0
    %431 = vmatpush1.msra.mxu0 %v83
    %432 = vmatprep.subr.mxu0 0.0
    %433 = vmatpush1.msra.mxu0 %v84
    %434 = vmatprep.subr.mxu0 0.0
    %435 = vmatpush1.msra.mxu0 %v85
    %436 = vmatprep.subr.mxu0 0.0
    %437 = vmatpush1.msra.mxu0 %v86
    %438 = vmatprep.subr.mxu0 0.0
    %439 = vmatpush1.msra.mxu0 %v87
    %440 = vmatprep.subr.mxu0 0.0
    %441 = vmatpush1.msra.mxu0 %v88
    %442 = vmatprep.subr.mxu0 0.0
    %443 = vmatpush1.msra.mxu0 %v89
    %444 = vmatprep.subr.mxu0 0.0
    %445 = vmatpush1.msra.mxu0 %v90
    %446 = vmatprep.subr.mxu0 0.0
    %447 = vmatpush1.msra.mxu0 %v91
    %448 = vmatprep.subr.mxu0 0.0
    %449 = vmatpush1.msra.mxu0 %v92
    %450 = vmatprep.subr.mxu0 0.0
    %451 = vmatpush1.msra.mxu0 %v93
    %452 = vmatprep.subr.mxu0 0.0
    %453 = vmatpush1.msra.mxu0 %v94
    %454 = vmatprep.subr.mxu0 0.0
    %455 = vmatpush1.msra.mxu0 %v95
    %456 = vmatprep.subr.mxu0 0.0
    %457 = vmatpush1.msra.mxu0 %v96
    %458 = vmatprep.subr.mxu0 0.0
    %459 = vmatpush1.msra.mxu0 %v97
    %460 = vmatprep.subr.mxu0 0.0
    %461 = vmatpush1.msra.mxu0 0.0
    %462 = vmatprep.subr.mxu0 0.0
    %463 = vmatpush1.msra.mxu0 0.0
    %464 = vmatprep.subr.mxu0 0.0
    %465 = vmatpush1.msra.mxu0 0.0
    %466 = vmatprep.subr.mxu0 0.0
    %467 = vmatpush1.msra.mxu0 0.0
    %468 = vmatprep.subr.mxu0 0.0
    %469 = vmatpush1.msra.mxu0 0.0
    %470 = vmatprep.subr.mxu0 0.0
    %471 = vmatpush1.msra.mxu0 0.0
    %472 = vmatprep.subr.mxu0 0.0
    %473 = vmatpush1.msra.mxu0 0.0
    %474 = vmatprep.subr.mxu0 0.0
    %475 = vmatpush1.msra.mxu0 0.0
    %476 = vmatprep.subr.mxu0 0.0
    %477 = vmatpush1.msra.mxu0 0.0
    %478 = vmatprep.subr.mxu0 0.0
    %479 = vmatpush1.msra.mxu0 0.0
    %480 = vmatprep.subr.mxu0 0.0
    %481 = vmatpush1.msra.mxu0 0.0
    %482 = vmatprep.subr.mxu0 0.0
    %483 = vmatpush1.msra.mxu0 0.0
    %484 = vmatprep.subr.mxu0 0.0
    %485 = vmatpush1.msra.mxu0 0.0
    %486 = vmatprep.subr.mxu0 0.0
    %487 = vmatpush1.msra.mxu0 0.0
    %488 = vmatprep.subr.mxu0 0.0
    %489 = vmatpush1.msra.mxu0 0.0
    %490 = vmatprep.subr.mxu0 0.0
    %491 = vmatpush1.msra.mxu0 0.0
    %492 = vmatprep.mubr.f32.mxu0 0.0
    %493 = vmatmul.mubr.f32.gmra.mrb[0].mxu0 %v390
    %v494 = vpop.f32.mrb[0].mxu0
    %v495 = vadd.f32 0.0, %v494
    %v496 = vpop.f32.mrb[0].mxu0
    %497 = vmatprep.mubr.f32.mxu0 0.0
    %498 = vmatmul.mubr.f32.gmra.mrb[0].mxu0 %v395
    %v499 = vpop.f32.mrb[0].mxu0
    %v500 = vadd.f32 0.0, %v499
    %v501 = vpop.f32.mrb[0].mxu0
    %502 = vdwg.mxu0
    %v503 = vadd.f32 %v146, %v495
    %v504 = vadd.f32 %v147, %v500
    %505 = vmatprep.subr.mxu0 0.0
    %506 = vmatpush1.msra.mxu0 %v114
    %507 = vmatprep.subr.mxu0 0.0
    %508 = vmatpush1.msra.mxu0 %v115
    %509 = vmatprep.subr.mxu0 0.0
    %510 = vmatpush1.msra.mxu0 %v116
    %511 = vmatprep.subr.mxu0 0.0
    %512 = vmatpush1.msra.mxu0 %v117
    %513 = vmatprep.subr.mxu0 0.0
    %514 = vmatpush1.msra.mxu0 %v118
    %515 = vmatprep.subr.mxu0 0.0
    %516 = vmatpush1.msra.mxu0 %v119
    %517 = vmatprep.subr.mxu0 0.0
    %518 = vmatpush1.msra.mxu0 %v120
    %519 = vmatprep.subr.mxu0 0.0
    %520 = vmatpush1.msra.mxu0 %v121
    %521 = vmatprep.subr.mxu0 0.0
    %522 = vmatpush1.msra.mxu0 %v122
    %523 = vmatprep.subr.mxu0 0.0
    %524 = vmatpush1.msra.mxu0 %v123
    %525 = vmatprep.subr.mxu0 0.0
    %526 = vmatpush1.msra.mxu0 %v124
    %527 = vmatprep.subr.mxu0 0.0
    %528 = vmatpush1.msra.mxu0 %v125
    %529 = vmatprep.subr.mxu0 0.0
    %530 = vmatpush1.msra.mxu0 %v126
    %531 = vmatprep.subr.mxu0 0.0
    %532 = vmatpush1.msra.mxu0 %v127
    %533 = vmatprep.subr.mxu0 0.0
    %534 = vmatpush1.msra.mxu0 %v128
    %535 = vmatprep.subr.mxu0 0.0
    %536 = vmatpush1.msra.mxu0 %v129
    %537 = vmatprep.subr.mxu0 0.0
    %538 = vmatpush1.msra.mxu0 0.0
    %539 = vmatprep.subr.mxu0 0.0
    %540 = vmatpush1.msra.mxu0 0.0
    %541 = vmatprep.subr.mxu0 0.0
    %542 = vmatpush1.msra.mxu0 0.0
    %543 = vmatprep.subr.mxu0 0.0
    %544 = vmatpush1.msra.mxu0 0.0
    %545 = vmatprep.subr.mxu0 0.0
    %546 = vmatpush1.msra.mxu0 0.0
    %547 = vmatprep.subr.mxu0 0.0
    %548 = vmatpush1.msra.mxu0 0.0
    %549 = vmatprep.subr.mxu0 0.0
    %550 = vmatpush1.msra.mxu0 0.0
    %551 = vmatprep.subr.mxu0 0.0
    %552 = vmatpush1.msra.mxu0 0.0
    %553 = vmatprep.subr.mxu0 0.0
    %554 = vmatpush1.msra.mxu0 0.0
    %555 = vmatprep.subr.mxu0 0.0
    %556 = vmatpush1.msra.mxu0 0.0
    %557 = vmatprep.subr.mxu0 0.0
    %558 = vmatpush1.msra.mxu0 0.0
    %559 = vmatprep.subr.mxu0 0.0
    %560 = vmatpush1.msra.mxu0 0.0
    %561 = vmatprep.subr.mxu0 0.0
    %562 = vmatpush1.msra.mxu0 0.0
    %563 = vmatprep.subr.mxu0 0.0
    %564 = vmatpush1.msra.mxu0 0.0
    %565 = vmatprep.subr.mxu0 0.0
    %566 = vmatpush1.msra.mxu0 0.0
    %567 = vmatprep.subr.mxu0 0.0
    %568 = vmatpush1.msra.mxu0 0.0
    %569 = vmatprep.mubr.f32.mxu0 0.0
    %570 = vmatmul.mubr.f32.gmra.mrb[0].mxu0 %v410
    %v571 = vpop.f32.mrb[0].mxu0
    %v572 = vadd.f32 0.0, %v571
    %v573 = vpop.f32.mrb[0].mxu0
    %574 = vmatprep.mubr.f32.mxu0 0.0
    %575 = vmatmul.mubr.f32.gmra.mrb[0].mxu0 %v415
    %v576 = vpop.f32.mrb[0].mxu0
    %v577 = vadd.f32 0.0, %v576
    %v578 = vpop.f32.mrb[0].mxu0
    %579 = vdwg.mxu0
    %v580 = vadd.f32 %v148, %v572
    %v581 = vadd.f32 %v149, %v577
    %582 = vmatprep.subr.mxu0 0.0
    %583 = vmatpush1.msra.mxu0 %v98
    %584 = vmatprep.subr.mxu0 0.0
    %585 = vmatpush1.msra.mxu0 %v99
    %586 = vmatprep.subr.mxu0 0.0
    %587 = vmatpush1.msra.mxu0 %v100
    %588 = vmatprep.subr.mxu0 0.0
    %589 = vmatpush1.msra.mxu0 %v101
    %590 = vmatprep.subr.mxu0 0.0
    %591 = vmatpush1.msra.mxu0 %v102
    %592 = vmatprep.subr.mxu0 0.0
    %593 = vmatpush1.msra.mxu0 %v103
    %594 = vmatprep.subr.mxu0 0.0
    %595 = vmatpush1.msra.mxu0 %v104
    %596 = vmatprep.subr.mxu0 0.0
    %597 = vmatpush1.msra.mxu0 %v105
    %598 = vmatprep.subr.mxu0 0.0
    %599 = vmatpush1.msra.mxu0 %v106
    %600 = vmatprep.subr.mxu0 0.0
    %601 = vmatpush1.msra.mxu0 %v107
    %602 = vmatprep.subr.mxu0 0.0
    %603 = vmatpush1.msra.mxu0 %v108
    %604 = vmatprep.subr.mxu0 0.0
    %605 = vmatpush1.msra.mxu0 %v109
    %606 = vmatprep.subr.mxu0 0.0
    %607 = vmatpush1.msra.mxu0 %v110
    %608 = vmatprep.subr.mxu0 0.0
    %609 = vmatpush1.msra.mxu0 %v111
    %610 = vmatprep.subr.mxu0 0.0
    %611 = vmatpush1.msra.mxu0 %v112
    %612 = vmatprep.subr.mxu0 0.0
    %613 = vmatpush1.msra.mxu0 %v113
    %614 = vmatprep.subr.mxu0 0.0
    %615 = vmatpush1.msra.mxu0 0.0
    %616 = vmatprep.subr.mxu0 0.0
    %617 = vmatpush1.msra.mxu0 0.0
    %618 = vmatprep.subr.mxu0 0.0
    %619 = vmatpush1.msra.mxu0 0.0
    %620 = vmatprep.subr.mxu0 0.0
    %621 = vmatpush1.msra.mxu0 0.0
    %622 = vmatprep.subr.mxu0 0.0
    %623 = vmatpush1.msra.mxu0 0.0
    %624 = vmatprep.subr.mxu0 0.0
    %625 = vmatpush1.msra.mxu0 0.0
    %626 = vmatprep.subr.mxu0 0.0
    %627 = vmatpush1.msra.mxu0 0.0
    %628 = vmatprep.subr.mxu0 0.0
    %629 = vmatpush1.msra.mxu0 0.0
    %630 = vmatprep.subr.mxu0 0.0
    %631 = vmatpush1.msra.mxu0 0.0
    %632 = vmatprep.subr.mxu0 0.0
    %633 = vmatpush1.msra.mxu0 0.0
    %634 = vmatprep.subr.mxu0 0.0
    %635 = vmatpush1.msra.mxu0 0.0
    %636 = vmatprep.subr.mxu0 0.0
    %637 = vmatpush1.msra.mxu0 0.0
    %638 = vmatprep.subr.mxu0 0.0
    %639 = vmatpush1.msra.mxu0 0.0
    %640 = vmatprep.subr.mxu0 0.0
    %641 = vmatpush1.msra.mxu0 0.0
    %642 = vmatprep.subr.mxu0 0.0
    %643 = vmatpush1.msra.mxu0 0.0
    %644 = vmatprep.subr.mxu0 0.0
    %645 = vmatpush1.msra.mxu0 0.0
    %646 = vmatprep.mubr.f32.mxu0 0.0
    %647 = vmatmul.mubr.f32.gmra.mrb[0].mxu0 %v400
    %v648 = vpop.f32.mrb[0].mxu0
    %v649 = vadd.f32 0.0, %v648
    %v650 = vpop.f32.mrb[0].mxu0
    %651 = vmatprep.mubr.f32.mxu0 0.0
    %652 = vmatmul.mubr.f32.gmra.mrb[0].mxu0 %v405
    %v653 = vpop.f32.mrb[0].mxu0
    %v654 = vadd.f32 0.0, %v653
    %v655 = vpop.f32.mrb[0].mxu0
    %656 = vdwg.mxu0
    %v657 = vadd.f32 %v503, %v649
    %v658 = vadd.f32 %v504, %v654
    %659 = vmatprep.subr.mxu0 0.0
    %660 = vmatpush1.msra.mxu0 %v130
    %661 = vmatprep.subr.mxu0 0.0
    %662 = vmatpush1.msra.mxu0 %v131
    %663 = vmatprep.subr.mxu0 0.0
    %664 = vmatpush1.msra.mxu0 %v132
    %665 = vmatprep.subr.mxu0 0.0
    %666 = vmatpush1.msra.mxu0 %v133
    %667 = vmatprep.subr.mxu0 0.0
    %668 = vmatpush1.msra.mxu0 %v134
    %669 = vmatprep.subr.mxu0 0.0
    %670 = vmatpush1.msra.mxu0 %v135
    %671 = vmatprep.subr.mxu0 0.0
    %672 = vmatpush1.msra.mxu0 %v136
    %673 = vmatprep.subr.mxu0 0.0
    %674 = vmatpush1.msra.mxu0 %v137
    %675 = vmatprep.subr.mxu0 0.0
    %676 = vmatpush1.msra.mxu0 %v138
    %677 = vmatprep.subr.mxu0 0.0
    %678 = vmatpush1.msra.mxu0 %v139
    %679 = vmatprep.subr.mxu0 0.0
    %680 = vmatpush1.msra.mxu0 %v140
    %681 = vmatprep.subr.mxu0 0.0
    %682 = vmatpush1.msra.mxu0 %v141
    %683 = vmatprep.subr.mxu0 0.0
    %684 = vmatpush1.msra.mxu0 %v142
    %685 = vmatprep.subr.mxu0 0.0
    %686 = vmatpush1.msra.mxu0 %v143
    %687 = vmatprep.subr.mxu0 0.0
    %688 = vmatpush1.msra.mxu0 %v144
    %689 = vmatprep.subr.mxu0 0.0
    %690 = vmatpush1.msra.mxu0 %v145
    %691 = vmatprep.subr.mxu0 0.0
    %692 = vmatpush1.msra.mxu0 0.0
    %693 = vmatprep.subr.mxu0 0.0
    %694 = vmatpush1.msra.mxu0 0.0
    %695 = vmatprep.subr.mxu0 0.0
    %696 = vmatpush1.msra.mxu0 0.0
    %697 = vmatprep.subr.mxu0 0.0
    %698 = vmatpush1.msra.mxu0 0.0
    %699 = vmatprep.subr.mxu0 0.0
    %700 = vmatpush1.msra.mxu0 0.0
    %701 = vmatprep.subr.mxu0 0.0
    %702 = vmatpush1.msra.mxu0 0.0
    %703 = vmatprep.subr.mxu0 0.0
    %704 = vmatpush1.msra.mxu0 0.0
    %705 = vmatprep.subr.mxu0 0.0
    %706 = vmatpush1.msra.mxu0 0.0
    %707 = vmatprep.subr.mxu0 0.0
    %708 = vmatpush1.msra.mxu0 0.0
    %709 = vmatprep.subr.mxu0 0.0
    %710 = vmatpush1.msra.mxu0 0.0
    %711 = vmatprep.subr.mxu0 0.0
    %712 = vmatpush1.msra.mxu0 0.0
    %713 = vmatprep.subr.mxu0 0.0
    %714 = vmatpush1.msra.mxu0 0.0
    %715 = vmatprep.subr.mxu0 0.0
    %716 = vmatpush1.msra.mxu0 0.0
    %717 = vmatprep.subr.mxu0 0.0
    %718 = vmatpush1.msra.mxu0 0.0
    %719 = vmatprep.subr.mxu0 0.0
    %720 = vmatpush1.msra.mxu0 0.0
    %721 = vmatprep.subr.mxu0 0.0
    %722 = vmatpush1.msra.mxu0 0.0
    %723 = vmatprep.mubr.f32.mxu0 0.0
    %724 = vmatmul.mubr.f32.gmra.mrb[0].mxu0 %v420
    %v725 = vpop.f32.mrb[0].mxu0
    %v726 = vadd.f32 0.0, %v725
    %v727 = vpop.f32.mrb[0].mxu0
    %728 = vmatprep.mubr.f32.mxu0 0.0
    %729 = vmatmul.mubr.f32.gmra.mrb[0].mxu0 %v425
    %v730 = vpop.f32.mrb[0].mxu0
    %v731 = vadd.f32 0.0, %v730
    %v732 = vpop.f32.mrb[0].mxu0
    %733 = vdwg.mxu0
    %v734 = vadd.f32 %v580, %v726
    %v735 = vadd.f32 %v581, %v731
    %736 = vmatprep.subr.mxu0 %v183
    %737 = vmatpush1.msra.mxu0 %v182
    %738 = vmatprep.subr.mxu0 %v185
    %739 = vmatpush1.msra.mxu0 %v184
    %740 = vmatprep.subr.mxu0 %v187
    %741 = vmatpush1.msra.mxu0 %v186
    %742 = vmatprep.subr.mxu0 %v189
    %743 = vmatpush1.msra.mxu0 %v188
    %744 = vmatprep.subr.mxu0 %v191
    %745 = vmatpush1.msra.mxu0 %v190
    %746 = vmatprep.subr.mxu0 %v193
    %747 = vmatpush1.msra.mxu0 %v192
    %748 = vmatprep.subr.mxu0 %v195
    %749 = vmatpush1.msra.mxu0 %v194
    %750 = vmatprep.subr.mxu0 %v197
    %751 = vmatpush1.msra.mxu0 %v196
    %752 = vmatprep.subr.mxu0 %v199
    %753 = vmatpush1.msra.mxu0 %v198
    %754 = vmatprep.subr.mxu0 %v201
    %755 = vmatpush1.msra.mxu0 %v200
    %756 = vmatprep.subr.mxu0 %v203
    %757 = vmatpush1.msra.mxu0 %v202
    %758 = vmatprep.subr.mxu0 %v205
    %759 = vmatpush1.msra.mxu0 %v204
    %760 = vmatprep.subr.mxu0 %v207
    %761 = vmatpush1.msra.mxu0 %v206
    %762 = vmatprep.subr.mxu0 %v209
    %763 = vmatpush1.msra.mxu0 %v208
    %764 = vmatprep.subr.mxu0 %v211
    %765 = vmatpush1.msra.mxu0 %v210
    %766 = vmatprep.subr.mxu0 %v213
    %767 = vmatpush1.msra.mxu0 %v212
    %768 = vmatprep.subr.mxu0 0.0
    %769 = vmatpush1.msra.mxu0 0.0
    %770 = vmatprep.subr.mxu0 0.0
    %771 = vmatpush1.msra.mxu0 0.0
    %772 = vmatprep.subr.mxu0 0.0
    %773 = vmatpush1.msra.mxu0 0.0
    %774 = vmatprep.subr.mxu0 0.0
    %775 = vmatpush1.msra.mxu0 0.0
    %776 = vmatprep.subr.mxu0 0.0
    %777 = vmatpush1.msra.mxu0 0.0
    %778 = vmatprep.subr.mxu0 0.0
    %779 = vmatpush1.msra.mxu0 0.0
    %780 = vmatprep.subr.mxu0 0.0
    %781 = vmatpush1.msra.mxu0 0.0
    %782 = vmatprep.subr.mxu0 0.0
    %783 = vmatpush1.msra.mxu0 0.0
    %784 = vmatprep.subr.mxu0 0.0
    %785 = vmatpush1.msra.mxu0 0.0
    %786 = vmatprep.subr.mxu0 0.0
    %787 = vmatpush1.msra.mxu0 0.0
    %788 = vmatprep.subr.mxu0 0.0
    %789 = vmatpush1.msra.mxu0 0.0
    %790 = vmatprep.subr.mxu0 0.0
    %791 = vmatpush1.msra.mxu0 0.0
    %792 = vmatprep.subr.mxu0 0.0
    %793 = vmatpush1.msra.mxu0 0.0
    %794 = vmatprep.subr.mxu0 0.0
    %795 = vmatpush1.msra.mxu0 0.0
    %796 = vmatprep.subr.mxu0 0.0
    %797 = vmatpush1.msra.mxu0 0.0
    %798 = vmatprep.subr.mxu0 0.0
    %799 = vmatpush1.msra.mxu0 0.0
    %800 = vmatprep.mubr.f32.mxu0 0.0
    %801 = vmatmul.mubr.f32.gmra.mrb[0].mxu0 %v734
    %v802 = vpop.f32.mrb[0].mxu0
    %v803 = vadd.f32 0.0, %v802
    %v804 = vpop.f32.mrb[0].mxu0
    %v805 = vadd.f32 0.0, %v804
    %806 = vmatprep.mubr.f32.mxu0 0.0
    %807 = vmatmul.mubr.f32.gmra.mrb[0].mxu0 %v735
    %v808 = vpop.f32.mrb[0].mxu0
    %v809 = vadd.f32 0.0, %v808
    %v810 = vpop.f32.mrb[0].mxu0
    %v811 = vadd.f32 0.0, %v810
    %812 = vdwg.mxu0
    %813 = vmatprep.subr.mxu0 %v151
    %814 = vmatpush1.msra.mxu0 %v150
    %815 = vmatprep.subr.mxu0 %v153
    %816 = vmatpush1.msra.mxu0 %v152
    %817 = vmatprep.subr.mxu0 %v155
    %818 = vmatpush1.msra.mxu0 %v154
    %819 = vmatprep.subr.mxu0 %v157
    %820 = vmatpush1.msra.mxu0 %v156
    %821 = vmatprep.subr.mxu0 %v159
    %822 = vmatpush1.msra.mxu0 %v158
    %823 = vmatprep.subr.mxu0 %v161
    %824 = vmatpush1.msra.mxu0 %v160
    %825 = vmatprep.subr.mxu0 %v163
    %826 = vmatpush1.msra.mxu0 %v162
    %827 = vmatprep.subr.mxu0 %v165
    %828 = vmatpush1.msra.mxu0 %v164
    %829 = vmatprep.subr.mxu0 %v167
    %830 = vmatpush1.msra.mxu0 %v166
    %831 = vmatprep.subr.mxu0 %v169
    %832 = vmatpush1.msra.mxu0 %v168
    %833 = vmatprep.subr.mxu0 %v171
    %834 = vmatpush1.msra.mxu0 %v170
    %835 = vmatprep.subr.mxu0 %v173
    %836 = vmatpush1.msra.mxu0 %v172
    %837 = vmatprep.subr.mxu0 %v175
    %838 = vmatpush1.msra.mxu0 %v174
    %839 = vmatprep.subr.mxu0 %v177
    %840 = vmatpush1.msra.mxu0 %v176
    %841 = vmatprep.subr.mxu0 %v179
    %842 = vmatpush1.msra.mxu0 %v178
    %843 = vmatprep.subr.mxu0 %v181
    %844 = vmatpush1.msra.mxu0 %v180
    %845 = vmatprep.subr.mxu0 0.0
    %846 = vmatpush1.msra.mxu0 0.0
    %847 = vmatprep.subr.mxu0 0.0
    %848 = vmatpush1.msra.mxu0 0.0
    %849 = vmatprep.subr.mxu0 0.0
    %850 = vmatpush1.msra.mxu0 0.0
    %851 = vmatprep.subr.mxu0 0.0
    %852 = vmatpush1.msra.mxu0 0.0
    %853 = vmatprep.subr.mxu0 0.0
    %854 = vmatpush1.msra.mxu0 0.0
    %855 = vmatprep.subr.mxu0 0.0
    %856 = vmatpush1.msra.mxu0 0.0
    %857 = vmatprep.subr.mxu0 0.0
    %858 = vmatpush1.msra.mxu0 0.0
    %859 = vmatprep.subr.mxu0 0.0
    %860 = vmatpush1.msra.mxu0 0.0
    %861 = vmatprep.subr.mxu0 0.0
    %862 = vmatpush1.msra.mxu0 0.0
    %863 = vmatprep.subr.mxu0 0.0
    %864 = vmatpush1.msra.mxu0 0.0
    %865 = vmatprep.subr.mxu0 0.0
    %866 = vmatpush1.msra.mxu0 0.0
    %867 = vmatprep.subr.mxu0 0.0
    %868 = vmatpush1.msra.mxu0 0.0
    %869 = vmatprep.subr.mxu0 0.0
    %870 = vmatpush1.msra.mxu0 0.0
    %871 = vmatprep.subr.mxu0 0.0
    %872 = vmatpush1.msra.mxu0 0.0
    %873 = vmatprep.subr.mxu0 0.0
    %874 = vmatpush1.msra.mxu0 0.0
    %875 = vmatprep.subr.mxu0 0.0
    %876 = vmatpush1.msra.mxu0 0.0
    %877 = vmatprep.mubr.f32.mxu0 0.0
    %878 = vmatmul.mubr.f32.gmra.mrb[0].mxu0 %v657
    %v879 = vpop.f32.mrb[0].mxu0
    %v880 = vadd.f32 %v803, %v879
    %v881 = vpop.f32.mrb[0].mxu0
    %v882 = vadd.f32 %v805, %v881
    %883 = vmatprep.mubr.f32.mxu0 0.0
    %884 = vmatmul.mubr.f32.gmra.mrb[0].mxu0 %v658
    %v885 = vpop.f32.mrb[0].mxu0
    %v886 = vadd.f32 %v809, %v885
    %v887 = vpop.f32.mrb[0].mxu0
    %v888 = vadd.f32 %v811, %v887
    %889 = vdwg.mxu0
    %890 = vmatprep.subr.mxu0 %v215
    %891 = vmatpush1.msra.mxu0 %v214
    %892 = vmatprep.subr.mxu0 %v217
    %893 = vmatpush1.msra.mxu0 %v216
    %894 = vmatprep.subr.mxu0 %v219
    %895 = vmatpush1.msra.mxu0 %v218
    %896 = vmatprep.subr.mxu0 %v221
    %897 = vmatpush1.msra.mxu0 %v220
    %898 = vmatprep.subr.mxu0 %v223
    %899 = vmatpush1.msra.mxu0 %v222
    %900 = vmatprep.subr.mxu0 %v225
    %901 = vmatpush1.msra.mxu0 %v224
    %902 = vmatprep.subr.mxu0 %v227
    %903 = vmatpush1.msra.mxu0 %v226
    %904 = vmatprep.subr.mxu0 %v229
    %905 = vmatpush1.msra.mxu0 %v228
    %906 = vmatprep.subr.mxu0 %v231
    %907 = vmatpush1.msra.mxu0 %v230
    %908 = vmatprep.subr.mxu0 %v233
    %909 = vmatpush1.msra.mxu0 %v232
    %910 = vmatprep.subr.mxu0 %v235
    %911 = vmatpush1.msra.mxu0 %v234
    %912 = vmatprep.subr.mxu0 %v237
    %913 = vmatpush1.msra.mxu0 %v236
    %914 = vmatprep.subr.mxu0 %v239
    %915 = vmatpush1.msra.mxu0 %v238
    %916 = vmatprep.subr.mxu0 %v241
    %917 = vmatpush1.msra.mxu0 %v240
    %918 = vmatprep.subr.mxu0 %v243
    %919 = vmatpush1.msra.mxu0 %v242
    %920 = vmatprep.subr.mxu0 %v245
    %921 = vmatpush1.msra.mxu0 %v244
    %922 = vmatprep.subr.mxu0 0.0
    %923 = vmatpush1.msra.mxu0 0.0
    %924 = vmatprep.subr.mxu0 0.0
    %925 = vmatpush1.msra.mxu0 0.0
    %926 = vmatprep.subr.mxu0 0.0
    %927 = vmatpush1.msra.mxu0 0.0
    %928 = vmatprep.subr.mxu0 0.0
    %929 = vmatpush1.msra.mxu0 0.0
    %930 = vmatprep.subr.mxu0 0.0
    %931 = vmatpush1.msra.mxu0 0.0
    %932 = vmatprep.subr.mxu0 0.0
    %933 = vmatpush1.msra.mxu0 0.0
    %934 = vmatprep.subr.mxu0 0.0
    %935 = vmatpush1.msra.mxu0 0.0
    %936 = vmatprep.subr.mxu0 0.0
    %937 = vmatpush1.msra.mxu0 0.0
    %938 = vmatprep.subr.mxu0 0.0
    %939 = vmatpush1.msra.mxu0 0.0
    %940 = vmatprep.subr.mxu0 0.0
    %941 = vmatpush1.msra.mxu0 0.0
    %942 = vmatprep.subr.mxu0 0.0
    %943 = vmatpush1.msra.mxu0 0.0
    %944 = vmatprep.subr.mxu0 0.0
    %945 = vmatpush1.msra.mxu0 0.0
    %946 = vmatprep.subr.mxu0 0.0
    %947 = vmatpush1.msra.mxu0 0.0
    %948 = vmatprep.subr.mxu0 0.0
    %949 = vmatpush1.msra.mxu0 0.0
    %950 = vmatprep.subr.mxu0 0.0
    %951 = vmatpush1.msra.mxu0 0.0
    %952 = vmatprep.subr.mxu0 0.0
    %953 = vmatpush1.msra.mxu0 0.0
    %954 = vmatprep.mubr.f32.mxu0 0.0
    %955 = vmatmul.mubr.f32.gmra.mrb[0].mxu0 %v296
    %v956 = vpop.f32.mrb[0].mxu0
    %v957 = vadd.f32 0.0, %v956
    %v958 = vpop.f32.mrb[0].mxu0
    %v959 = vadd.f32 0.0, %v958
    %960 = vmatprep.mubr.f32.mxu0 0.0
    %961 = vmatmul.mubr.f32.gmra.mrb[0].mxu0 %v297
    %v962 = vpop.f32.mrb[0].mxu0
    %v963 = vadd.f32 0.0, %v962
    %v964 = vpop.f32.mrb[0].mxu0
    %v965 = vadd.f32 0.0, %v964
    %966 = vdwg.mxu0
    %v967 = vadd.f32 %v880, %v957
    %v968 = vadd.f32 %v882, %v959
    %v969 = vadd.f32 %v886, %v963
    %v970 = vadd.f32 %v888, %v965
    %v972 = vlaneseq
    %v973 = vshrl.u32 %v972, 7
    %v974 = vsub.s32 0, %v973
    %v975 = vrot.slane %v246, %v974
    %v976 = vlaneseq
    %v977 = vshrl.u32 %v976, 7
    %v978 = vsub.s32 1, %v977
    %v979 = vrot.slane %v246, %v978
    %v982 = vadd.f32 %v967, %v975
    %v983 = vadd.f32 %v968, %v979
    %v984 = vadd.f32 %v969, %v975
    %v985 = vadd.f32 %v970, %v979
    %v986 = vxor.u32 %v982, 2147483648
    %v987 = vxor.u32 %v983, 2147483648
    %v988 = vxor.u32 %v984, 2147483648
    %v989 = vxor.u32 %v985, 2147483648
    %v990 = vmul.f32 %v986, 1.442695
    %v991 = vpow.pop %v990
    %v992 = vmul.f32 %v987, 1.442695
    %v993 = vpow.pop %v992
    %v994 = vmul.f32 %v988, 1.442695
    %v995 = vpow.pop %v994
    %v996 = vmul.f32 %v989, 1.442695
    %v997 = vpow.pop %v996
    %v998 = vadd.f32 %v991, 1.0
    %v999 = vadd.f32 %v993, 1.0
    %v1000 = vadd.f32 %v995, 1.0
    %v1001 = vadd.f32 %v997, 1.0
    %v1002 = vrcp.pop %v998
    %v1003 = vmul.f32 1.0, %v1002
    %v1004 = vrcp.pop %v999
    %v1005 = vmul.f32 1.0, %v1004
    %v1006 = vrcp.pop %v1000
    %v1007 = vmul.f32 1.0, %v1006
    %v1008 = vrcp.pop %v1001
    %v1009 = vmul.f32 1.0, %v1008
    %1010 = vmatprep.subr.mxu0 0.0
    %1011 = vmatpush1.msra.mxu0 %v263
    %1012 = vmatprep.subr.mxu0 0.0
    %1013 = vmatpush1.msra.mxu0 %v264
    %1014 = vmatprep.subr.mxu0 0.0
    %1015 = vmatpush1.msra.mxu0 %v265
    %1016 = vmatprep.subr.mxu0 0.0
    %1017 = vmatpush1.msra.mxu0 %v266
    %1018 = vmatprep.subr.mxu0 0.0
    %1019 = vmatpush1.msra.mxu0 %v267
    %1020 = vmatprep.subr.mxu0 0.0
    %1021 = vmatpush1.msra.mxu0 %v268
    %1022 = vmatprep.subr.mxu0 0.0
    %1023 = vmatpush1.msra.mxu0 %v269
    %1024 = vmatprep.subr.mxu0 0.0
    %1025 = vmatpush1.msra.mxu0 %v270
    %1026 = vmatprep.subr.mxu0 0.0
    %1027 = vmatpush1.msra.mxu0 %v271
    %1028 = vmatprep.subr.mxu0 0.0
    %1029 = vmatpush1.msra.mxu0 %v272
    %1030 = vmatprep.subr.mxu0 0.0
    %1031 = vmatpush1.msra.mxu0 %v273
    %1032 = vmatprep.subr.mxu0 0.0
    %1033 = vmatpush1.msra.mxu0 %v274
    %1034 = vmatprep.subr.mxu0 0.0
    %1035 = vmatpush1.msra.mxu0 %v275
    %1036 = vmatprep.subr.mxu0 0.0
    %1037 = vmatpush1.msra.mxu0 %v276
    %1038 = vmatprep.subr.mxu0 0.0
    %1039 = vmatpush1.msra.mxu0 %v277
    %1040 = vmatprep.subr.mxu0 0.0
    %1041 = vmatpush1.msra.mxu0 %v278
    %1042 = vmatprep.subr.mxu0 0.0
    %1043 = vmatpush1.msra.mxu0 0.0
    %1044 = vmatprep.subr.mxu0 0.0
    %1045 = vmatpush1.msra.mxu0 0.0
    %1046 = vmatprep.subr.mxu0 0.0
    %1047 = vmatpush1.msra.mxu0 0.0
    %1048 = vmatprep.subr.mxu0 0.0
    %1049 = vmatpush1.msra.mxu0 0.0
    %1050 = vmatprep.subr.mxu0 0.0
    %1051 = vmatpush1.msra.mxu0 0.0
    %1052 = vmatprep.subr.mxu0 0.0
    %1053 = vmatpush1.msra.mxu0 0.0
    %1054 = vmatprep.subr.mxu0 0.0
    %1055 = vmatpush1.msra.mxu0 0.0
    %1056 = vmatprep.subr.mxu0 0.0
    %1057 = vmatpush1.msra.mxu0 0.0
    %1058 = vmatprep.subr.mxu0 0.0
    %1059 = vmatpush1.msra.mxu0 0.0
    %1060 = vmatprep.subr.mxu0 0.0
    %1061 = vmatpush1.msra.mxu0 0.0
    %1062 = vmatprep.subr.mxu0 0.0
    %1063 = vmatpush1.msra.mxu0 0.0
    %1064 = vmatprep.subr.mxu0 0.0
    %1065 = vmatpush1.msra.mxu0 0.0
    %1066 = vmatprep.subr.mxu0 0.0
    %1067 = vmatpush1.msra.mxu0 0.0
    %1068 = vmatprep.subr.mxu0 0.0
    %1069 = vmatpush1.msra.mxu0 0.0
    %1070 = vmatprep.subr.mxu0 0.0
    %1071 = vmatpush1.msra.mxu0 0.0
    %1072 = vmatprep.subr.mxu0 0.0
    %1073 = vmatpush1.msra.mxu0 0.0
    %1074 = vmatprep.mubr.f32.mxu0 0.0
    %1075 = vmatmul.mubr.f32.gmra.mrb[0].mxu0 %v734
    %v1076 = vpop.f32.mrb[0].mxu0
    %v1077 = vadd.f32 0.0, %v1076
    %v1078 = vpop.f32.mrb[0].mxu0
    %1079 = vmatprep.mubr.f32.mxu0 0.0
    %1080 = vmatmul.mubr.f32.gmra.mrb[0].mxu0 %v735
    %v1081 = vpop.f32.mrb[0].mxu0
    %v1082 = vadd.f32 0.0, %v1081
    %v1083 = vpop.f32.mrb[0].mxu0
    %1084 = vdwg.mxu0
    %1085 = vmatprep.subr.mxu0 0.0
    %1086 = vmatpush1.msra.mxu0 %v247
    %1087 = vmatprep.subr.mxu0 0.0
    %1088 = vmatpush1.msra.mxu0 %v248
    %1089 = vmatprep.subr.mxu0 0.0
    %1090 = vmatpush1.msra.mxu0 %v249
    %1091 = vmatprep.subr.mxu0 0.0
    %1092 = vmatpush1.msra.mxu0 %v250
    %1093 = vmatprep.subr.mxu0 0.0
    %1094 = vmatpush1.msra.mxu0 %v251
    %1095 = vmatprep.subr.mxu0 0.0
    %1096 = vmatpush1.msra.mxu0 %v252
    %1097 = vmatprep.subr.mxu0 0.0
    %1098 = vmatpush1.msra.mxu0 %v253
    %1099 = vmatprep.subr.mxu0 0.0
    %1100 = vmatpush1.msra.mxu0 %v254
    %1101 = vmatprep.subr.mxu0 0.0
    %1102 = vmatpush1.msra.mxu0 %v255
    %1103 = vmatprep.subr.mxu0 0.0
    %1104 = vmatpush1.msra.mxu0 %v256
    %1105 = vmatprep.subr.mxu0 0.0
    %1106 = vmatpush1.msra.mxu0 %v257
    %1107 = vmatprep.subr.mxu0 0.0
    %1108 = vmatpush1.msra.mxu0 %v258
    %1109 = vmatprep.subr.mxu0 0.0
    %1110 = vmatpush1.msra.mxu0 %v259
    %1111 = vmatprep.subr.mxu0 0.0
    %1112 = vmatpush1.msra.mxu0 %v260
    %1113 = vmatprep.subr.mxu0 0.0
    %1114 = vmatpush1.msra.mxu0 %v261
    %1115 = vmatprep.subr.mxu0 0.0
    %1116 = vmatpush1.msra.mxu0 %v262
    %1117 = vmatprep.subr.mxu0 0.0
    %1118 = vmatpush1.msra.mxu0 0.0
    %1119 = vmatprep.subr.mxu0 0.0
    %1120 = vmatpush1.msra.mxu0 0.0
    %1121 = vmatprep.subr.mxu0 0.0
    %1122 = vmatpush1.msra.mxu0 0.0
    %1123 = vmatprep.subr.mxu0 0.0
    %1124 = vmatpush1.msra.mxu0 0.0
    %1125 = vmatprep.subr.mxu0 0.0
    %1126 = vmatpush1.msra.mxu0 0.0
    %1127 = vmatprep.subr.mxu0 0.0
    %1128 = vmatpush1.msra.mxu0 0.0
    %1129 = vmatprep.subr.mxu0 0.0
    %1130 = vmatpush1.msra.mxu0 0.0
    %1131 = vmatprep.subr.mxu0 0.0
    %1132 = vmatpush1.msra.mxu0 0.0
    %1133 = vmatprep.subr.mxu0 0.0
    %1134 = vmatpush1.msra.mxu0 0.0
    %1135 = vmatprep.subr.mxu0 0.0
    %1136 = vmatpush1.msra.mxu0 0.0
    %1137 = vmatprep.subr.mxu0 0.0
    %1138 = vmatpush1.msra.mxu0 0.0
    %1139 = vmatprep.subr.mxu0 0.0
    %1140 = vmatpush1.msra.mxu0 0.0
    %1141 = vmatprep.subr.mxu0 0.0
    %1142 = vmatpush1.msra.mxu0 0.0
    %1143 = vmatprep.subr.mxu0 0.0
    %1144 = vmatpush1.msra.mxu0 0.0
    %1145 = vmatprep.subr.mxu0 0.0
    %1146 = vmatpush1.msra.mxu0 0.0
    %1147 = vmatprep.subr.mxu0 0.0
    %1148 = vmatpush1.msra.mxu0 0.0
    %1149 = vmatprep.mubr.f32.mxu0 0.0
    %1150 = vmatmul.mubr.f32.gmra.mrb[0].mxu0 %v657
    %v1151 = vpop.f32.mrb[0].mxu0
    %v1152 = vadd.f32 %v1077, %v1151
    %v1153 = vpop.f32.mrb[0].mxu0
    %1154 = vmatprep.mubr.f32.mxu0 0.0
    %1155 = vmatmul.mubr.f32.gmra.mrb[0].mxu0 %v658
    %v1156 = vpop.f32.mrb[0].mxu0
    %v1157 = vadd.f32 %v1082, %v1156
    %v1158 = vpop.f32.mrb[0].mxu0
    %1159 = vdwg.mxu0
    %v1160 = vmul.f32 %v1003, %v296
    %v1161 = vmul.f32 %v1007, %v297
    %1162 = vmatprep.subr.mxu0 0.0
    %1163 = vmatpush1.msra.mxu0 %v279
    %1164 = vmatprep.subr.mxu0 0.0
    %1165 = vmatpush1.msra.mxu0 %v280
    %1166 = vmatprep.subr.mxu0 0.0
    %1167 = vmatpush1.msra.mxu0 %v281
    %1168 = vmatprep.subr.mxu0 0.0
    %1169 = vmatpush1.msra.mxu0 %v282
    %1170 = vmatprep.subr.mxu0 0.0
    %1171 = vmatpush1.msra.mxu0 %v283
    %1172 = vmatprep.subr.mxu0 0.0
    %1173 = vmatpush1.msra.mxu0 %v284
    %1174 = vmatprep.subr.mxu0 0.0
    %1175 = vmatpush1.msra.mxu0 %v285
    %1176 = vmatprep.subr.mxu0 0.0
    %1177 = vmatpush1.msra.mxu0 %v286
    %1178 = vmatprep.subr.mxu0 0.0
    %1179 = vmatpush1.msra.mxu0 %v287
    %1180 = vmatprep.subr.mxu0 0.0
    %1181 = vmatpush1.msra.mxu0 %v288
    %1182 = vmatprep.subr.mxu0 0.0
    %1183 = vmatpush1.msra.mxu0 %v289
    %1184 = vmatprep.subr.mxu0 0.0
    %1185 = vmatpush1.msra.mxu0 %v290
    %1186 = vmatprep.subr.mxu0 0.0
    %1187 = vmatpush1.msra.mxu0 %v291
    %1188 = vmatprep.subr.mxu0 0.0
    %1189 = vmatpush1.msra.mxu0 %v292
    %1190 = vmatprep.subr.mxu0 0.0
    %1191 = vmatpush1.msra.mxu0 %v293
    %1192 = vmatprep.subr.mxu0 0.0
    %1193 = vmatpush1.msra.mxu0 %v294
    %1194 = vmatprep.subr.mxu0 0.0
    %1195 = vmatpush1.msra.mxu0 0.0
    %1196 = vmatprep.subr.mxu0 0.0
    %1197 = vmatpush1.msra.mxu0 0.0
    %1198 = vmatprep.subr.mxu0 0.0
    %1199 = vmatpush1.msra.mxu0 0.0
    %1200 = vmatprep.subr.mxu0 0.0
    %1201 = vmatpush1.msra.mxu0 0.0
    %1202 = vmatprep.subr.mxu0 0.0
    %1203 = vmatpush1.msra.mxu0 0.0
    %1204 = vmatprep.subr.mxu0 0.0
    %1205 = vmatpush1.msra.mxu0 0.0
    %1206 = vmatprep.subr.mxu0 0.0
    %1207 = vmatpush1.msra.mxu0 0.0
    %1208 = vmatprep.subr.mxu0 0.0
    %1209 = vmatpush1.msra.mxu0 0.0
    %1210 = vmatprep.subr.mxu0 0.0
    %1211 = vmatpush1.msra.mxu0 0.0
    %1212 = vmatprep.subr.mxu0 0.0
    %1213 = vmatpush1.msra.mxu0 0.0
    %1214 = vmatprep.subr.mxu0 0.0
    %1215 = vmatpush1.msra.mxu0 0.0
    %1216 = vmatprep.subr.mxu0 0.0
    %1217 = vmatpush1.msra.mxu0 0.0
    %1218 = vmatprep.subr.mxu0 0.0
    %1219 = vmatpush1.msra.mxu0 0.0
    %1220 = vmatprep.subr.mxu0 0.0
    %1221 = vmatpush1.msra.mxu0 0.0
    %1222 = vmatprep.subr.mxu0 0.0
    %1223 = vmatpush1.msra.mxu0 0.0
    %1224 = vmatprep.subr.mxu0 0.0
    %1225 = vmatpush1.msra.mxu0 0.0
    %1226 = vmatprep.mubr.f32.mxu0 0.0
    %1227 = vmatmul.mubr.f32.gmra.mrb[0].mxu0 %v1160
    %v1228 = vpop.f32.mrb[0].mxu0
    %v1229 = vadd.f32 0.0, %v1228
    %v1230 = vpop.f32.mrb[0].mxu0
    %1231 = vmatprep.mubr.f32.mxu0 0.0
    %1232 = vmatmul.mubr.f32.gmra.mrb[0].mxu0 %v1161
    %v1233 = vpop.f32.mrb[0].mxu0
    %v1234 = vadd.f32 0.0, %v1233
    %v1235 = vpop.f32.mrb[0].mxu0
    %1236 = vdwg.mxu0
    %v1237 = vadd.f32 %v1152, %v1229
    %v1238 = vadd.f32 %v1157, %v1234
    %v1240 = vlaneseq
    %v1241 = vshrl.u32 %v1240, 7
    %v1242 = vsub.s32 0, %v1241
    %v1243 = vrot.slane %v295, %v1242
    %v1245 = vadd.f32 %v1237, %v1243
    %v1246 = vadd.f32 %v1238, %v1243
    %v1247 = vtanh.pop %v1245
    %v1248 = vtanh.pop %v1246
    %v1249 = vsub.f32 1.0, %v1005
    %v1250 = vsub.f32 1.0, %v1009
    %v1251 = vmul.f32 %v1249, %v296
    %v1252 = vmul.f32 %v1250, %v297
    %v1253 = vmul.f32 %v1005, %v1247
    %v1254 = vmul.f32 %v1009, %v1248
    %v1255 = vadd.f32 %v1251, %v1253
    %v1256 = vadd.f32 %v1252, %v1254
    %1257 = vmatprep.subr.mxu0 0.0
    %1258 = vmatpush1.msra.mxu0 %v1255
    %1259 = vmatprep.subr.mxu0 0.0
    %1260 = vmatpush1.msra.mxu0 %v1256
    %1261 = vmatprep.subr.mxu0 0.0
    %1262 = vmatpush1.msra.mxu0 0.0
    %1263 = vmatprep.subr.mxu0 0.0
    %1264 = vmatpush1.msra.mxu0 0.0
    %1265 = vmatprep.subr.mxu0 0.0
    %1266 = vmatpush1.msra.mxu0 0.0
    %1267 = vmatprep.subr.mxu0 0.0
    %1268 = vmatpush1.msra.mxu0 0.0
    %1269 = vmatprep.subr.mxu0 0.0
    %1270 = vmatpush1.msra.mxu0 0.0
    %1271 = vmatprep.subr.mxu0 0.0
    %1272 = vmatpush1.msra.mxu0 0.0
    %1273 = vmatprep.subr.mxu0 0.0
    %1274 = vmatpush1.msra.mxu0 0.0
    %1275 = vmatprep.subr.mxu0 0.0
    %1276 = vmatpush1.msra.mxu0 0.0
    %1277 = vmatprep.subr.mxu0 0.0
    %1278 = vmatpush1.msra.mxu0 0.0
    %1279 = vmatprep.subr.mxu0 0.0
    %1280 = vmatpush1.msra.mxu0 0.0
    %1281 = vmatprep.subr.mxu0 0.0
    %1282 = vmatpush1.msra.mxu0 0.0
    %1283 = vmatprep.subr.mxu0 0.0
    %1284 = vmatpush1.msra.mxu0 0.0
    %1285 = vmatprep.subr.mxu0 0.0
    %1286 = vmatpush1.msra.mxu0 0.0
    %1287 = vmatprep.subr.mxu0 0.0
    %1288 = vmatpush1.msra.mxu0 0.0
    %1289 = vmatprep.subr.mxu0 0.0
    %1290 = vmatpush1.msra.mxu0 0.0
    %1291 = vmatprep.subr.mxu0 0.0
    %1292 = vmatpush1.msra.mxu0 0.0
    %1293 = vmatprep.subr.mxu0 0.0
    %1294 = vmatpush1.msra.mxu0 0.0
    %1295 = vmatprep.subr.mxu0 0.0
    %1296 = vmatpush1.msra.mxu0 0.0
    %1297 = vmatprep.subr.mxu0 0.0
    %1298 = vmatpush1.msra.mxu0 0.0
    %1299 = vmatprep.subr.mxu0 0.0
    %1300 = vmatpush1.msra.mxu0 0.0
    %1301 = vmatprep.subr.mxu0 0.0
    %1302 = vmatpush1.msra.mxu0 0.0
    %1303 = vmatprep.subr.mxu0 0.0
    %1304 = vmatpush1.msra.mxu0 0.0
    %1305 = vmatprep.subr.mxu0 0.0
    %1306 = vmatpush1.msra.mxu0 0.0
    %1307 = vmatprep.subr.mxu0 0.0
    %1308 = vmatpush1.msra.mxu0 0.0
    %1309 = vmatprep.subr.mxu0 0.0
    %1310 = vmatpush1.msra.mxu0 0.0
    %1311 = vmatprep.subr.mxu0 0.0
    %1312 = vmatpush1.msra.mxu0 0.0
    %1313 = vmatprep.subr.mxu0 0.0
    %1314 = vmatpush1.msra.mxu0 0.0
    %1315 = vmatprep.subr.mxu0 0.0
    %1316 = vmatpush1.msra.mxu0 0.0
    %1317 = vmatprep.subr.mxu0 0.0
    %1318 = vmatpush1.msra.mxu0 0.0
    %1319 = vmatprep.subr.mxu0 0.0
    %1320 = vmatpush1.msra.mxu0 0.0
    %1321 = vmatprep.mubr.f32.mxu0 0.0
    %1322 = vmatmul.mubr.f32.gmra.mrb[0].mxu0 %v300
    %v1323 = vpop.f32.mrb[0].mxu0
    %v1324 = vadd.f32 0.0, %v1323
    %v1325 = vpop.f32.mrb[0].mxu0
    %1326 = vmatprep.mubr.f32.mxu0 0.0
    %1327 = vmatmul.mubr.f32.gmra.mrb[0].mxu0 %v303
    %v1328 = vpop.f32.mrb[0].mxu0
    %v1329 = vadd.f32 0.0, %v1328
    %v1330 = vpop.f32.mrb[0].mxu0
    %1331 = vmatprep.mubr.f32.mxu0 0.0
    %1332 = vmatmul.mubr.f32.gmra.mrb[0].mxu0 %v306
    %v1333 = vpop.f32.mrb[0].mxu0
    %v1334 = vadd.f32 0.0, %v1333
    %v1335 = vpop.f32.mrb[0].mxu0
    %1336 = vmatprep.mubr.f32.mxu0 0.0
    %1337 = vmatmul.mubr.f32.gmra.mrb[0].mxu0 %v309
    %v1338 = vpop.f32.mrb[0].mxu0
    %v1339 = vadd.f32 0.0, %v1338
    %v1340 = vpop.f32.mrb[0].mxu0
    %1341 = vmatprep.mubr.f32.mxu0 0.0
    %1342 = vmatmul.mubr.f32.gmra.mrb[0].mxu0 %v312
    %v1343 = vpop.f32.mrb[0].mxu0
    %v1344 = vadd.f32 0.0, %v1343
    %v1345 = vpop.f32.mrb[0].mxu0
    %1346 = vmatprep.mubr.f32.mxu0 0.0
    %1347 = vmatmul.mubr.f32.gmra.mrb[0].mxu0 %v315
    %v1348 = vpop.f32.mrb[0].mxu0
    %v1349 = vadd.f32 0.0, %v1348
    %v1350 = vpop.f32.mrb[0].mxu0
    %1351 = vmatprep.mubr.f32.mxu0 0.0
    %1352 = vmatmul.mubr.f32.gmra.mrb[0].mxu0 %v318
    %v1353 = vpop.f32.mrb[0].mxu0
    %v1354 = vadd.f32 0.0, %v1353
    %v1355 = vpop.f32.mrb[0].mxu0
    %1356 = vmatprep.mubr.f32.mxu0 0.0
    %1357 = vmatmul.mubr.f32.gmra.mrb[0].mxu0 %v321
    %v1358 = vpop.f32.mrb[0].mxu0
    %v1359 = vadd.f32 0.0, %v1358
    %v1360 = vpop.f32.mrb[0].mxu0
    %1361 = vdwg.mxu0
    %1362 = vmatprep.subr.mxu0 0.0
    %1363 = vmatpush1.msra.mxu0 %v82
    %1364 = vmatprep.subr.mxu0 0.0
    %1365 = vmatpush1.msra.mxu0 %v83
    %1366 = vmatprep.subr.mxu0 0.0
    %1367 = vmatpush1.msra.mxu0 %v84
    %1368 = vmatprep.subr.mxu0 0.0
    %1369 = vmatpush1.msra.mxu0 %v85
    %1370 = vmatprep.subr.mxu0 0.0
    %1371 = vmatpush1.msra.mxu0 %v86
    %1372 = vmatprep.subr.mxu0 0.0
    %1373 = vmatpush1.msra.mxu0 %v87
    %1374 = vmatprep.subr.mxu0 0.0
    %1375 = vmatpush1.msra.mxu0 %v88
    %1376 = vmatprep.subr.mxu0 0.0
    %1377 = vmatpush1.msra.mxu0 %v89
    %1378 = vmatprep.subr.mxu0 0.0
    %1379 = vmatpush1.msra.mxu0 %v90
    %1380 = vmatprep.subr.mxu0 0.0
    %1381 = vmatpush1.msra.mxu0 %v91
    %1382 = vmatprep.subr.mxu0 0.0
    %1383 = vmatpush1.msra.mxu0 %v92
    %1384 = vmatprep.subr.mxu0 0.0
    %1385 = vmatpush1.msra.mxu0 %v93
    %1386 = vmatprep.subr.mxu0 0.0
    %1387 = vmatpush1.msra.mxu0 %v94
    %1388 = vmatprep.subr.mxu0 0.0
    %1389 = vmatpush1.msra.mxu0 %v95
    %1390 = vmatprep.subr.mxu0 0.0
    %1391 = vmatpush1.msra.mxu0 %v96
    %1392 = vmatprep.subr.mxu0 0.0
    %1393 = vmatpush1.msra.mxu0 %v97
    %1394 = vmatprep.subr.mxu0 0.0
    %1395 = vmatpush1.msra.mxu0 0.0
    %1396 = vmatprep.subr.mxu0 0.0
    %1397 = vmatpush1.msra.mxu0 0.0
    %1398 = vmatprep.subr.mxu0 0.0
    %1399 = vmatpush1.msra.mxu0 0.0
    %1400 = vmatprep.subr.mxu0 0.0
    %1401 = vmatpush1.msra.mxu0 0.0
    %1402 = vmatprep.subr.mxu0 0.0
    %1403 = vmatpush1.msra.mxu0 0.0
    %1404 = vmatprep.subr.mxu0 0.0
    %1405 = vmatpush1.msra.mxu0 0.0
    %1406 = vmatprep.subr.mxu0 0.0
    %1407 = vmatpush1.msra.mxu0 0.0
    %1408 = vmatprep.subr.mxu0 0.0
    %1409 = vmatpush1.msra.mxu0 0.0
    %1410 = vmatprep.subr.mxu0 0.0
    %1411 = vmatpush1.msra.mxu0 0.0
    %1412 = vmatprep.subr.mxu0 0.0
    %1413 = vmatpush1.msra.mxu0 0.0
    %1414 = vmatprep.subr.mxu0 0.0
    %1415 = vmatpush1.msra.mxu0 0.0
    %1416 = vmatprep.subr.mxu0 0.0
    %1417 = vmatpush1.msra.mxu0 0.0
    %1418 = vmatprep.subr.mxu0 0.0
    %1419 = vmatpush1.msra.mxu0 0.0
    %1420 = vmatprep.subr.mxu0 0.0
    %1421 = vmatpush1.msra.mxu0 0.0
    %1422 = vmatprep.subr.mxu0 0.0
    %1423 = vmatpush1.msra.mxu0 0.0
    %1424 = vmatprep.subr.mxu0 0.0
    %1425 = vmatpush1.msra.mxu0 0.0
    %1426 = vmatprep.mubr.f32.mxu0 0.0
    %1427 = vmatmul.mubr.f32.gmra.mrb[0].mxu0 %v1324
    %v1428 = vpop.f32.mrb[0].mxu0
    %v1429 = vadd.f32 0.0, %v1428
    %v1430 = vpop.f32.mrb[0].mxu0
    %1431 = vmatprep.mubr.f32.mxu0 0.0
    %1432 = vmatmul.mubr.f32.gmra.mrb[0].mxu0 %v1329
    %v1433 = vpop.f32.mrb[0].mxu0
    %v1434 = vadd.f32 0.0, %v1433
    %v1435 = vpop.f32.mrb[0].mxu0
    %1436 = vdwg.mxu0
    %v1437 = vadd.f32 %v146, %v1429
    %v1438 = vadd.f32 %v147, %v1434
    %1439 = vmatprep.subr.mxu0 0.0
    %1440 = vmatpush1.msra.mxu0 %v114
    %1441 = vmatprep.subr.mxu0 0.0
    %1442 = vmatpush1.msra.mxu0 %v115
    %1443 = vmatprep.subr.mxu0 0.0
    %1444 = vmatpush1.msra.mxu0 %v116
    %1445 = vmatprep.subr.mxu0 0.0
    %1446 = vmatpush1.msra.mxu0 %v117
    %1447 = vmatprep.subr.mxu0 0.0
    %1448 = vmatpush1.msra.mxu0 %v118
    %1449 = vmatprep.subr.mxu0 0.0
    %1450 = vmatpush1.msra.mxu0 %v119
    %1451 = vmatprep.subr.mxu0 0.0
    %1452 = vmatpush1.msra.mxu0 %v120
    %1453 = vmatprep.subr.mxu0 0.0
    %1454 = vmatpush1.msra.mxu0 %v121
    %1455 = vmatprep.subr.mxu0 0.0
    %1456 = vmatpush1.msra.mxu0 %v122
    %1457 = vmatprep.subr.mxu0 0.0
    %1458 = vmatpush1.msra.mxu0 %v123
    %1459 = vmatprep.subr.mxu0 0.0
    %1460 = vmatpush1.msra.mxu0 %v124
    %1461 = vmatprep.subr.mxu0 0.0
    %1462 = vmatpush1.msra.mxu0 %v125
    %1463 = vmatprep.subr.mxu0 0.0
    %1464 = vmatpush1.msra.mxu0 %v126
    %1465 = vmatprep.subr.mxu0 0.0
    %1466 = vmatpush1.msra.mxu0 %v127
    %1467 = vmatprep.subr.mxu0 0.0
    %1468 = vmatpush1.msra.mxu0 %v128
    %1469 = vmatprep.subr.mxu0 0.0
    %1470 = vmatpush1.msra.mxu0 %v129
    %1471 = vmatprep.subr.mxu0 0.0
    %1472 = vmatpush1.msra.mxu0 0.0
    %1473 = vmatprep.subr.mxu0 0.0
    %1474 = vmatpush1.msra.mxu0 0.0
    %1475 = vmatprep.subr.mxu0 0.0
    %1476 = vmatpush1.msra.mxu0 0.0
    %1477 = vmatprep.subr.mxu0 0.0
    %1478 = vmatpush1.msra.mxu0 0.0
    %1479 = vmatprep.subr.mxu0 0.0
    %1480 = vmatpush1.msra.mxu0 0.0
    %1481 = vmatprep.subr.mxu0 0.0
    %1482 = vmatpush1.msra.mxu0 0.0
    %1483 = vmatprep.subr.mxu0 0.0
    %1484 = vmatpush1.msra.mxu0 0.0
    %1485 = vmatprep.subr.mxu0 0.0
    %1486 = vmatpush1.msra.mxu0 0.0
    %1487 = vmatprep.subr.mxu0 0.0
    %1488 = vmatpush1.msra.mxu0 0.0
    %1489 = vmatprep.subr.mxu0 0.0
    %1490 = vmatpush1.msra.mxu0 0.0
    %1491 = vmatprep.subr.mxu0 0.0
    %1492 = vmatpush1.msra.mxu0 0.0
    %1493 = vmatprep.subr.mxu0 0.0
    %1494 = vmatpush1.msra.mxu0 0.0
    %1495 = vmatprep.subr.mxu0 0.0
    %1496 = vmatpush1.msra.mxu0 0.0
    %1497 = vmatprep.subr.mxu0 0.0
    %1498 = vmatpush1.msra.mxu0 0.0
    %1499 = vmatprep.subr.mxu0 0.0
    %1500 = vmatpush1.msra.mxu0 0.0
    %1501 = vmatprep.subr.mxu0 0.0
    %1502 = vmatpush1.msra.mxu0 0.0
    %1503 = vmatprep.mubr.f32.mxu0 0.0
    %1504 = vmatmul.mubr.f32.gmra.mrb[0].mxu0 %v1344
    %v1505 = vpop.f32.mrb[0].mxu0
    %v1506 = vadd.f32 0.0, %v1505
    %v1507 = vpop.f32.mrb[0].mxu0
    %1508 = vmatprep.mubr.f32.mxu0 0.0
    %1509 = vmatmul.mubr.f32.gmra.mrb[0].mxu0 %v1349
    %v1510 = vpop.f32.mrb[0].mxu0
    %v1511 = vadd.f32 0.0, %v1510
    %v1512 = vpop.f32.mrb[0].mxu0
    %1513 = vdwg.mxu0
    %v1514 = vadd.f32 %v148, %v1506
    %v1515 = vadd.f32 %v149, %v1511
    %1516 = vmatprep.subr.mxu0 0.0
    %1517 = vmatpush1.msra.mxu0 %v98
    %1518 = vmatprep.subr.mxu0 0.0
    %1519 = vmatpush1.msra.mxu0 %v99
    %1520 = vmatprep.subr.mxu0 0.0
    %1521 = vmatpush1.msra.mxu0 %v100
    %1522 = vmatprep.subr.mxu0 0.0
    %1523 = vmatpush1.msra.mxu0 %v101
    %1524 = vmatprep.subr.mxu0 0.0
    %1525 = vmatpush1.msra.mxu0 %v102
    %1526 = vmatprep.subr.mxu0 0.0
    %1527 = vmatpush1.msra.mxu0 %v103
    %1528 = vmatprep.subr.mxu0 0.0
    %1529 = vmatpush1.msra.mxu0 %v104
    %1530 = vmatprep.subr.mxu0 0.0
    %1531 = vmatpush1.msra.mxu0 %v105
    %1532 = vmatprep.subr.mxu0 0.0
    %1533 = vmatpush1.msra.mxu0 %v106
    %1534 = vmatprep.subr.mxu0 0.0
    %1535 = vmatpush1.msra.mxu0 %v107
    %1536 = vmatprep.subr.mxu0 0.0
    %1537 = vmatpush1.msra.mxu0 %v108
    %1538 = vmatprep.subr.mxu0 0.0
    %1539 = vmatpush1.msra.mxu0 %v109
    %1540 = vmatprep.subr.mxu0 0.0
    %1541 = vmatpush1.msra.mxu0 %v110
    %1542 = vmatprep.subr.mxu0 0.0
    %1543 = vmatpush1.msra.mxu0 %v111
    %1544 = vmatprep.subr.mxu0 0.0
    %1545 = vmatpush1.msra.mxu0 %v112
    %1546 = vmatprep.subr.mxu0 0.0
    %1547 = vmatpush1.msra.mxu0 %v113
    %1548 = vmatprep.subr.mxu0 0.0
    %1549 = vmatpush1.msra.mxu0 0.0
    %1550 = vmatprep.subr.mxu0 0.0
    %1551 = vmatpush1.msra.mxu0 0.0
    %1552 = vmatprep.subr.mxu0 0.0
    %1553 = vmatpush1.msra.mxu0 0.0
    %1554 = vmatprep.subr.mxu0 0.0
    %1555 = vmatpush1.msra.mxu0 0.0
    %1556 = vmatprep.subr.mxu0 0.0
    %1557 = vmatpush1.msra.mxu0 0.0
    %1558 = vmatprep.subr.mxu0 0.0
    %1559 = vmatpush1.msra.mxu0 0.0
    %1560 = vmatprep.subr.mxu0 0.0
    %1561 = vmatpush1.msra.mxu0 0.0
    %1562 = vmatprep.subr.mxu0 0.0
    %1563 = vmatpush1.msra.mxu0 0.0
    %1564 = vmatprep.subr.mxu0 0.0
    %1565 = vmatpush1.msra.mxu0 0.0
    %1566 = vmatprep.subr.mxu0 0.0
    %1567 = vmatpush1.msra.mxu0 0.0
    %1568 = vmatprep.subr.mxu0 0.0
    %1569 = vmatpush1.msra.mxu0 0.0
    %1570 = vmatprep.subr.mxu0 0.0
    %1571 = vmatpush1.msra.mxu0 0.0
    %1572 = vmatprep.subr.mxu0 0.0
    %1573 = vmatpush1.msra.mxu0 0.0
    %1574 = vmatprep.subr.mxu0 0.0
    %1575 = vmatpush1.msra.mxu0 0.0
    %1576 = vmatprep.subr.mxu0 0.0
    %1577 = vmatpush1.msra.mxu0 0.0
    %1578 = vmatprep.subr.mxu0 0.0
    %1579 = vmatpush1.msra.mxu0 0.0
    %1580 = vmatprep.mubr.f32.mxu0 0.0
    %1581 = vmatmul.mubr.f32.gmra.mrb[0].mxu0 %v1334
    %v1582 = vpop.f32.mrb[0].mxu0
    %v1583 = vadd.f32 0.0, %v1582
    %v1584 = vpop.f32.mrb[0].mxu0
    %1585 = vmatprep.mubr.f32.mxu0 0.0
    %1586 = vmatmul.mubr.f32.gmra.mrb[0].mxu0 %v1339
    %v1587 = vpop.f32.mrb[0].mxu0
    %v1588 = vadd.f32 0.0, %v1587
    %v1589 = vpop.f32.mrb[0].mxu0
    %1590 = vdwg.mxu0
    %v1591 = vadd.f32 %v1437, %v1583
    %v1592 = vadd.f32 %v1438, %v1588
    %1593 = vmatprep.subr.mxu0 0.0
    %1594 = vmatpush1.msra.mxu0 %v130
    %1595 = vmatprep.subr.mxu0 0.0
    %1596 = vmatpush1.msra.mxu0 %v131
    %1597 = vmatprep.subr.mxu0 0.0
    %1598 = vmatpush1.msra.mxu0 %v132
    %1599 = vmatprep.subr.mxu0 0.0
    %1600 = vmatpush1.msra.mxu0 %v133
    %1601 = vmatprep.subr.mxu0 0.0
    %1602 = vmatpush1.msra.mxu0 %v134
    %1603 = vmatprep.subr.mxu0 0.0
    %1604 = vmatpush1.msra.mxu0 %v135
    %1605 = vmatprep.subr.mxu0 0.0
    %1606 = vmatpush1.msra.mxu0 %v136
    %1607 = vmatprep.subr.mxu0 0.0
    %1608 = vmatpush1.msra.mxu0 %v137
    %1609 = vmatprep.subr.mxu0 0.0
    %1610 = vmatpush1.msra.mxu0 %v138
    %1611 = vmatprep.subr.mxu0 0.0
    %1612 = vmatpush1.msra.mxu0 %v139
    %1613 = vmatprep.subr.mxu0 0.0
    %1614 = vmatpush1.msra.mxu0 %v140
    %1615 = vmatprep.subr.mxu0 0.0
    %1616 = vmatpush1.msra.mxu0 %v141
    %1617 = vmatprep.subr.mxu0 0.0
    %1618 = vmatpush1.msra.mxu0 %v142
    %1619 = vmatprep.subr.mxu0 0.0
    %1620 = vmatpush1.msra.mxu0 %v143
    %1621 = vmatprep.subr.mxu0 0.0
    %1622 = vmatpush1.msra.mxu0 %v144
    %1623 = vmatprep.subr.mxu0 0.0
    %1624 = vmatpush1.msra.mxu0 %v145
    %1625 = vmatprep.subr.mxu0 0.0
    %1626 = vmatpush1.msra.mxu0 0.0
    %1627 = vmatprep.subr.mxu0 0.0
    %1628 = vmatpush1.msra.mxu0 0.0
    %1629 = vmatprep.subr.mxu0 0.0
    %1630 = vmatpush1.msra.mxu0 0.0
    %1631 = vmatprep.subr.mxu0 0.0
    %1632 = vmatpush1.msra.mxu0 0.0
    %1633 = vmatprep.subr.mxu0 0.0
    %1634 = vmatpush1.msra.mxu0 0.0
    %1635 = vmatprep.subr.mxu0 0.0
    %1636 = vmatpush1.msra.mxu0 0.0
    %1637 = vmatprep.subr.mxu0 0.0
    %1638 = vmatpush1.msra.mxu0 0.0
    %1639 = vmatprep.subr.mxu0 0.0
    %1640 = vmatpush1.msra.mxu0 0.0
    %1641 = vmatprep.subr.mxu0 0.0
    %1642 = vmatpush1.msra.mxu0 0.0
    %1643 = vmatprep.subr.mxu0 0.0
    %1644 = vmatpush1.msra.mxu0 0.0
    %1645 = vmatprep.subr.mxu0 0.0
    %1646 = vmatpush1.msra.mxu0 0.0
    %1647 = vmatprep.subr.mxu0 0.0
    %1648 = vmatpush1.msra.mxu0 0.0
    %1649 = vmatprep.subr.mxu0 0.0
    %1650 = vmatpush1.msra.mxu0 0.0
    %1651 = vmatprep.subr.mxu0 0.0
    %1652 = vmatpush1.msra.mxu0 0.0
    %1653 = vmatprep.subr.mxu0 0.0
    %1654 = vmatpush1.msra.mxu0 0.0
    %1655 = vmatprep.subr.mxu0 0.0
    %1656 = vmatpush1.msra.mxu0 0.0
    %1657 = vmatprep.mubr.f32.mxu0 0.0
    %1658 = vmatmul.mubr.f32.gmra.mrb[0].mxu0 %v1354
    %v1659 = vpop.f32.mrb[0].mxu0
    %v1660 = vadd.f32 0.0, %v1659
    %v1661 = vpop.f32.mrb[0].mxu0
    %1662 = vmatprep.mubr.f32.mxu0 0.0
    %1663 = vmatmul.mubr.f32.gmra.mrb[0].mxu0 %v1359
    %v1664 = vpop.f32.mrb[0].mxu0
    %v1665 = vadd.f32 0.0, %v1664
    %v1666 = vpop.f32.mrb[0].mxu0
    %1667 = vdwg.mxu0
    %v1668 = vadd.f32 %v1514, %v1660
    %v1669 = vadd.f32 %v1515, %v1665
    %1670 = vmatprep.subr.mxu0 %v183
    %1671 = vmatpush1.msra.mxu0 %v182
    %1672 = vmatprep.subr.mxu0 %v185
    %1673 = vmatpush1.msra.mxu0 %v184
    %1674 = vmatprep.subr.mxu0 %v187
    %1675 = vmatpush1.msra.mxu0 %v186
    %1676 = vmatprep.subr.mxu0 %v189
    %1677 = vmatpush1.msra.mxu0 %v188
    %1678 = vmatprep.subr.mxu0 %v191
    %1679 = vmatpush1.msra.mxu0 %v190
    %1680 = vmatprep.subr.mxu0 %v193
    %1681 = vmatpush1.msra.mxu0 %v192
    %1682 = vmatprep.subr.mxu0 %v195
    %1683 = vmatpush1.msra.mxu0 %v194
    %1684 = vmatprep.subr.mxu0 %v197
    %1685 = vmatpush1.msra.mxu0 %v196
    %1686 = vmatprep.subr.mxu0 %v199
    %1687 = vmatpush1.msra.mxu0 %v198
    %1688 = vmatprep.subr.mxu0 %v201
    %1689 = vmatpush1.msra.mxu0 %v200
    %1690 = vmatprep.subr.mxu0 %v203
    %1691 = vmatpush1.msra.mxu0 %v202
    %1692 = vmatprep.subr.mxu0 %v205
    %1693 = vmatpush1.msra.mxu0 %v204
    %1694 = vmatprep.subr.mxu0 %v207
    %1695 = vmatpush1.msra.mxu0 %v206
    %1696 = vmatprep.subr.mxu0 %v209
    %1697 = vmatpush1.msra.mxu0 %v208
    %1698 = vmatprep.subr.mxu0 %v211
    %1699 = vmatpush1.msra.mxu0 %v210
    %1700 = vmatprep.subr.mxu0 %v213
    %1701 = vmatpush1.msra.mxu0 %v212
    %1702 = vmatprep.subr.mxu0 0.0
    %1703 = vmatpush1.msra.mxu0 0.0
    %1704 = vmatprep.subr.mxu0 0.0
    %1705 = vmatpush1.msra.mxu0 0.0
    %1706 = vmatprep.subr.mxu0 0.0
    %1707 = vmatpush1.msra.mxu0 0.0
    %1708 = vmatprep.subr.mxu0 0.0
    %1709 = vmatpush1.msra.mxu0 0.0
    %1710 = vmatprep.subr.mxu0 0.0
    %1711 = vmatpush1.msra.mxu0 0.0
    %1712 = vmatprep.subr.mxu0 0.0
    %1713 = vmatpush1.msra.mxu0 0.0
    %1714 = vmatprep.subr.mxu0 0.0
    %1715 = vmatpush1.msra.mxu0 0.0
    %1716 = vmatprep.subr.mxu0 0.0
    %1717 = vmatpush1.msra.mxu0 0.0
    %1718 = vmatprep.subr.mxu0 0.0
    %1719 = vmatpush1.msra.mxu0 0.0
    %1720 = vmatprep.subr.mxu0 0.0
    %1721 = vmatpush1.msra.mxu0 0.0
    %1722 = vmatprep.subr.mxu0 0.0
    %1723 = vmatpush1.msra.mxu0 0.0
    %1724 = vmatprep.subr.mxu0 0.0
    %1725 = vmatpush1.msra.mxu0 0.0
    %1726 = vmatprep.subr.mxu0 0.0
    %1727 = vmatpush1.msra.mxu0 0.0
    %1728 = vmatprep.subr.mxu0 0.0
    %1729 = vmatpush1.msra.mxu0 0.0
    %1730 = vmatprep.subr.mxu0 0.0
    %1731 = vmatpush1.msra.mxu0 0.0
    %1732 = vmatprep.subr.mxu0 0.0
    %1733 = vmatpush1.msra.mxu0 0.0
    %1734 = vmatprep.mubr.f32.mxu0 0.0
    %1735 = vmatmul.mubr.f32.gmra.mrb[0].mxu0 %v1668
    %v1736 = vpop.f32.mrb[0].mxu0
    %v1737 = vadd.f32 0.0, %v1736
    %v1738 = vpop.f32.mrb[0].mxu0
    %v1739 = vadd.f32 0.0, %v1738
    %1740 = vmatprep.mubr.f32.mxu0 0.0
    %1741 = vmatmul.mubr.f32.gmra.mrb[0].mxu0 %v1669
    %v1742 = vpop.f32.mrb[0].mxu0
    %v1743 = vadd.f32 0.0, %v1742
    %v1744 = vpop.f32.mrb[0].mxu0
    %v1745 = vadd.f32 0.0, %v1744
    %1746 = vdwg.mxu0
    %1747 = vmatprep.subr.mxu0 %v151
    %1748 = vmatpush1.msra.mxu0 %v150
    %1749 = vmatprep.subr.mxu0 %v153
    %1750 = vmatpush1.msra.mxu0 %v152
    %1751 = vmatprep.subr.mxu0 %v155
    %1752 = vmatpush1.msra.mxu0 %v154
    %1753 = vmatprep.subr.mxu0 %v157
    %1754 = vmatpush1.msra.mxu0 %v156
    %1755 = vmatprep.subr.mxu0 %v159
    %1756 = vmatpush1.msra.mxu0 %v158
    %1757 = vmatprep.subr.mxu0 %v161
    %1758 = vmatpush1.msra.mxu0 %v160
    %1759 = vmatprep.subr.mxu0 %v163
    %1760 = vmatpush1.msra.mxu0 %v162
    %1761 = vmatprep.subr.mxu0 %v165
    %1762 = vmatpush1.msra.mxu0 %v164
    %1763 = vmatprep.subr.mxu0 %v167
    %1764 = vmatpush1.msra.mxu0 %v166
    %1765 = vmatprep.subr.mxu0 %v169
    %1766 = vmatpush1.msra.mxu0 %v168
    %1767 = vmatprep.subr.mxu0 %v171
    %1768 = vmatpush1.msra.mxu0 %v170
    %1769 = vmatprep.subr.mxu0 %v173
    %1770 = vmatpush1.msra.mxu0 %v172
    %1771 = vmatprep.subr.mxu0 %v175
    %1772 = vmatpush1.msra.mxu0 %v174
    %1773 = vmatprep.subr.mxu0 %v177
    %1774 = vmatpush1.msra.mxu0 %v176
    %1775 = vmatprep.subr.mxu0 %v179
    %1776 = vmatpush1.msra.mxu0 %v178
    %1777 = vmatprep.subr.mxu0 %v181
    %1778 = vmatpush1.msra.mxu0 %v180
    %1779 = vmatprep.subr.mxu0 0.0
    %1780 = vmatpush1.msra.mxu0 0.0
    %1781 = vmatprep.subr.mxu0 0.0
    %1782 = vmatpush1.msra.mxu0 0.0
    %1783 = vmatprep.subr.mxu0 0.0
    %1784 = vmatpush1.msra.mxu0 0.0
    %1785 = vmatprep.subr.mxu0 0.0
    %1786 = vmatpush1.msra.mxu0 0.0
    %1787 = vmatprep.subr.mxu0 0.0
    %1788 = vmatpush1.msra.mxu0 0.0
    %1789 = vmatprep.subr.mxu0 0.0
    %1790 = vmatpush1.msra.mxu0 0.0
    %1791 = vmatprep.subr.mxu0 0.0
    %1792 = vmatpush1.msra.mxu0 0.0
    %1793 = vmatprep.subr.mxu0 0.0
    %1794 = vmatpush1.msra.mxu0 0.0
    %1795 = vmatprep.subr.mxu0 0.0
    %1796 = vmatpush1.msra.mxu0 0.0
    %1797 = vmatprep.subr.mxu0 0.0
    %1798 = vmatpush1.msra.mxu0 0.0
    %1799 = vmatprep.subr.mxu0 0.0
    %1800 = vmatpush1.msra.mxu0 0.0
    %1801 = vmatprep.subr.mxu0 0.0
    %1802 = vmatpush1.msra.mxu0 0.0
    %1803 = vmatprep.subr.mxu0 0.0
    %1804 = vmatpush1.msra.mxu0 0.0
    %1805 = vmatprep.subr.mxu0 0.0
    %1806 = vmatpush1.msra.mxu0 0.0
    %1807 = vmatprep.subr.mxu0 0.0
    %1808 = vmatpush1.msra.mxu0 0.0
    %1809 = vmatprep.subr.mxu0 0.0
    %1810 = vmatpush1.msra.mxu0 0.0
    %1811 = vmatprep.mubr.f32.mxu0 0.0
    %1812 = vmatmul.mubr.f32.gmra.mrb[0].mxu0 %v1591
    %v1813 = vpop.f32.mrb[0].mxu0
    %v1814 = vadd.f32 %v1737, %v1813
    %v1815 = vpop.f32.mrb[0].mxu0
    %v1816 = vadd.f32 %v1739, %v1815
    %1817 = vmatprep.mubr.f32.mxu0 0.0
    %1818 = vmatmul.mubr.f32.gmra.mrb[0].mxu0 %v1592
    %v1819 = vpop.f32.mrb[0].mxu0
    %v1820 = vadd.f32 %v1743, %v1819
    %v1821 = vpop.f32.mrb[0].mxu0
    %v1822 = vadd.f32 %v1745, %v1821
    %1823 = vdwg.mxu0
    %1824 = vmatprep.subr.mxu0 %v215
    %1825 = vmatpush1.msra.mxu0 %v214
    %1826 = vmatprep.subr.mxu0 %v217
    %1827 = vmatpush1.msra.mxu0 %v216
    %1828 = vmatprep.subr.mxu0 %v219
    %1829 = vmatpush1.msra.mxu0 %v218
    %1830 = vmatprep.subr.mxu0 %v221
    %1831 = vmatpush1.msra.mxu0 %v220
    %1832 = vmatprep.subr.mxu0 %v223
    %1833 = vmatpush1.msra.mxu0 %v222
    %1834 = vmatprep.subr.mxu0 %v225
    %1835 = vmatpush1.msra.mxu0 %v224
    %1836 = vmatprep.subr.mxu0 %v227
    %1837 = vmatpush1.msra.mxu0 %v226
    %1838 = vmatprep.subr.mxu0 %v229
    %1839 = vmatpush1.msra.mxu0 %v228
    %1840 = vmatprep.subr.mxu0 %v231
    %1841 = vmatpush1.msra.mxu0 %v230
    %1842 = vmatprep.subr.mxu0 %v233
    %1843 = vmatpush1.msra.mxu0 %v232
    %1844 = vmatprep.subr.mxu0 %v235
    %1845 = vmatpush1.msra.mxu0 %v234
    %1846 = vmatprep.subr.mxu0 %v237
    %1847 = vmatpush1.msra.mxu0 %v236
    %1848 = vmatprep.subr.mxu0 %v239
    %1849 = vmatpush1.msra.mxu0 %v238
    %1850 = vmatprep.subr.mxu0 %v241
    %1851 = vmatpush1.msra.mxu0 %v240
    %1852 = vmatprep.subr.mxu0 %v243
    %1853 = vmatpush1.msra.mxu0 %v242
    %1854 = vmatprep.subr.mxu0 %v245
    %1855 = vmatpush1.msra.mxu0 %v244
    %1856 = vmatprep.subr.mxu0 0.0
    %1857 = vmatpush1.msra.mxu0 0.0
    %1858 = vmatprep.subr.mxu0 0.0
    %1859 = vmatpush1.msra.mxu0 0.0
    %1860 = vmatprep.subr.mxu0 0.0
    %1861 = vmatpush1.msra.mxu0 0.0
    %1862 = vmatprep.subr.mxu0 0.0
    %1863 = vmatpush1.msra.mxu0 0.0
    %1864 = vmatprep.subr.mxu0 0.0
    %1865 = vmatpush1.msra.mxu0 0.0
    %1866 = vmatprep.subr.mxu0 0.0
    %1867 = vmatpush1.msra.mxu0 0.0
    %1868 = vmatprep.subr.mxu0 0.0
    %1869 = vmatpush1.msra.mxu0 0.0
    %1870 = vmatprep.subr.mxu0 0.0
    %1871 = vmatpush1.msra.mxu0 0.0
    %1872 = vmatprep.subr.mxu0 0.0
    %1873 = vmatpush1.msra.mxu0 0.0
    %1874 = vmatprep.subr.mxu0 0.0
    %1875 = vmatpush1.msra.mxu0 0.0
    %1876 = vmatprep.subr.mxu0 0.0
    %1877 = vmatpush1.msra.mxu0 0.0
    %1878 = vmatprep.subr.mxu0 0.0
    %1879 = vmatpush1.msra.mxu0 0.0
    %1880 = vmatprep.subr.mxu0 0.0
    %1881 = vmatpush1.msra.mxu0 0.0
    %1882 = vmatprep.subr.mxu0 0.0
    %1883 = vmatpush1.msra.mxu0 0.0
    %1884 = vmatprep.subr.mxu0 0.0
    %1885 = vmatpush1.msra.mxu0 0.0
    %1886 = vmatprep.subr.mxu0 0.0
    %1887 = vmatpush1.msra.mxu0 0.0
    %1888 = vmatprep.mubr.f32.mxu0 0.0
    %1889 = vmatmul.mubr.f32.gmra.mrb[0].mxu0 %v1255
    %v1890 = vpop.f32.mrb[0].mxu0
    %v1891 = vadd.f32 0.0, %v1890
    %v1892 = vpop.f32.mrb[0].mxu0
    %v1893 = vadd.f32 0.0, %v1892
    %1894 = vmatprep.mubr.f32.mxu0 0.0
    %1895 = vmatmul.mubr.f32.gmra.mrb[0].mxu0 %v1256
    %v1896 = vpop.f32.mrb[0].mxu0
    %v1897 = vadd.f32 0.0, %v1896
    %v1898 = vpop.f32.mrb[0].mxu0
    %v1899 = vadd.f32 0.0, %v1898
    %1900 = vdwg.mxu0
    %v1901 = vadd.f32 %v1814, %v1891
    %v1902 = vadd.f32 %v1816, %v1893
    %v1903 = vadd.f32 %v1820, %v1897
    %v1904 = vadd.f32 %v1822, %v1899
    %v1905 = vadd.f32 %v1901, %v975
    %v1906 = vadd.f32 %v1902, %v979
    %v1907 = vadd.f32 %v1903, %v975
    %v1908 = vadd.f32 %v1904, %v979
    %v1909 = vxor.u32 %v1905, 2147483648
    %v1910 = vxor.u32 %v1906, 2147483648
    %v1911 = vxor.u32 %v1907, 2147483648
    %v1912 = vxor.u32 %v1908, 2147483648
    %v1913 = vmul.f32 %v1909, 1.442695
    %v1914 = vpow.pop %v1913
    %v1915 = vmul.f32 %v1910, 1.442695
    %v1916 = vpow.pop %v1915
    %v1917 = vmul.f32 %v1911, 1.442695
    %v1918 = vpow.pop %v1917
    %v1919 = vmul.f32 %v1912, 1.442695
    %v1920 = vpow.pop %v1919
    %v1921 = vadd.f32 %v1914, 1.0
    %v1922 = vadd.f32 %v1916, 1.0
    %v1923 = vadd.f32 %v1918, 1.0
    %v1924 = vadd.f32 %v1920, 1.0
    %v1925 = vrcp.pop %v1921
    %v1926 = vmul.f32 1.0, %v1925
    %v1927 = vrcp.pop %v1922
    %v1928 = vmul.f32 1.0, %v1927
    %v1929 = vrcp.pop %v1923
    %v1930 = vmul.f32 1.0, %v1929
    %v1931 = vrcp.pop %v1924
    %v1932 = vmul.f32 1.0, %v1931
    %1933 = vmatprep.subr.mxu0 0.0
    %1934 = vmatpush1.msra.mxu0 %v263
    %1935 = vmatprep.subr.mxu0 0.0
    %1936 = vmatpush1.msra.mxu0 %v264
    %1937 = vmatprep.subr.mxu0 0.0
    %1938 = vmatpush1.msra.mxu0 %v265
    %1939 = vmatprep.subr.mxu0 0.0
    %1940 = vmatpush1.msra.mxu0 %v266
    %1941 = vmatprep.subr.mxu0 0.0
    %1942 = vmatpush1.msra.mxu0 %v267
    %1943 = vmatprep.subr.mxu0 0.0
    %1944 = vmatpush1.msra.mxu0 %v268
    %1945 = vmatprep.subr.mxu0 0.0
    %1946 = vmatpush1.msra.mxu0 %v269
    %1947 = vmatprep.subr.mxu0 0.0
    %1948 = vmatpush1.msra.mxu0 %v270
    %1949 = vmatprep.subr.mxu0 0.0
    %1950 = vmatpush1.msra.mxu0 %v271
    %1951 = vmatprep.subr.mxu0 0.0
    %1952 = vmatpush1.msra.mxu0 %v272
    %1953 = vmatprep.subr.mxu0 0.0
    %1954 = vmatpush1.msra.mxu0 %v273
    %1955 = vmatprep.subr.mxu0 0.0
    %1956 = vmatpush1.msra.mxu0 %v274
    %1957 = vmatprep.subr.mxu0 0.0
    %1958 = vmatpush1.msra.mxu0 %v275
    %1959 = vmatprep.subr.mxu0 0.0
    %1960 = vmatpush1.msra.mxu0 %v276
    %1961 = vmatprep.subr.mxu0 0.0
    %1962 = vmatpush1.msra.mxu0 %v277
    %1963 = vmatprep.subr.mxu0 0.0
    %1964 = vmatpush1.msra.mxu0 %v278
    %1965 = vmatprep.subr.mxu0 0.0
    %1966 = vmatpush1.msra.mxu0 0.0
    %1967 = vmatprep.subr.mxu0 0.0
    %1968 = vmatpush1.msra.mxu0 0.0
    %1969 = vmatprep.subr.mxu0 0.0
    %1970 = vmatpush1.msra.mxu0 0.0
    %1971 = vmatprep.subr.mxu0 0.0
    %1972 = vmatpush1.msra.mxu0 0.0
    %1973 = vmatprep.subr.mxu0 0.0
    %1974 = vmatpush1.msra.mxu0 0.0
    %1975 = vmatprep.subr.mxu0 0.0
    %1976 = vmatpush1.msra.mxu0 0.0
    %1977 = vmatprep.subr.mxu0 0.0
    %1978 = vmatpush1.msra.mxu0 0.0
    %1979 = vmatprep.subr.mxu0 0.0
    %1980 = vmatpush1.msra.mxu0 0.0
    %1981 = vmatprep.subr.mxu0 0.0
    %1982 = vmatpush1.msra.mxu0 0.0
    %1983 = vmatprep.subr.mxu0 0.0
    %1984 = vmatpush1.msra.mxu0 0.0
    %1985 = vmatprep.subr.mxu0 0.0
    %1986 = vmatpush1.msra.mxu0 0.0
    %1987 = vmatprep.subr.mxu0 0.0
    %1988 = vmatpush1.msra.mxu0 0.0
    %1989 = vmatprep.subr.mxu0 0.0
    %1990 = vmatpush1.msra.mxu0 0.0
    %1991 = vmatprep.subr.mxu0 0.0
    %1992 = vmatpush1.msra.mxu0 0.0
    %1993 = vmatprep.subr.mxu0 0.0
    %1994 = vmatpush1.msra.mxu0 0.0
    %1995 = vmatprep.subr.mxu0 0.0
    %1996 = vmatpush1.msra.mxu0 0.0
    %1997 = vmatprep.mubr.f32.mxu0 0.0
    %1998 = vmatmul.mubr.f32.gmra.mrb[0].mxu0 %v1668
    %v1999 = vpop.f32.mrb[0].mxu0
    %v2000 = vadd.f32 0.0, %v1999
    %v2001 = vpop.f32.mrb[0].mxu0
    %2002 = vmatprep.mubr.f32.mxu0 0.0
    %2003 = vmatmul.mubr.f32.gmra.mrb[0].mxu0 %v1669
    %v2004 = vpop.f32.mrb[0].mxu0
    %v2005 = vadd.f32 0.0, %v2004
    %v2006 = vpop.f32.mrb[0].mxu0
    %2007 = vdwg.mxu0
    %2008 = vmatprep.subr.mxu0 0.0
    %2009 = vmatpush1.msra.mxu0 %v247
    %2010 = vmatprep.subr.mxu0 0.0
    %2011 = vmatpush1.msra.mxu0 %v248
    %2012 = vmatprep.subr.mxu0 0.0
    %2013 = vmatpush1.msra.mxu0 %v249
    %2014 = vmatprep.subr.mxu0 0.0
    %2015 = vmatpush1.msra.mxu0 %v250
    %2016 = vmatprep.subr.mxu0 0.0
    %2017 = vmatpush1.msra.mxu0 %v251
    %2018 = vmatprep.subr.mxu0 0.0
    %2019 = vmatpush1.msra.mxu0 %v252
    %2020 = vmatprep.subr.mxu0 0.0
    %2021 = vmatpush1.msra.mxu0 %v253
    %2022 = vmatprep.subr.mxu0 0.0
    %2023 = vmatpush1.msra.mxu0 %v254
    %2024 = vmatprep.subr.mxu0 0.0
    %2025 = vmatpush1.msra.mxu0 %v255
    %2026 = vmatprep.subr.mxu0 0.0
    %2027 = vmatpush1.msra.mxu0 %v256
    %2028 = vmatprep.subr.mxu0 0.0
    %2029 = vmatpush1.msra.mxu0 %v257
    %2030 = vmatprep.subr.mxu0 0.0
    %2031 = vmatpush1.msra.mxu0 %v258
    %2032 = vmatprep.subr.mxu0 0.0
    %2033 = vmatpush1.msra.mxu0 %v259
    %2034 = vmatprep.subr.mxu0 0.0
    %2035 = vmatpush1.msra.mxu0 %v260
    %2036 = vmatprep.subr.mxu0 0.0
    %2037 = vmatpush1.msra.mxu0 %v261
    %2038 = vmatprep.subr.mxu0 0.0
    %2039 = vmatpush1.msra.mxu0 %v262
    %2040 = vmatprep.subr.mxu0 0.0
    %2041 = vmatpush1.msra.mxu0 0.0
    %2042 = vmatprep.subr.mxu0 0.0
    %2043 = vmatpush1.msra.mxu0 0.0
    %2044 = vmatprep.subr.mxu0 0.0
    %2045 = vmatpush1.msra.mxu0 0.0
    %2046 = vmatprep.subr.mxu0 0.0
    %2047 = vmatpush1.msra.mxu0 0.0
    %2048 = vmatprep.subr.mxu0 0.0
    %2049 = vmatpush1.msra.mxu0 0.0
    %2050 = vmatprep.subr.mxu0 0.0
    %2051 = vmatpush1.msra.mxu0 0.0
    %2052 = vmatprep.subr.mxu0 0.0
    %2053 = vmatpush1.msra.mxu0 0.0
    %2054 = vmatprep.subr.mxu0 0.0
    %2055 = vmatpush1.msra.mxu0 0.0
    %2056 = vmatprep.subr.mxu0 0.0
    %2057 = vmatpush1.msra.mxu0 0.0
    %2058 = vmatprep.subr.mxu0 0.0
    %2059 = vmatpush1.msra.mxu0 0.0
    %2060 = vmatprep.subr.mxu0 0.0
    %2061 = vmatpush1.msra.mxu0 0.0
    %2062 = vmatprep.subr.mxu0 0.0
    %2063 = vmatpush1.msra.mxu0 0.0
    %2064 = vmatprep.subr.mxu0 0.0
    %2065 = vmatpush1.msra.mxu0 0.0
    %2066 = vmatprep.subr.mxu0 0.0
    %2067 = vmatpush1.msra.mxu0 0.0
    %2068 = vmatprep.subr.mxu0 0.0
    %2069 = vmatpush1.msra.mxu0 0.0
    %2070 = vmatprep.subr.mxu0 0.0
    %2071 = vmatpush1.msra.mxu0 0.0
    %2072 = vmatprep.mubr.f32.mxu0 0.0
    %2073 = vmatmul.mubr.f32.gmra.mrb[0].mxu0 %v1591
    %v2074 = vpop.f32.mrb[0].mxu0
    %v2075 = vadd.f32 %v2000, %v2074
    %v2076 = vpop.f32.mrb[0].mxu0
    %2077 = vmatprep.mubr.f32.mxu0 0.0
    %2078 = vmatmul.mubr.f32.gmra.mrb[0].mxu0 %v1592
    %v2079 = vpop.f32.mrb[0].mxu0
    %v2080 = vadd.f32 %v2005, %v2079
    %v2081 = vpop.f32.mrb[0].mxu0
    %2082 = vdwg.mxu0
    %v2083 = vmul.f32 %v1926, %v1255
    %v2084 = vmul.f32 %v1930, %v1256
    %2085 = vmatprep.subr.mxu0 0.0
    %2086 = vmatpush1.msra.mxu0 %v279
    %2087 = vmatprep.subr.mxu0 0.0
    %2088 = vmatpush1.msra.mxu0 %v280
    %2089 = vmatprep.subr.mxu0 0.0
    %2090 = vmatpush1.msra.mxu0 %v281
    %2091 = vmatprep.subr.mxu0 0.0
    %2092 = vmatpush1.msra.mxu0 %v282
    %2093 = vmatprep.subr.mxu0 0.0
    %2094 = vmatpush1.msra.mxu0 %v283
    %2095 = vmatprep.subr.mxu0 0.0
    %2096 = vmatpush1.msra.mxu0 %v284
    %2097 = vmatprep.subr.mxu0 0.0
    %2098 = vmatpush1.msra.mxu0 %v285
    %2099 = vmatprep.subr.mxu0 0.0
    %2100 = vmatpush1.msra.mxu0 %v286
    %2101 = vmatprep.subr.mxu0 0.0
    %2102 = vmatpush1.msra.mxu0 %v287
    %2103 = vmatprep.subr.mxu0 0.0
    %2104 = vmatpush1.msra.mxu0 %v288
    %2105 = vmatprep.subr.mxu0 0.0
    %2106 = vmatpush1.msra.mxu0 %v289
    %2107 = vmatprep.subr.mxu0 0.0
    %2108 = vmatpush1.msra.mxu0 %v290
    %2109 = vmatprep.subr.mxu0 0.0
    %2110 = vmatpush1.msra.mxu0 %v291
    %2111 = vmatprep.subr.mxu0 0.0
    %2112 = vmatpush1.msra.mxu0 %v292
    %2113 = vmatprep.subr.mxu0 0.0
    %2114 = vmatpush1.msra.mxu0 %v293
    %2115 = vmatprep.subr.mxu0 0.0
    %2116 = vmatpush1.msra.mxu0 %v294
    %2117 = vmatprep.subr.mxu0 0.0
    %2118 = vmatpush1.msra.mxu0 0.0
    %2119 = vmatprep.subr.mxu0 0.0
    %2120 = vmatpush1.msra.mxu0 0.0
    %2121 = vmatprep.subr.mxu0 0.0
    %2122 = vmatpush1.msra.mxu0 0.0
    %2123 = vmatprep.subr.mxu0 0.0
    %2124 = vmatpush1.msra.mxu0 0.0
    %2125 = vmatprep.subr.mxu0 0.0
    %2126 = vmatpush1.msra.mxu0 0.0
    %2127 = vmatprep.subr.mxu0 0.0
    %2128 = vmatpush1.msra.mxu0 0.0
    %2129 = vmatprep.subr.mxu0 0.0
    %2130 = vmatpush1.msra.mxu0 0.0
    %2131 = vmatprep.subr.mxu0 0.0
    %2132 = vmatpush1.msra.mxu0 0.0
    %2133 = vmatprep.subr.mxu0 0.0
    %2134 = vmatpush1.msra.mxu0 0.0
    %2135 = vmatprep.subr.mxu0 0.0
    %2136 = vmatpush1.msra.mxu0 0.0
    %2137 = vmatprep.subr.mxu0 0.0
    %2138 = vmatpush1.msra.mxu0 0.0
    %2139 = vmatprep.subr.mxu0 0.0
    %2140 = vmatpush1.msra.mxu0 0.0
    %2141 = vmatprep.subr.mxu0 0.0
    %2142 = vmatpush1.msra.mxu0 0.0
    %2143 = vmatprep.subr.mxu0 0.0
    %2144 = vmatpush1.msra.mxu0 0.0
    %2145 = vmatprep.subr.mxu0 0.0
    %2146 = vmatpush1.msra.mxu0 0.0
    %2147 = vmatprep.subr.mxu0 0.0
    %2148 = vmatpush1.msra.mxu0 0.0
    %2149 = vmatprep.mubr.f32.mxu0 0.0
    %2150 = vmatmul.mubr.f32.gmra.mrb[0].mxu0 %v2083
    %v2151 = vpop.f32.mrb[0].mxu0
    %v2152 = vadd.f32 0.0, %v2151
    %v2153 = vpop.f32.mrb[0].mxu0
    %2154 = vmatprep.mubr.f32.mxu0 0.0
    %2155 = vmatmul.mubr.f32.gmra.mrb[0].mxu0 %v2084
    %v2156 = vpop.f32.mrb[0].mxu0
    %v2157 = vadd.f32 0.0, %v2156
    %v2158 = vpop.f32.mrb[0].mxu0
    %2159 = vdwg.mxu0
    %v2160 = vadd.f32 %v2075, %v2152
    %v2161 = vadd.f32 %v2080, %v2157
    %v2162 = vadd.f32 %v2160, %v1243
    %v2163 = vadd.f32 %v2161, %v1243
    %v2164 = vtanh.pop %v2162
    %v2165 = vtanh.pop %v2163
    %v2166 = vsub.f32 1.0, %v1928
    %v2167 = vsub.f32 1.0, %v1932
    %v2168 = vmul.f32 %v2166, %v1255
    %v2169 = vmul.f32 %v2167, %v1256
    %v2170 = vmul.f32 %v1928, %v2164
    %v2171 = vmul.f32 %v1932, %v2165
    %v2172 = vadd.f32 %v2168, %v2170
    %v2173 = vadd.f32 %v2169, %v2171
    %2174 = vmatprep.subr.mxu0 0.0
    %2175 = vmatpush1.msra.mxu0 %v2172
    %2176 = vmatprep.subr.mxu0 0.0
    %2177 = vmatpush1.msra.mxu0 %v2173
    %2178 = vmatprep.subr.mxu0 0.0
    %2179 = vmatpush1.msra.mxu0 0.0
    %2180 = vmatprep.subr.mxu0 0.0
    %2181 = vmatpush1.msra.mxu0 0.0
    %2182 = vmatprep.subr.mxu0 0.0
    %2183 = vmatpush1.msra.mxu0 0.0
    %2184 = vmatprep.subr.mxu0 0.0
    %2185 = vmatpush1.msra.mxu0 0.0
    %2186 = vmatprep.subr.mxu0 0.0
    %2187 = vmatpush1.msra.mxu0 0.0
    %2188 = vmatprep.subr.mxu0 0.0
    %2189 = vmatpush1.msra.mxu0 0.0
    %2190 = vmatprep.subr.mxu0 0.0
    %2191 = vmatpush1.msra.mxu0 0.0
    %2192 = vmatprep.subr.mxu0 0.0
    %2193 = vmatpush1.msra.mxu0 0.0
    %2194 = vmatprep.subr.mxu0 0.0
    %2195 = vmatpush1.msra.mxu0 0.0
    %2196 = vmatprep.subr.mxu0 0.0
    %2197 = vmatpush1.msra.mxu0 0.0
    %2198 = vmatprep.subr.mxu0 0.0
    %2199 = vmatpush1.msra.mxu0 0.0
    %2200 = vmatprep.subr.mxu0 0.0
    %2201 = vmatpush1.msra.mxu0 0.0
    %2202 = vmatprep.subr.mxu0 0.0
    %2203 = vmatpush1.msra.mxu0 0.0
    %2204 = vmatprep.subr.mxu0 0.0
    %2205 = vmatpush1.msra.mxu0 0.0
    %2206 = vmatprep.subr.mxu0 0.0
    %2207 = vmatpush1.msra.mxu0 0.0
    %2208 = vmatprep.subr.mxu0 0.0
    %2209 = vmatpush1.msra.mxu0 0.0
    %2210 = vmatprep.subr.mxu0 0.0
    %2211 = vmatpush1.msra.mxu0 0.0
    %2212 = vmatprep.subr.mxu0 0.0
    %2213 = vmatpush1.msra.mxu0 0.0
    %2214 = vmatprep.subr.mxu0 0.0
    %2215 = vmatpush1.msra.mxu0 0.0
    %2216 = vmatprep.subr.mxu0 0.0
    %2217 = vmatpush1.msra.mxu0 0.0
    %2218 = vmatprep.subr.mxu0 0.0
    %2219 = vmatpush1.msra.mxu0 0.0
    %2220 = vmatprep.subr.mxu0 0.0
    %2221 = vmatpush1.msra.mxu0 0.0
    %2222 = vmatprep.subr.mxu0 0.0
    %2223 = vmatpush1.msra.mxu0 0.0
    %2224 = vmatprep.subr.mxu0 0.0
    %2225 = vmatpush1.msra.mxu0 0.0
    %2226 = vmatprep.subr.mxu0 0.0
    %2227 = vmatpush1.msra.mxu0 0.0
    %2228 = vmatprep.subr.mxu0 0.0
    %2229 = vmatpush1.msra.mxu0 0.0
    %2230 = vmatprep.subr.mxu0 0.0
    %2231 = vmatpush1.msra.mxu0 0.0
    %2232 = vmatprep.subr.mxu0 0.0
    %2233 = vmatpush1.msra.mxu0 0.0
    %2234 = vmatprep.subr.mxu0 0.0
    %2235 = vmatpush1.msra.mxu0 0.0
    %2236 = vmatprep.subr.mxu0 0.0
    %2237 = vmatpush1.msra.mxu0 0.0
    %2238 = vmatprep.mubr.f32.mxu0 0.0
    %2239 = vmatmul.mubr.f32.gmra.mrb[0].mxu0 %v300
    %v2240 = vpop.f32.mrb[0].mxu0
    %v2241 = vadd.f32 0.0, %v2240
    %v2242 = vpop.f32.mrb[0].mxu0
    %2243 = vmatprep.mubr.f32.mxu0 0.0
    %2244 = vmatmul.mubr.f32.gmra.mrb[0].mxu0 %v303
    %v2245 = vpop.f32.mrb[0].mxu0
    %v2246 = vadd.f32 0.0, %v2245
    %v2247 = vpop.f32.mrb[0].mxu0
    %2248 = vmatprep.mubr.f32.mxu0 0.0
    %2249 = vmatmul.mubr.f32.gmra.mrb[0].mxu0 %v306
    %v2250 = vpop.f32.mrb[0].mxu0
    %v2251 = vadd.f32 0.0, %v2250
    %v2252 = vpop.f32.mrb[0].mxu0
    %2253 = vmatprep.mubr.f32.mxu0 0.0
    %2254 = vmatmul.mubr.f32.gmra.mrb[0].mxu0 %v309
    %v2255 = vpop.f32.mrb[0].mxu0
    %v2256 = vadd.f32 0.0, %v2255
    %v2257 = vpop.f32.mrb[0].mxu0
    %2258 = vmatprep.mubr.f32.mxu0 0.0
    %2259 = vmatmul.mubr.f32.gmra.mrb[0].mxu0 %v312
    %v2260 = vpop.f32.mrb[0].mxu0
    %v2261 = vadd.f32 0.0, %v2260
    %v2262 = vpop.f32.mrb[0].mxu0
    %2263 = vmatprep.mubr.f32.mxu0 0.0
    %2264 = vmatmul.mubr.f32.gmra.mrb[0].mxu0 %v315
    %v2265 = vpop.f32.mrb[0].mxu0
    %v2266 = vadd.f32 0.0, %v2265
    %v2267 = vpop.f32.mrb[0].mxu0
    %2268 = vmatprep.mubr.f32.mxu0 0.0
    %2269 = vmatmul.mubr.f32.gmra.mrb[0].mxu0 %v318
    %v2270 = vpop.f32.mrb[0].mxu0
    %v2271 = vadd.f32 0.0, %v2270
    %v2272 = vpop.f32.mrb[0].mxu0
    %2273 = vmatprep.mubr.f32.mxu0 0.0
    %2274 = vmatmul.mubr.f32.gmra.mrb[0].mxu0 %v321
    %v2275 = vpop.f32.mrb[0].mxu0
    %v2276 = vadd.f32 0.0, %v2275
    %v2277 = vpop.f32.mrb[0].mxu0
    %2278 = vdwg.mxu0
    %2279 = vmatprep.subr.mxu0 0.0
    %2280 = vmatpush1.msra.mxu0 %v82
    %2281 = vmatprep.subr.mxu0 0.0
    %2282 = vmatpush1.msra.mxu0 %v83
    %2283 = vmatprep.subr.mxu0 0.0
    %2284 = vmatpush1.msra.mxu0 %v84
    %2285 = vmatprep.subr.mxu0 0.0
    %2286 = vmatpush1.msra.mxu0 %v85
    %2287 = vmatprep.subr.mxu0 0.0
    %2288 = vmatpush1.msra.mxu0 %v86
    %2289 = vmatprep.subr.mxu0 0.0
    %2290 = vmatpush1.msra.mxu0 %v87
    %2291 = vmatprep.subr.mxu0 0.0
    %2292 = vmatpush1.msra.mxu0 %v88
    %2293 = vmatprep.subr.mxu0 0.0
    %2294 = vmatpush1.msra.mxu0 %v89
    %2295 = vmatprep.subr.mxu0 0.0
    %2296 = vmatpush1.msra.mxu0 %v90
    %2297 = vmatprep.subr.mxu0 0.0
    %2298 = vmatpush1.msra.mxu0 %v91
    %2299 = vmatprep.subr.mxu0 0.0
    %2300 = vmatpush1.msra.mxu0 %v92
    %2301 = vmatprep.subr.mxu0 0.0
    %2302 = vmatpush1.msra.mxu0 %v93
    %2303 = vmatprep.subr.mxu0 0.0
    %2304 = vmatpush1.msra.mxu0 %v94
    %2305 = vmatprep.subr.mxu0 0.0
    %2306 = vmatpush1.msra.mxu0 %v95
    %2307 = vmatprep.subr.mxu0 0.0
    %2308 = vmatpush1.msra.mxu0 %v96
    %2309 = vmatprep.subr.mxu0 0.0
    %2310 = vmatpush1.msra.mxu0 %v97
    %2311 = vmatprep.subr.mxu0 0.0
    %2312 = vmatpush1.msra.mxu0 0.0
    %2313 = vmatprep.subr.mxu0 0.0
    %2314 = vmatpush1.msra.mxu0 0.0
    %2315 = vmatprep.subr.mxu0 0.0
    %2316 = vmatpush1.msra.mxu0 0.0
    %2317 = vmatprep.subr.mxu0 0.0
    %2318 = vmatpush1.msra.mxu0 0.0
    %2319 = vmatprep.subr.mxu0 0.0
    %2320 = vmatpush1.msra.mxu0 0.0
    %2321 = vmatprep.subr.mxu0 0.0
    %2322 = vmatpush1.msra.mxu0 0.0
    %2323 = vmatprep.subr.mxu0 0.0
    %2324 = vmatpush1.msra.mxu0 0.0
    %2325 = vmatprep.subr.mxu0 0.0
    %2326 = vmatpush1.msra.mxu0 0.0
    %2327 = vmatprep.subr.mxu0 0.0
    %2328 = vmatpush1.msra.mxu0 0.0
    %2329 = vmatprep.subr.mxu0 0.0
    %2330 = vmatpush1.msra.mxu0 0.0
    %2331 = vmatprep.subr.mxu0 0.0
    %2332 = vmatpush1.msra.mxu0 0.0
    %2333 = vmatprep.subr.mxu0 0.0
    %2334 = vmatpush1.msra.mxu0 0.0
    %2335 = vmatprep.subr.mxu0 0.0
    %2336 = vmatpush1.msra.mxu0 0.0
    %2337 = vmatprep.subr.mxu0 0.0
    %2338 = vmatpush1.msra.mxu0 0.0
    %2339 = vmatprep.subr.mxu0 0.0
    %2340 = vmatpush1.msra.mxu0 0.0
    %2341 = vmatprep.subr.mxu0 0.0
    %2342 = vmatpush1.msra.mxu0 0.0
    %2343 = vmatprep.mubr.f32.mxu0 0.0
    %2344 = vmatmul.mubr.f32.gmra.mrb[0].mxu0 %v2241
    %v2345 = vpop.f32.mrb[0].mxu0
    %v2346 = vadd.f32 0.0, %v2345
    %v2347 = vpop.f32.mrb[0].mxu0
    %2348 = vmatprep.mubr.f32.mxu0 0.0
    %2349 = vmatmul.mubr.f32.gmra.mrb[0].mxu0 %v2246
    %v2350 = vpop.f32.mrb[0].mxu0
    %v2351 = vadd.f32 0.0, %v2350
    %v2352 = vpop.f32.mrb[0].mxu0
    %2353 = vdwg.mxu0
    %v2354 = vadd.f32 %v146, %v2346
    %v2355 = vadd.f32 %v147, %v2351
    %2356 = vmatprep.subr.mxu0 0.0
    %2357 = vmatpush1.msra.mxu0 %v114
    %2358 = vmatprep.subr.mxu0 0.0
    %2359 = vmatpush1.msra.mxu0 %v115
    %2360 = vmatprep.subr.mxu0 0.0
    %2361 = vmatpush1.msra.mxu0 %v116
    %2362 = vmatprep.subr.mxu0 0.0
    %2363 = vmatpush1.msra.mxu0 %v117
    %2364 = vmatprep.subr.mxu0 0.0
    %2365 = vmatpush1.msra.mxu0 %v118
    %2366 = vmatprep.subr.mxu0 0.0
    %2367 = vmatpush1.msra.mxu0 %v119
    %2368 = vmatprep.subr.mxu0 0.0
    %2369 = vmatpush1.msra.mxu0 %v120
    %2370 = vmatprep.subr.mxu0 0.0
    %2371 = vmatpush1.msra.mxu0 %v121
    %2372 = vmatprep.subr.mxu0 0.0
    %2373 = vmatpush1.msra.mxu0 %v122
    %2374 = vmatprep.subr.mxu0 0.0
    %2375 = vmatpush1.msra.mxu0 %v123
    %2376 = vmatprep.subr.mxu0 0.0
    %2377 = vmatpush1.msra.mxu0 %v124
    %2378 = vmatprep.subr.mxu0 0.0
    %2379 = vmatpush1.msra.mxu0 %v125
    %2380 = vmatprep.subr.mxu0 0.0
    %2381 = vmatpush1.msra.mxu0 %v126
    %2382 = vmatprep.subr.mxu0 0.0
    %2383 = vmatpush1.msra.mxu0 %v127
    %2384 = vmatprep.subr.mxu0 0.0
    %2385 = vmatpush1.msra.mxu0 %v128
    %2386 = vmatprep.subr.mxu0 0.0
    %2387 = vmatpush1.msra.mxu0 %v129
    %2388 = vmatprep.subr.mxu0 0.0
    %2389 = vmatpush1.msra.mxu0 0.0
    %2390 = vmatprep.subr.mxu0 0.0
    %2391 = vmatpush1.msra.mxu0 0.0
    %2392 = vmatprep.subr.mxu0 0.0
    %2393 = vmatpush1.msra.mxu0 0.0
    %2394 = vmatprep.subr.mxu0 0.0
    %2395 = vmatpush1.msra.mxu0 0.0
    %2396 = vmatprep.subr.mxu0 0.0
    %2397 = vmatpush1.msra.mxu0 0.0
    %2398 = vmatprep.subr.mxu0 0.0
    %2399 = vmatpush1.msra.mxu0 0.0
    %2400 = vmatprep.subr.mxu0 0.0
    %2401 = vmatpush1.msra.mxu0 0.0
    %2402 = vmatprep.subr.mxu0 0.0
    %2403 = vmatpush1.msra.mxu0 0.0
    %2404 = vmatprep.subr.mxu0 0.0
    %2405 = vmatpush1.msra.mxu0 0.0
    %2406 = vmatprep.subr.mxu0 0.0
    %2407 = vmatpush1.msra.mxu0 0.0
    %2408 = vmatprep.subr.mxu0 0.0
    %2409 = vmatpush1.msra.mxu0 0.0
    %2410 = vmatprep.subr.mxu0 0.0
    %2411 = vmatpush1.msra.mxu0 0.0
    %2412 = vmatprep.subr.mxu0 0.0
    %2413 = vmatpush1.msra.mxu0 0.0
    %2414 = vmatprep.subr.mxu0 0.0
    %2415 = vmatpush1.msra.mxu0 0.0
    %2416 = vmatprep.subr.mxu0 0.0
    %2417 = vmatpush1.msra.mxu0 0.0
    %2418 = vmatprep.subr.mxu0 0.0
    %2419 = vmatpush1.msra.mxu0 0.0
    %2420 = vmatprep.mubr.f32.mxu0 0.0
    %2421 = vmatmul.mubr.f32.gmra.mrb[0].mxu0 %v2261
    %v2422 = vpop.f32.mrb[0].mxu0
    %v2423 = vadd.f32 0.0, %v2422
    %v2424 = vpop.f32.mrb[0].mxu0
    %2425 = vmatprep.mubr.f32.mxu0 0.0
    %2426 = vmatmul.mubr.f32.gmra.mrb[0].mxu0 %v2266
    %v2427 = vpop.f32.mrb[0].mxu0
    %v2428 = vadd.f32 0.0, %v2427
    %v2429 = vpop.f32.mrb[0].mxu0
    %2430 = vdwg.mxu0
    %v2431 = vadd.f32 %v148, %v2423
    %v2432 = vadd.f32 %v149, %v2428
    %2433 = vmatprep.subr.mxu0 0.0
    %2434 = vmatpush1.msra.mxu0 %v98
    %2435 = vmatprep.subr.mxu0 0.0
    %2436 = vmatpush1.msra.mxu0 %v99
    %2437 = vmatprep.subr.mxu0 0.0
    %2438 = vmatpush1.msra.mxu0 %v100
    %2439 = vmatprep.subr.mxu0 0.0
    %2440 = vmatpush1.msra.mxu0 %v101
    %2441 = vmatprep.subr.mxu0 0.0
    %2442 = vmatpush1.msra.mxu0 %v102
    %2443 = vmatprep.subr.mxu0 0.0
    %2444 = vmatpush1.msra.mxu0 %v103
    %2445 = vmatprep.subr.mxu0 0.0
    %2446 = vmatpush1.msra.mxu0 %v104
    %2447 = vmatprep.subr.mxu0 0.0
    %2448 = vmatpush1.msra.mxu0 %v105
    %2449 = vmatprep.subr.mxu0 0.0
    %2450 = vmatpush1.msra.mxu0 %v106
    %2451 = vmatprep.subr.mxu0 0.0
    %2452 = vmatpush1.msra.mxu0 %v107
    %2453 = vmatprep.subr.mxu0 0.0
    %2454 = vmatpush1.msra.mxu0 %v108
    %2455 = vmatprep.subr.mxu0 0.0
    %2456 = vmatpush1.msra.mxu0 %v109
    %2457 = vmatprep.subr.mxu0 0.0
    %2458 = vmatpush1.msra.mxu0 %v110
    %2459 = vmatprep.subr.mxu0 0.0
    %2460 = vmatpush1.msra.mxu0 %v111
    %2461 = vmatprep.subr.mxu0 0.0
    %2462 = vmatpush1.msra.mxu0 %v112
    %2463 = vmatprep.subr.mxu0 0.0
    %2464 = vmatpush1.msra.mxu0 %v113
    %2465 = vmatprep.subr.mxu0 0.0
    %2466 = vmatpush1.msra.mxu0 0.0
    %2467 = vmatprep.subr.mxu0 0.0
    %2468 = vmatpush1.msra.mxu0 0.0
    %2469 = vmatprep.subr.mxu0 0.0
    %2470 = vmatpush1.msra.mxu0 0.0
    %2471 = vmatprep.subr.mxu0 0.0
    %2472 = vmatpush1.msra.mxu0 0.0
    %2473 = vmatprep.subr.mxu0 0.0
    %2474 = vmatpush1.msra.mxu0 0.0
    %2475 = vmatprep.subr.mxu0 0.0
    %2476 = vmatpush1.msra.mxu0 0.0
    %2477 = vmatprep.subr.mxu0 0.0
    %2478 = vmatpush1.msra.mxu0 0.0
    %2479 = vmatprep.subr.mxu0 0.0
    %2480 = vmatpush1.msra.mxu0 0.0
    %2481 = vmatprep.subr.mxu0 0.0
    %2482 = vmatpush1.msra.mxu0 0.0
    %2483 = vmatprep.subr.mxu0 0.0
    %2484 = vmatpush1.msra.mxu0 0.0
    %2485 = vmatprep.subr.mxu0 0.0
    %2486 = vmatpush1.msra.mxu0 0.0
    %2487 = vmatprep.subr.mxu0 0.0
    %2488 = vmatpush1.msra.mxu0 0.0
    %2489 = vmatprep.subr.mxu0 0.0
    %2490 = vmatpush1.msra.mxu0 0.0
    %2491 = vmatprep.subr.mxu0 0.0
    %2492 = vmatpush1.msra.mxu0 0.0
    %2493 = vmatprep.subr.mxu0 0.0
    %2494 = vmatpush1.msra.mxu0 0.0
    %2495 = vmatprep.subr.mxu0 0.0
    %2496 = vmatpush1.msra.mxu0 0.0
    %2497 = vmatprep.mubr.f32.mxu0 0.0
    %2498 = vmatmul.mubr.f32.gmra.mrb[0].mxu0 %v2251
    %v2499 = vpop.f32.mrb[0].mxu0
    %v2500 = vadd.f32 0.0, %v2499
    %v2501 = vpop.f32.mrb[0].mxu0
    %2502 = vmatprep.mubr.f32.mxu0 0.0
    %2503 = vmatmul.mubr.f32.gmra.mrb[0].mxu0 %v2256
    %v2504 = vpop.f32.mrb[0].mxu0
    %v2505 = vadd.f32 0.0, %v2504
    %v2506 = vpop.f32.mrb[0].mxu0
    %2507 = vdwg.mxu0
    %v2508 = vadd.f32 %v2354, %v2500
    %v2509 = vadd.f32 %v2355, %v2505
    %2510 = vmatprep.subr.mxu0 0.0
    %2511 = vmatpush1.msra.mxu0 %v130
    %2512 = vmatprep.subr.mxu0 0.0
    %2513 = vmatpush1.msra.mxu0 %v131
    %2514 = vmatprep.subr.mxu0 0.0
    %2515 = vmatpush1.msra.mxu0 %v132
    %2516 = vmatprep.subr.mxu0 0.0
    %2517 = vmatpush1.msra.mxu0 %v133
    %2518 = vmatprep.subr.mxu0 0.0
    %2519 = vmatpush1.msra.mxu0 %v134
    %2520 = vmatprep.subr.mxu0 0.0
    %2521 = vmatpush1.msra.mxu0 %v135
    %2522 = vmatprep.subr.mxu0 0.0
    %2523 = vmatpush1.msra.mxu0 %v136
    %2524 = vmatprep.subr.mxu0 0.0
    %2525 = vmatpush1.msra.mxu0 %v137
    %2526 = vmatprep.subr.mxu0 0.0
    %2527 = vmatpush1.msra.mxu0 %v138
    %2528 = vmatprep.subr.mxu0 0.0
    %2529 = vmatpush1.msra.mxu0 %v139
    %2530 = vmatprep.subr.mxu0 0.0
    %2531 = vmatpush1.msra.mxu0 %v140
    %2532 = vmatprep.subr.mxu0 0.0
    %2533 = vmatpush1.msra.mxu0 %v141
    %2534 = vmatprep.subr.mxu0 0.0
    %2535 = vmatpush1.msra.mxu0 %v142
    %2536 = vmatprep.subr.mxu0 0.0
    %2537 = vmatpush1.msra.mxu0 %v143
    %2538 = vmatprep.subr.mxu0 0.0
    %2539 = vmatpush1.msra.mxu0 %v144
    %2540 = vmatprep.subr.mxu0 0.0
    %2541 = vmatpush1.msra.mxu0 %v145
    %2542 = vmatprep.subr.mxu0 0.0
    %2543 = vmatpush1.msra.mxu0 0.0
    %2544 = vmatprep.subr.mxu0 0.0
    %2545 = vmatpush1.msra.mxu0 0.0
    %2546 = vmatprep.subr.mxu0 0.0
    %2547 = vmatpush1.msra.mxu0 0.0
    %2548 = vmatprep.subr.mxu0 0.0
    %2549 = vmatpush1.msra.mxu0 0.0
    %2550 = vmatprep.subr.mxu0 0.0
    %2551 = vmatpush1.msra.mxu0 0.0
    %2552 = vmatprep.subr.mxu0 0.0
    %2553 = vmatpush1.msra.mxu0 0.0
    %2554 = vmatprep.subr.mxu0 0.0
    %2555 = vmatpush1.msra.mxu0 0.0
    %2556 = vmatprep.subr.mxu0 0.0
    %2557 = vmatpush1.msra.mxu0 0.0
    %2558 = vmatprep.subr.mxu0 0.0
    %2559 = vmatpush1.msra.mxu0 0.0
    %2560 = vmatprep.subr.mxu0 0.0
    %2561 = vmatpush1.msra.mxu0 0.0
    %2562 = vmatprep.subr.mxu0 0.0
    %2563 = vmatpush1.msra.mxu0 0.0
    %2564 = vmatprep.subr.mxu0 0.0
    %2565 = vmatpush1.msra.mxu0 0.0
    %2566 = vmatprep.subr.mxu0 0.0
    %2567 = vmatpush1.msra.mxu0 0.0
    %2568 = vmatprep.subr.mxu0 0.0
    %2569 = vmatpush1.msra.mxu0 0.0
    %2570 = vmatprep.subr.mxu0 0.0
    %2571 = vmatpush1.msra.mxu0 0.0
    %2572 = vmatprep.subr.mxu0 0.0
    %2573 = vmatpush1.msra.mxu0 0.0
    %2574 = vmatprep.mubr.f32.mxu0 0.0
    %2575 = vmatmul.mubr.f32.gmra.mrb[0].mxu0 %v2271
    %v2576 = vpop.f32.mrb[0].mxu0
    %v2577 = vadd.f32 0.0, %v2576
    %v2578 = vpop.f32.mrb[0].mxu0
    %2579 = vmatprep.mubr.f32.mxu0 0.0
    %2580 = vmatmul.mubr.f32.gmra.mrb[0].mxu0 %v2276
    %v2581 = vpop.f32.mrb[0].mxu0
    %v2582 = vadd.f32 0.0, %v2581
    %v2583 = vpop.f32.mrb[0].mxu0
    %2584 = vdwg.mxu0
    %v2585 = vadd.f32 %v2431, %v2577
    %v2586 = vadd.f32 %v2432, %v2582
    %2587 = vmatprep.subr.mxu0 %v183
    %2588 = vmatpush1.msra.mxu0 %v182
    %2589 = vmatprep.subr.mxu0 %v185
    %2590 = vmatpush1.msra.mxu0 %v184
    %2591 = vmatprep.subr.mxu0 %v187
    %2592 = vmatpush1.msra.mxu0 %v186
    %2593 = vmatprep.subr.mxu0 %v189
    %2594 = vmatpush1.msra.mxu0 %v188
    %2595 = vmatprep.subr.mxu0 %v191
    %2596 = vmatpush1.msra.mxu0 %v190
    %2597 = vmatprep.subr.mxu0 %v193
    %2598 = vmatpush1.msra.mxu0 %v192
    %2599 = vmatprep.subr.mxu0 %v195
    %2600 = vmatpush1.msra.mxu0 %v194
    %2601 = vmatprep.subr.mxu0 %v197
    %2602 = vmatpush1.msra.mxu0 %v196
    %2603 = vmatprep.subr.mxu0 %v199
    %2604 = vmatpush1.msra.mxu0 %v198
    %2605 = vmatprep.subr.mxu0 %v201
    %2606 = vmatpush1.msra.mxu0 %v200
    %2607 = vmatprep.subr.mxu0 %v203
    %2608 = vmatpush1.msra.mxu0 %v202
    %2609 = vmatprep.subr.mxu0 %v205
    %2610 = vmatpush1.msra.mxu0 %v204
    %2611 = vmatprep.subr.mxu0 %v207
    %2612 = vmatpush1.msra.mxu0 %v206
    %2613 = vmatprep.subr.mxu0 %v209
    %2614 = vmatpush1.msra.mxu0 %v208
    %2615 = vmatprep.subr.mxu0 %v211
    %2616 = vmatpush1.msra.mxu0 %v210
    %2617 = vmatprep.subr.mxu0 %v213
    %2618 = vmatpush1.msra.mxu0 %v212
    %2619 = vmatprep.subr.mxu0 0.0
    %2620 = vmatpush1.msra.mxu0 0.0
    %2621 = vmatprep.subr.mxu0 0.0
    %2622 = vmatpush1.msra.mxu0 0.0
    %2623 = vmatprep.subr.mxu0 0.0
    %2624 = vmatpush1.msra.mxu0 0.0
    %2625 = vmatprep.subr.mxu0 0.0
    %2626 = vmatpush1.msra.mxu0 0.0
    %2627 = vmatprep.subr.mxu0 0.0
    %2628 = vmatpush1.msra.mxu0 0.0
    %2629 = vmatprep.subr.mxu0 0.0
    %2630 = vmatpush1.msra.mxu0 0.0
    %2631 = vmatprep.subr.mxu0 0.0
    %2632 = vmatpush1.msra.mxu0 0.0
    %2633 = vmatprep.subr.mxu0 0.0
    %2634 = vmatpush1.msra.mxu0 0.0
    %2635 = vmatprep.subr.mxu0 0.0
    %2636 = vmatpush1.msra.mxu0 0.0
    %2637 = vmatprep.subr.mxu0 0.0
    %2638 = vmatpush1.msra.mxu0 0.0
    %2639 = vmatprep.subr.mxu0 0.0
    %2640 = vmatpush1.msra.mxu0 0.0
    %2641 = vmatprep.subr.mxu0 0.0
    %2642 = vmatpush1.msra.mxu0 0.0
    %2643 = vmatprep.subr.mxu0 0.0
    %2644 = vmatpush1.msra.mxu0 0.0
    %2645 = vmatprep.subr.mxu0 0.0
    %2646 = vmatpush1.msra.mxu0 0.0
    %2647 = vmatprep.subr.mxu0 0.0
    %2648 = vmatpush1.msra.mxu0 0.0
    %2649 = vmatprep.subr.mxu0 0.0
    %2650 = vmatpush1.msra.mxu0 0.0
    %2651 = vmatprep.mubr.f32.mxu0 0.0
    %2652 = vmatmul.mubr.f32.gmra.mrb[0].mxu0 %v2585
    %v2653 = vpop.f32.mrb[0].mxu0
    %v2654 = vadd.f32 0.0, %v2653
    %v2655 = vpop.f32.mrb[0].mxu0
    %v2656 = vadd.f32 0.0, %v2655
    %2657 = vmatprep.mubr.f32.mxu0 0.0
    %2658 = vmatmul.mubr.f32.gmra.mrb[0].mxu0 %v2586
    %v2659 = vpop.f32.mrb[0].mxu0
    %v2660 = vadd.f32 0.0, %v2659
    %v2661 = vpop.f32.mrb[0].mxu0
    %v2662 = vadd.f32 0.0, %v2661
    %2663 = vdwg.mxu0
    %2664 = vmatprep.subr.mxu0 %v151
    %2665 = vmatpush1.msra.mxu0 %v150
    %2666 = vmatprep.subr.mxu0 %v153
    %2667 = vmatpush1.msra.mxu0 %v152
    %2668 = vmatprep.subr.mxu0 %v155
    %2669 = vmatpush1.msra.mxu0 %v154
    %2670 = vmatprep.subr.mxu0 %v157
    %2671 = vmatpush1.msra.mxu0 %v156
    %2672 = vmatprep.subr.mxu0 %v159
    %2673 = vmatpush1.msra.mxu0 %v158
    %2674 = vmatprep.subr.mxu0 %v161
    %2675 = vmatpush1.msra.mxu0 %v160
    %2676 = vmatprep.subr.mxu0 %v163
    %2677 = vmatpush1.msra.mxu0 %v162
    %2678 = vmatprep.subr.mxu0 %v165
    %2679 = vmatpush1.msra.mxu0 %v164
    %2680 = vmatprep.subr.mxu0 %v167
    %2681 = vmatpush1.msra.mxu0 %v166
    %2682 = vmatprep.subr.mxu0 %v169
    %2683 = vmatpush1.msra.mxu0 %v168
    %2684 = vmatprep.subr.mxu0 %v171
    %2685 = vmatpush1.msra.mxu0 %v170
    %2686 = vmatprep.subr.mxu0 %v173
    %2687 = vmatpush1.msra.mxu0 %v172
    %2688 = vmatprep.subr.mxu0 %v175
    %2689 = vmatpush1.msra.mxu0 %v174
    %2690 = vmatprep.subr.mxu0 %v177
    %2691 = vmatpush1.msra.mxu0 %v176
    %2692 = vmatprep.subr.mxu0 %v179
    %2693 = vmatpush1.msra.mxu0 %v178
    %2694 = vmatprep.subr.mxu0 %v181
    %2695 = vmatpush1.msra.mxu0 %v180
    %2696 = vmatprep.subr.mxu0 0.0
    %2697 = vmatpush1.msra.mxu0 0.0
    %2698 = vmatprep.subr.mxu0 0.0
    %2699 = vmatpush1.msra.mxu0 0.0
    %2700 = vmatprep.subr.mxu0 0.0
    %2701 = vmatpush1.msra.mxu0 0.0
    %2702 = vmatprep.subr.mxu0 0.0
    %2703 = vmatpush1.msra.mxu0 0.0
    %2704 = vmatprep.subr.mxu0 0.0
    %2705 = vmatpush1.msra.mxu0 0.0
    %2706 = vmatprep.subr.mxu0 0.0
    %2707 = vmatpush1.msra.mxu0 0.0
    %2708 = vmatprep.subr.mxu0 0.0
    %2709 = vmatpush1.msra.mxu0 0.0
    %2710 = vmatprep.subr.mxu0 0.0
    %2711 = vmatpush1.msra.mxu0 0.0
    %2712 = vmatprep.subr.mxu0 0.0
    %2713 = vmatpush1.msra.mxu0 0.0
    %2714 = vmatprep.subr.mxu0 0.0
    %2715 = vmatpush1.msra.mxu0 0.0
    %2716 = vmatprep.subr.mxu0 0.0
    %2717 = vmatpush1.msra.mxu0 0.0
    %2718 = vmatprep.subr.mxu0 0.0
    %2719 = vmatpush1.msra.mxu0 0.0
    %2720 = vmatprep.subr.mxu0 0.0
    %2721 = vmatpush1.msra.mxu0 0.0
    %2722 = vmatprep.subr.mxu0 0.0
    %2723 = vmatpush1.msra.mxu0 0.0
    %2724 = vmatprep.subr.mxu0 0.0
    %2725 = vmatpush1.msra.mxu0 0.0
    %2726 = vmatprep.subr.mxu0 0.0
    %2727 = vmatpush1.msra.mxu0 0.0
    %2728 = vmatprep.mubr.f32.mxu0 0.0
    %2729 = vmatmul.mubr.f32.gmra.mrb[0].mxu0 %v2508
    %v2730 = vpop.f32.mrb[0].mxu0
    %v2731 = vadd.f32 %v2654, %v2730
    %v2732 = vpop.f32.mrb[0].mxu0
    %v2733 = vadd.f32 %v2656, %v2732
    %2734 = vmatprep.mubr.f32.mxu0 0.0
    %2735 = vmatmul.mubr.f32.gmra.mrb[0].mxu0 %v2509
    %v2736 = vpop.f32.mrb[0].mxu0
    %v2737 = vadd.f32 %v2660, %v2736
    %v2738 = vpop.f32.mrb[0].mxu0
    %v2739 = vadd.f32 %v2662, %v2738
    %2740 = vdwg.mxu0
    %2741 = vmatprep.subr.mxu0 %v215
    %2742 = vmatpush1.msra.mxu0 %v214
    %2743 = vmatprep.subr.mxu0 %v217
    %2744 = vmatpush1.msra.mxu0 %v216
    %2745 = vmatprep.subr.mxu0 %v219
    %2746 = vmatpush1.msra.mxu0 %v218
    %2747 = vmatprep.subr.mxu0 %v221
    %2748 = vmatpush1.msra.mxu0 %v220
    %2749 = vmatprep.subr.mxu0 %v223
    %2750 = vmatpush1.msra.mxu0 %v222
    %2751 = vmatprep.subr.mxu0 %v225
    %2752 = vmatpush1.msra.mxu0 %v224
    %2753 = vmatprep.subr.mxu0 %v227
    %2754 = vmatpush1.msra.mxu0 %v226
    %2755 = vmatprep.subr.mxu0 %v229
    %2756 = vmatpush1.msra.mxu0 %v228
    %2757 = vmatprep.subr.mxu0 %v231
    %2758 = vmatpush1.msra.mxu0 %v230
    %2759 = vmatprep.subr.mxu0 %v233
    %2760 = vmatpush1.msra.mxu0 %v232
    %2761 = vmatprep.subr.mxu0 %v235
    %2762 = vmatpush1.msra.mxu0 %v234
    %2763 = vmatprep.subr.mxu0 %v237
    %2764 = vmatpush1.msra.mxu0 %v236
    %2765 = vmatprep.subr.mxu0 %v239
    %2766 = vmatpush1.msra.mxu0 %v238
    %2767 = vmatprep.subr.mxu0 %v241
    %2768 = vmatpush1.msra.mxu0 %v240
    %2769 = vmatprep.subr.mxu0 %v243
    %2770 = vmatpush1.msra.mxu0 %v242
    %2771 = vmatprep.subr.mxu0 %v245
    %2772 = vmatpush1.msra.mxu0 %v244
    %2773 = vmatprep.subr.mxu0 0.0
    %2774 = vmatpush1.msra.mxu0 0.0
    %2775 = vmatprep.subr.mxu0 0.0
    %2776 = vmatpush1.msra.mxu0 0.0
    %2777 = vmatprep.subr.mxu0 0.0
    %2778 = vmatpush1.msra.mxu0 0.0
    %2779 = vmatprep.subr.mxu0 0.0
    %2780 = vmatpush1.msra.mxu0 0.0
    %2781 = vmatprep.subr.mxu0 0.0
    %2782 = vmatpush1.msra.mxu0 0.0
    %2783 = vmatprep.subr.mxu0 0.0
    %2784 = vmatpush1.msra.mxu0 0.0
    %2785 = vmatprep.subr.mxu0 0.0
    %2786 = vmatpush1.msra.mxu0 0.0
    %2787 = vmatprep.subr.mxu0 0.0
    %2788 = vmatpush1.msra.mxu0 0.0
    %2789 = vmatprep.subr.mxu0 0.0
    %2790 = vmatpush1.msra.mxu0 0.0
    %2791 = vmatprep.subr.mxu0 0.0
    %2792 = vmatpush1.msra.mxu0 0.0
    %2793 = vmatprep.subr.mxu0 0.0
    %2794 = vmatpush1.msra.mxu0 0.0
    %2795 = vmatprep.subr.mxu0 0.0
    %2796 = vmatpush1.msra.mxu0 0.0
    %2797 = vmatprep.subr.mxu0 0.0
    %2798 = vmatpush1.msra.mxu0 0.0
    %2799 = vmatprep.subr.mxu0 0.0
    %2800 = vmatpush1.msra.mxu0 0.0
    %2801 = vmatprep.subr.mxu0 0.0
    %2802 = vmatpush1.msra.mxu0 0.0
    %2803 = vmatprep.subr.mxu0 0.0
    %2804 = vmatpush1.msra.mxu0 0.0
    %2805 = vmatprep.mubr.f32.mxu0 0.0
    %2806 = vmatmul.mubr.f32.gmra.mrb[0].mxu0 %v2172
    %v2807 = vpop.f32.mrb[0].mxu0
    %v2808 = vadd.f32 0.0, %v2807
    %v2809 = vpop.f32.mrb[0].mxu0
    %v2810 = vadd.f32 0.0, %v2809
    %2811 = vmatprep.mubr.f32.mxu0 0.0
    %2812 = vmatmul.mubr.f32.gmra.mrb[0].mxu0 %v2173
    %v2813 = vpop.f32.mrb[0].mxu0
    %v2814 = vadd.f32 0.0, %v2813
    %v2815 = vpop.f32.mrb[0].mxu0
    %v2816 = vadd.f32 0.0, %v2815
    %2817 = vdwg.mxu0
    %v2818 = vadd.f32 %v2731, %v2808
    %v2819 = vadd.f32 %v2733, %v2810
    %v2820 = vadd.f32 %v2737, %v2814
    %v2821 = vadd.f32 %v2739, %v2816
    %v2822 = vadd.f32 %v2818, %v975
    %v2823 = vadd.f32 %v2819, %v979
    %v2824 = vadd.f32 %v2820, %v975
    %v2825 = vadd.f32 %v2821, %v979
    %v2826 = vxor.u32 %v2822, 2147483648
    %v2827 = vxor.u32 %v2823, 2147483648
    %v2828 = vxor.u32 %v2824, 2147483648
    %v2829 = vxor.u32 %v2825, 2147483648
    %v2830 = vmul.f32 %v2826, 1.442695
    %v2831 = vpow.pop %v2830
    %v2832 = vmul.f32 %v2827, 1.442695
    %v2833 = vpow.pop %v2832
    %v2834 = vmul.f32 %v2828, 1.442695
    %v2835 = vpow.pop %v2834
    %v2836 = vmul.f32 %v2829, 1.442695
    %v2837 = vpow.pop %v2836
    %v2838 = vadd.f32 %v2831, 1.0
    %v2839 = vadd.f32 %v2833, 1.0
    %v2840 = vadd.f32 %v2835, 1.0
    %v2841 = vadd.f32 %v2837, 1.0
    %v2842 = vrcp.pop %v2838
    %v2843 = vmul.f32 1.0, %v2842
    %v2844 = vrcp.pop %v2839
    %v2845 = vmul.f32 1.0, %v2844
    %v2846 = vrcp.pop %v2840
    %v2847 = vmul.f32 1.0, %v2846
    %v2848 = vrcp.pop %v2841
    %v2849 = vmul.f32 1.0, %v2848
    %2850 = vmatprep.subr.mxu0 0.0
    %2851 = vmatpush1.msra.mxu0 %v263
    %2852 = vmatprep.subr.mxu0 0.0
    %2853 = vmatpush1.msra.mxu0 %v264
    %2854 = vmatprep.subr.mxu0 0.0
    %2855 = vmatpush1.msra.mxu0 %v265
    %2856 = vmatprep.subr.mxu0 0.0
    %2857 = vmatpush1.msra.mxu0 %v266
    %2858 = vmatprep.subr.mxu0 0.0
    %2859 = vmatpush1.msra.mxu0 %v267
    %2860 = vmatprep.subr.mxu0 0.0
    %2861 = vmatpush1.msra.mxu0 %v268
    %2862 = vmatprep.subr.mxu0 0.0
    %2863 = vmatpush1.msra.mxu0 %v269
    %2864 = vmatprep.subr.mxu0 0.0
    %2865 = vmatpush1.msra.mxu0 %v270
    %2866 = vmatprep.subr.mxu0 0.0
    %2867 = vmatpush1.msra.mxu0 %v271
    %2868 = vmatprep.subr.mxu0 0.0
    %2869 = vmatpush1.msra.mxu0 %v272
    %2870 = vmatprep.subr.mxu0 0.0
    %2871 = vmatpush1.msra.mxu0 %v273
    %2872 = vmatprep.subr.mxu0 0.0
    %2873 = vmatpush1.msra.mxu0 %v274
    %2874 = vmatprep.subr.mxu0 0.0
    %2875 = vmatpush1.msra.mxu0 %v275
    %2876 = vmatprep.subr.mxu0 0.0
    %2877 = vmatpush1.msra.mxu0 %v276
    %2878 = vmatprep.subr.mxu0 0.0
    %2879 = vmatpush1.msra.mxu0 %v277
    %2880 = vmatprep.subr.mxu0 0.0
    %2881 = vmatpush1.msra.mxu0 %v278
    %2882 = vmatprep.subr.mxu0 0.0
    %2883 = vmatpush1.msra.mxu0 0.0
    %2884 = vmatprep.subr.mxu0 0.0
    %2885 = vmatpush1.msra.mxu0 0.0
    %2886 = vmatprep.subr.mxu0 0.0
    %2887 = vmatpush1.msra.mxu0 0.0
    %2888 = vmatprep.subr.mxu0 0.0
    %2889 = vmatpush1.msra.mxu0 0.0
    %2890 = vmatprep.subr.mxu0 0.0
    %2891 = vmatpush1.msra.mxu0 0.0
    %2892 = vmatprep.subr.mxu0 0.0
    %2893 = vmatpush1.msra.mxu0 0.0
    %2894 = vmatprep.subr.mxu0 0.0
    %2895 = vmatpush1.msra.mxu0 0.0
    %2896 = vmatprep.subr.mxu0 0.0
    %2897 = vmatpush1.msra.mxu0 0.0
    %2898 = vmatprep.subr.mxu0 0.0
    %2899 = vmatpush1.msra.mxu0 0.0
    %2900 = vmatprep.subr.mxu0 0.0
    %2901 = vmatpush1.msra.mxu0 0.0
    %2902 = vmatprep.subr.mxu0 0.0
    %2903 = vmatpush1.msra.mxu0 0.0
    %2904 = vmatprep.subr.mxu0 0.0
    %2905 = vmatpush1.msra.mxu0 0.0
    %2906 = vmatprep.subr.mxu0 0.0
    %2907 = vmatpush1.msra.mxu0 0.0
    %2908 = vmatprep.subr.mxu0 0.0
    %2909 = vmatpush1.msra.mxu0 0.0
    %2910 = vmatprep.subr.mxu0 0.0
    %2911 = vmatpush1.msra.mxu0 0.0
    %2912 = vmatprep.subr.mxu0 0.0
    %2913 = vmatpush1.msra.mxu0 0.0
    %2914 = vmatprep.mubr.f32.mxu0 0.0
    %2915 = vmatmul.mubr.f32.gmra.mrb[0].mxu0 %v2585
    %v2916 = vpop.f32.mrb[0].mxu0
    %v2917 = vadd.f32 0.0, %v2916
    %v2918 = vpop.f32.mrb[0].mxu0
    %2919 = vmatprep.mubr.f32.mxu0 0.0
    %2920 = vmatmul.mubr.f32.gmra.mrb[0].mxu0 %v2586
    %v2921 = vpop.f32.mrb[0].mxu0
    %v2922 = vadd.f32 0.0, %v2921
    %v2923 = vpop.f32.mrb[0].mxu0
    %2924 = vdwg.mxu0
    %2925 = vmatprep.subr.mxu0 0.0
    %2926 = vmatpush1.msra.mxu0 %v247
    %2927 = vmatprep.subr.mxu0 0.0
    %2928 = vmatpush1.msra.mxu0 %v248
    %2929 = vmatprep.subr.mxu0 0.0
    %2930 = vmatpush1.msra.mxu0 %v249
    %2931 = vmatprep.subr.mxu0 0.0
    %2932 = vmatpush1.msra.mxu0 %v250
    %2933 = vmatprep.subr.mxu0 0.0
    %2934 = vmatpush1.msra.mxu0 %v251
    %2935 = vmatprep.subr.mxu0 0.0
    %2936 = vmatpush1.msra.mxu0 %v252
    %2937 = vmatprep.subr.mxu0 0.0
    %2938 = vmatpush1.msra.mxu0 %v253
    %2939 = vmatprep.subr.mxu0 0.0
    %2940 = vmatpush1.msra.mxu0 %v254
    %2941 = vmatprep.subr.mxu0 0.0
    %2942 = vmatpush1.msra.mxu0 %v255
    %2943 = vmatprep.subr.mxu0 0.0
    %2944 = vmatpush1.msra.mxu0 %v256
    %2945 = vmatprep.subr.mxu0 0.0
    %2946 = vmatpush1.msra.mxu0 %v257
    %2947 = vmatprep.subr.mxu0 0.0
    %2948 = vmatpush1.msra.mxu0 %v258
    %2949 = vmatprep.subr.mxu0 0.0
    %2950 = vmatpush1.msra.mxu0 %v259
    %2951 = vmatprep.subr.mxu0 0.0
    %2952 = vmatpush1.msra.mxu0 %v260
    %2953 = vmatprep.subr.mxu0 0.0
    %2954 = vmatpush1.msra.mxu0 %v261
    %2955 = vmatprep.subr.mxu0 0.0
    %2956 = vmatpush1.msra.mxu0 %v262
    %2957 = vmatprep.subr.mxu0 0.0
    %2958 = vmatpush1.msra.mxu0 0.0
    %2959 = vmatprep.subr.mxu0 0.0
    %2960 = vmatpush1.msra.mxu0 0.0
    %2961 = vmatprep.subr.mxu0 0.0
    %2962 = vmatpush1.msra.mxu0 0.0
    %2963 = vmatprep.subr.mxu0 0.0
    %2964 = vmatpush1.msra.mxu0 0.0
    %2965 = vmatprep.subr.mxu0 0.0
    %2966 = vmatpush1.msra.mxu0 0.0
    %2967 = vmatprep.subr.mxu0 0.0
    %2968 = vmatpush1.msra.mxu0 0.0
    %2969 = vmatprep.subr.mxu0 0.0
    %2970 = vmatpush1.msra.mxu0 0.0
    %2971 = vmatprep.subr.mxu0 0.0
    %2972 = vmatpush1.msra.mxu0 0.0
    %2973 = vmatprep.subr.mxu0 0.0
    %2974 = vmatpush1.msra.mxu0 0.0
    %2975 = vmatprep.subr.mxu0 0.0
    %2976 = vmatpush1.msra.mxu0 0.0
    %2977 = vmatprep.subr.mxu0 0.0
    %2978 = vmatpush1.msra.mxu0 0.0
    %2979 = vmatprep.subr.mxu0 0.0
    %2980 = vmatpush1.msra.mxu0 0.0
    %2981 = vmatprep.subr.mxu0 0.0
    %2982 = vmatpush1.msra.mxu0 0.0
    %2983 = vmatprep.subr.mxu0 0.0
    %2984 = vmatpush1.msra.mxu0 0.0
    %2985 = vmatprep.subr.mxu0 0.0
    %2986 = vmatpush1.msra.mxu0 0.0
    %2987 = vmatprep.subr.mxu0 0.0
    %2988 = vmatpush1.msra.mxu0 0.0
    %2989 = vmatprep.mubr.f32.mxu0 0.0
    %2990 = vmatmul.mubr.f32.gmra.mrb[0].mxu0 %v2508
    %v2991 = vpop.f32.mrb[0].mxu0
    %v2992 = vadd.f32 %v2917, %v2991
    %v2993 = vpop.f32.mrb[0].mxu0
    %2994 = vmatprep.mubr.f32.mxu0 0.0
    %2995 = vmatmul.mubr.f32.gmra.mrb[0].mxu0 %v2509
    %v2996 = vpop.f32.mrb[0].mxu0
    %v2997 = vadd.f32 %v2922, %v2996
    %v2998 = vpop.f32.mrb[0].mxu0
    %2999 = vdwg.mxu0
    %v3000 = vmul.f32 %v2843, %v2172
    %v3001 = vmul.f32 %v2847, %v2173
    %3002 = vmatprep.subr.mxu0 0.0
    %3003 = vmatpush1.msra.mxu0 %v279
    %3004 = vmatprep.subr.mxu0 0.0
    %3005 = vmatpush1.msra.mxu0 %v280
    %3006 = vmatprep.subr.mxu0 0.0
    %3007 = vmatpush1.msra.mxu0 %v281
    %3008 = vmatprep.subr.mxu0 0.0
    %3009 = vmatpush1.msra.mxu0 %v282
    %3010 = vmatprep.subr.mxu0 0.0
    %3011 = vmatpush1.msra.mxu0 %v283
    %3012 = vmatprep.subr.mxu0 0.0
    %3013 = vmatpush1.msra.mxu0 %v284
    %3014 = vmatprep.subr.mxu0 0.0
    %3015 = vmatpush1.msra.mxu0 %v285
    %3016 = vmatprep.subr.mxu0 0.0
    %3017 = vmatpush1.msra.mxu0 %v286
    %3018 = vmatprep.subr.mxu0 0.0
    %3019 = vmatpush1.msra.mxu0 %v287
    %3020 = vmatprep.subr.mxu0 0.0
    %3021 = vmatpush1.msra.mxu0 %v288
    %3022 = vmatprep.subr.mxu0 0.0
    %3023 = vmatpush1.msra.mxu0 %v289
    %3024 = vmatprep.subr.mxu0 0.0
    %3025 = vmatpush1.msra.mxu0 %v290
    %3026 = vmatprep.subr.mxu0 0.0
    %3027 = vmatpush1.msra.mxu0 %v291
    %3028 = vmatprep.subr.mxu0 0.0
    %3029 = vmatpush1.msra.mxu0 %v292
    %3030 = vmatprep.subr.mxu0 0.0
    %3031 = vmatpush1.msra.mxu0 %v293
    %3032 = vmatprep.subr.mxu0 0.0
    %3033 = vmatpush1.msra.mxu0 %v294
    %3034 = vmatprep.subr.mxu0 0.0
    %3035 = vmatpush1.msra.mxu0 0.0
    %3036 = vmatprep.subr.mxu0 0.0
    %3037 = vmatpush1.msra.mxu0 0.0
    %3038 = vmatprep.subr.mxu0 0.0
    %3039 = vmatpush1.msra.mxu0 0.0
    %3040 = vmatprep.subr.mxu0 0.0
    %3041 = vmatpush1.msra.mxu0 0.0
    %3042 = vmatprep.subr.mxu0 0.0
    %3043 = vmatpush1.msra.mxu0 0.0
    %3044 = vmatprep.subr.mxu0 0.0
    %3045 = vmatpush1.msra.mxu0 0.0
    %3046 = vmatprep.subr.mxu0 0.0
    %3047 = vmatpush1.msra.mxu0 0.0
    %3048 = vmatprep.subr.mxu0 0.0
    %3049 = vmatpush1.msra.mxu0 0.0
    %3050 = vmatprep.subr.mxu0 0.0
    %3051 = vmatpush1.msra.mxu0 0.0
    %3052 = vmatprep.subr.mxu0 0.0
    %3053 = vmatpush1.msra.mxu0 0.0
    %3054 = vmatprep.subr.mxu0 0.0
    %3055 = vmatpush1.msra.mxu0 0.0
    %3056 = vmatprep.subr.mxu0 0.0
    %3057 = vmatpush1.msra.mxu0 0.0
    %3058 = vmatprep.subr.mxu0 0.0
    %3059 = vmatpush1.msra.mxu0 0.0
    %3060 = vmatprep.subr.mxu0 0.0
    %3061 = vmatpush1.msra.mxu0 0.0
    %3062 = vmatprep.subr.mxu0 0.0
    %3063 = vmatpush1.msra.mxu0 0.0
    %3064 = vmatprep.subr.mxu0 0.0
    %3065 = vmatpush1.msra.mxu0 0.0
    %3066 = vmatprep.mubr.f32.mxu0 0.0
    %3067 = vmatmul.mubr.f32.gmra.mrb[0].mxu0 %v3000
    %v3068 = vpop.f32.mrb[0].mxu0
    %v3069 = vadd.f32 0.0, %v3068
    %v3070 = vpop.f32.mrb[0].mxu0
    %3071 = vmatprep.mubr.f32.mxu0 0.0
    %3072 = vmatmul.mubr.f32.gmra.mrb[0].mxu0 %v3001
    %v3073 = vpop.f32.mrb[0].mxu0
    %v3074 = vadd.f32 0.0, %v3073
    %v3075 = vpop.f32.mrb[0].mxu0
    %3076 = vdwg.mxu0
    %v3077 = vadd.f32 %v2992, %v3069
    %v3078 = vadd.f32 %v2997, %v3074
    %v3079 = vadd.f32 %v3077, %v1243
    %v3080 = vadd.f32 %v3078, %v1243
    %v3081 = vtanh.pop %v3079
    %v3082 = vtanh.pop %v3080
    %v3083 = vsub.f32 1.0, %v2845
    %v3084 = vsub.f32 1.0, %v2849
    %v3085 = vmul.f32 %v3083, %v2172
    %v3086 = vmul.f32 %v3084, %v2173
    %v3087 = vmul.f32 %v2845, %v3081
    %v3088 = vmul.f32 %v2849, %v3082
    %v3089 = vadd.f32 %v3085, %v3087
    %v3090 = vadd.f32 %v3086, %v3088
    %3091 = vst [vmem:[#allocation8] sm:$0xff] %v3089
    %3092 = vst [vmem:[#allocation8 + $0x8] sm:$0xff] %v3090
    // Predicated region
    $region50: #{tpu_custom_call.1} parent=1 // pred_check
      _
    $region51: #{tpu_custom_call.1} parent=1 // pred_check_branch
      %3094 = sbr.rel (0) target = $region53
    $region52: #{tpu_custom_call.1} parent=1 // pred_region
      %s3096 = ssub.s32 256, 256
      %3097 = vsyncadd [#allocation4], %s3096
      %s3098 = sshll.u32 [#allocation8], 4
      %s3099 = int_to_ptr.vmem [resolvable:$true] %s3098
      %3104 = dma.vmem_to_hbm [thread:$0]  %s3099, 256, %s9, [#allocation4], 128, 128, 8
    $region53: #{tpu_custom_call.1} parent=1 // pred_fallthru
      _
    // Predicated region
    $region54: #{tpu_custom_call.1} parent=1 // pred_check
      _
    $region55: #{tpu_custom_call.1} parent=1 // pred_check_branch
      %3106 = sbr.rel (0) target = $region57
    $region56: #{tpu_custom_call.1} parent=1 // pred_region
      %3107 = dma.done [#allocation4], 256
    $region57: #{tpu_custom_call.1} parent=1 // pred_fallthru
      _
    %3108 = vsyncpa [#allocation3], 1
    %3109 = vsyncpa [#allocation6], 1
    %3110 = vsyncpa [#allocation4], 1

</llo_original>
